<compile_context>
chip_gen: v7x
topology: tpu7x:2x2x1
jax: 0.10.0
libtpu: 0.0.40
codegen_flags: <defaults>
</compile_context>

<pallas_src>
import jax
import jax.numpy as jnp
from jax.experimental import pallas as pl
from jax.experimental.pallas import tpu as pltpu  # noqa: F401  (TPU backend assumed)

# ---------------- config (small, consistent with the module) ----------------
VOCAB_SIZE = 32
CNTX = 8             # context length == sequence length (required by proj_out)
DIM = 32
NUM_HEADS = 4
NUM_EXPERTS = 2
NUM_LAYERS = 2
NUM_CLASSES = 10
FFN_HIDDEN = 4 * DIM
PADDED_CLASSES = 128  # lane-dense classifier slab; sliced back to NUM_CLASSES
EPS = 1e-6


# --------------------------- fused Pallas kernel -----------------------------
def fused_forward_kernel(tok_ref, embed_ref, pos_ref, norms_ref, wqkv_ref,
                         wo_ref, wg_ref, w1_ref, w2_ref, pw_ref, pb_ref,
                         out_ref):
    """Whole forward pass for the batch: tokens -> padded logits.

    tok_ref   : (B*S, 1)    int32
    embed_ref : (V, D)      bf16
    pos_ref   : (S, D)      f32
    norms_ref : (2*L, D)    f32   rows [2l] = attn norm, [2l+1] = ffn norm
    wqkv_ref  : (L, D, 3D)  bf16  fused Q|K|V projection
    wo_ref    : (L, D, D)   bf16
    wg_ref    : (L, D, E)   bf16  router
    w1_ref    : (L, D, E*F) bf16  experts' up-proj stacked along columns
    w2_ref    : (L, E*F, D) bf16  experts' down-proj stacked along rows
    pw_ref    : (S*D, C_PAD) bf16
    pb_ref    : (1, C_PAD)   f32
    out_ref   : (B, C_PAD)   f32
    """
    N = tok_ref.shape[0]
    S, D = pos_ref.shape
    B = N // S
    H = NUM_HEADS
    dh = D // H
    E = NUM_EXPERTS
    F = FFN_HIDDEN
    L = wqkv_ref.shape[0]
    scale = 1.0 / float(dh) ** 0.5

    def rmsnorm(v, w_row):
        return v * jax.lax.rsqrt(jnp.mean(v * v, axis=-1, keepdims=True) + EPS) * w_row

    # ---- token embedding (one-hot matmul on the MXU) + positional add ------
    tok = tok_ref[...]                                                # (N, 1) i32
    vocab_ids = jax.lax.broadcasted_iota(jnp.int32, (N, VOCAB_SIZE), 1)
    one_hot = jnp.where(tok == vocab_ids, 1.0, 0.0).astype(jnp.bfloat16)
    x = jnp.dot(one_hot, embed_ref[...],
                preferred_element_type=jnp.float32)                   # (N, D) f32
    x = (x.reshape(B, S, D) + pos_ref[...][None]).reshape(N, D)

    for l in range(L):                      # static unroll over layers
        # ---------- attention sub-block: h = x + Wo . MHA(RMSNorm(x)) -------
        xn = rmsnorm(x, norms_ref[2 * l:2 * l + 1, :])
        qkv = jnp.dot(xn.astype(jnp.bfloat16), wqkv_ref[l],
                      preferred_element_type=jnp.float32)             # (N, 3D)
        q3 = qkv[:, 0 * D:1 * D].reshape(B, S, D)
        k3 = qkv[:, 1 * D:2 * D].reshape(B, S, D)
        v3 = qkv[:, 2 * D:3 * D].reshape(B, S, D)

        head_outs = []
        for hh in range(H):                 # static unroll; batched over B
            sl = slice(hh * dh, (hh + 1) * dh)
            qh = q3[:, :, sl].astype(jnp.bfloat16)                    # (B, S, dh)
            kh = k3[:, :, sl].astype(jnp.bfloat16)
            vh = v3[:, :, sl].astype(jnp.bfloat16)
            s = jnp.einsum('bqd,bkd->bqk', qh, kh,
                           preferred_element_type=jnp.float32) * scale
            s = s - jnp.max(s, axis=-1, keepdims=True)                # f32 softmax
            p = jnp.exp(s)
            p = p / jnp.sum(p, axis=-1, keepdims=True)
            head_outs.append(
                jnp.einsum('bqk,bkd->bqd', p.astype(jnp.bfloat16), vh,
                           preferred_element_type=jnp.float32))
        attn = jnp.concatenate(head_outs, axis=-1).reshape(N, D)      # (N, D)
        attn = jnp.dot(attn.astype(jnp.bfloat16), wo_ref[l],
                       preferred_element_type=jnp.float32)
        h = x + attn

        # ---------- MoE FFN sub-block: x = h + MoE(RMSNorm(h)) --------------
        hn = rmsnorm(h, norms_ref[2 * l + 1:2 * l + 2, :])
        hnb = hn.astype(jnp.bfloat16)

        glog = jnp.dot(hnb, wg_ref[l],
                       preferred_element_type=jnp.float32)            # (N, E)
        glog = glog - jnp.max(glog, axis=-1, keepdims=True)
        gexp = jnp.exp(glog)
        gate = gexp / jnp.sum(gexp, axis=-1, keepdims=True)           # (N, E) f32

        h1 = jnp.dot(hnb, w1_ref[l],
                     preferred_element_type=jnp.float32)              # (N, E*F)
        h1 = jnp.maximum(h1, 0.0)
        # expand gate to match the stacked expert columns; one wide scale
        gate_wide = jnp.concatenate(
            [jnp.broadcast_to(gate[:, e:e + 1], (N, F)) for e in range(E)],
            axis=-1)                                                  # (N, E*F)
        h1 = h1 * gate_wide
        moe = jnp.dot(h1.astype(jnp.bfloat16), w2_ref[l],
                      preferred_element_type=jnp.float32)             # (N, D)
        x = h + moe

    # ---------------- classifier head: (B, S*D) @ (S*D, C_PAD) + b ----------
    x3 = x.reshape(B, S, D)
    x_flat = jnp.concatenate([x3[:, s, :] for s in range(S)], axis=-1)  # (B, S*D)
    logits = jnp.dot(x_flat.astype(jnp.bfloat16), pw_ref[...],
                     preferred_element_type=jnp.float32) + pb_ref[...]
    out_ref[...] = logits


# --------------------------- host-side wrapper -------------------------------
@jax.jit
def moe_encoder_transformer(tokens, params):
    """tokens: (B, S) int32 with S == CNTX -> logits (B, NUM_CLASSES)."""
    B, S = tokens.shape
    tok2d = tokens.reshape(B * S, 1).astype(jnp.int32)
    padded = pl.pallas_call(
        fused_forward_kernel,
        out_shape=jax.ShapeDtypeStruct((B, PADDED_CLASSES), jnp.float32),
    )(tok2d, params["embed"], params["pos"], params["norms"],
      params["wqkv"], params["wo"], params["wg"], params["w1"], params["w2"],
      params["proj_w"], params["proj_b"])
    return padded[:, :NUM_CLASSES]


def init_params(key):
    """Deterministic synthetic weights in the fused/stacked kernel layout."""
    def nrm(k, shape, scale=0.02):
        return (scale * jax.random.normal(k, shape)).astype(jnp.float32)

    L, D, E, F = NUM_LAYERS, DIM, NUM_EXPERTS, FFN_HIDDEN
    keys = jax.random.split(key, 3 + L)

    wqkv, wo, wg, w1, w2 = [], [], [], [], []
    for l in range(L):
        lk = jax.random.split(keys[3 + l], 7)
        wq, wk, wv = nrm(lk[0], (D, D)), nrm(lk[1], (D, D)), nrm(lk[2], (D, D))
        wqkv.append(jnp.concatenate([wq, wk, wv], axis=1))            # (D, 3D)
        wo.append(nrm(lk[3], (D, D)))
        wg.append(nrm(lk[4], (D, E)))
        w1e = nrm(lk[5], (E, D, F))
        w2e = nrm(lk[6], (E, F, D))
        w1.append(jnp.concatenate([w1e[e] for e in range(E)], axis=1))  # (D, E*F)
        w2.append(jnp.concatenate([w2e[e] for e in range(E)], axis=0))  # (E*F, D)

    proj_w = nrm(keys[2], (D * CNTX, NUM_CLASSES))
    proj_w_pad = jnp.zeros((D * CNTX, PADDED_CLASSES), jnp.float32)
    proj_w_pad = proj_w_pad.at[:, :NUM_CLASSES].set(proj_w)
    proj_b_pad = jnp.zeros((1, PADDED_CLASSES), jnp.float32)

    return {
        "embed": nrm(keys[0], (VOCAB_SIZE, D)).astype(jnp.bfloat16),   # (V, D)
        "pos": nrm(keys[1], (CNTX, D)),                                # (S, D) f32
        "norms": jnp.ones((2 * L, D), jnp.float32),                    # (2L, D)
        "wqkv": jnp.stack(wqkv).astype(jnp.bfloat16),                  # (L, D, 3D)
        "wo": jnp.stack(wo).astype(jnp.bfloat16),                      # (L, D, D)
        "wg": jnp.stack(wg).astype(jnp.bfloat16),                      # (L, D, E)
        "w1": jnp.stack(w1).astype(jnp.bfloat16),                      # (L, D, E*F)
        "w2": jnp.stack(w2).astype(jnp.bfloat16),                      # (L, E*F, D)
        "proj_w": proj_w_pad.astype(jnp.bfloat16),                     # (S*D, 128)
        "proj_b": proj_b_pad,                                          # (1, 128) f32
    }


if __name__ == "__main__":
    key = jax.random.PRNGKey(0)
    pkey, tkey = jax.random.split(key)
    params = init_params(pkey)

    B = 2
    tokens = jax.random.randint(tkey, (B, CNTX), 0, VOCAB_SIZE, dtype=jnp.int32)

    logits = moe_encoder_transformer(tokens, params)
    jax.block_until_ready(logits)
    assert logits.shape == (B, NUM_CLASSES)
    assert bool(jnp.all(jnp.isfinite(logits)))
    print("KERNEL_OK")
</pallas_src>

<mosaic_0001>
module attributes {stable_mosaic.version = 11 : i64} {
  func.func @fused_forward_kernel(%arg0: memref<16x1xi32, #tpu.memory_space<vmem>>, %arg1: memref<32x32xbf16, #tpu.memory_space<vmem>>, %arg2: memref<8x32xf32, #tpu.memory_space<vmem>>, %arg3: memref<4x32xf32, #tpu.memory_space<vmem>>, %arg4: memref<2x32x96xbf16, #tpu.memory_space<vmem>>, %arg5: memref<2x32x32xbf16, #tpu.memory_space<vmem>>, %arg6: memref<2x32x2xbf16, #tpu.memory_space<vmem>>, %arg7: memref<2x32x256xbf16, #tpu.memory_space<vmem>>, %arg8: memref<2x256x32xbf16, #tpu.memory_space<vmem>>, %arg9: memref<256x128xbf16, #tpu.memory_space<vmem>>, %arg10: memref<1x128xf32, #tpu.memory_space<vmem>>, %arg11: memref<2x128xf32, #tpu.memory_space<vmem>>) attributes {dimension_semantics = [], scalar_prefetch = 0 : i64, scratch_operands = 0 : i64, tpu.core_type = #tpu.core_type<tc>} {
    %c0 = arith.constant 0 : index
    %c0_0 = arith.constant 0 : index
    %0 = vector.load %arg0[%c0, %c0_0] : memref<16x1xi32, #tpu.memory_space<vmem>>, vector<16x1xi32>
    %1 = tpu.iota {dimensions = array<i32: 1>} : vector<16x32xi32>
    %2 = vector.broadcast %0 : vector<16x1xi32> to vector<16x32xi32>
    %3 = arith.cmpi eq, %2, %1 : vector<16x32xi32>
    %cst = arith.constant 1.000000e+00 : f32
    %cst_1 = arith.constant 0.000000e+00 : f32
    %4 = vector.broadcast %cst : f32 to vector<16x32xf32>
    %5 = vector.broadcast %cst_1 : f32 to vector<16x32xf32>
    %6 = arith.select %3, %4, %5 : vector<16x32xi1>, vector<16x32xf32>
    %7 = arith.truncf %6 : vector<16x32xf32> to vector<16x32xbf16>
    %c0_2 = arith.constant 0 : index
    %c0_3 = arith.constant 0 : index
    %8 = vector.load %arg1[%c0_2, %c0_3] : memref<32x32xbf16, #tpu.memory_space<vmem>>, vector<32x32xbf16>
    %cst_4 = arith.constant dense<0.000000e+00> : vector<16x32xf32>
    %9 = tpu.matmul %7, %8, %cst_4 {dimension_numbers = #tpu.dot_dimension_numbers<[1], [0], [0], [1], [0, 0, 1, 1], [], []>} : vector<16x32xbf16>, vector<32x32xbf16>, vector<16x32xf32> -> vector<16x32xf32>
    %10 = vector.shape_cast %9 : vector<16x32xf32> to vector<2x8x32xf32>
    %c0_5 = arith.constant 0 : index
    %c0_6 = arith.constant 0 : index
    %11 = vector.load %arg2[%c0_5, %c0_6] : memref<8x32xf32, #tpu.memory_space<vmem>>, vector<8x32xf32>
    %12 = vector.shape_cast %11 : vector<8x32xf32> to vector<1x8x32xf32>
    %13 = vector.broadcast %12 : vector<1x8x32xf32> to vector<2x8x32xf32>
    %14 = arith.addf %10, %13 : vector<2x8x32xf32>
    %15 = vector.shape_cast %14 : vector<2x8x32xf32> to vector<16x32xf32>
    %c0_7 = arith.constant 0 : index
    %c0_8 = arith.constant 0 : index
    %16 = vector.load %arg3[%c0_7, %c0_8] : memref<4x32xf32, #tpu.memory_space<vmem>>, vector<1x32xf32>
    %17 = arith.mulf %15, %15 : vector<16x32xf32>
    %cst_9 = arith.constant dense<0.000000e+00> : vector<16xf32>
    %18 = vector.multi_reduction <add>, %17, %cst_9 [1] : vector<16x32xf32> to vector<16xf32>
    %19 = vector.shape_cast %18 : vector<16xf32> to vector<16x1xf32>
    %cst_10 = arith.constant 3.200000e+01 : f32
    %20 = vector.broadcast %cst_10 : f32 to vector<16x1xf32>
    %21 = arith.divf %19, %20 : vector<16x1xf32>
    %cst_11 = arith.constant 9.99999997E-7 : f32
    %22 = vector.broadcast %cst_11 : f32 to vector<16x1xf32>
    %23 = arith.addf %21, %22 : vector<16x1xf32>
    %24 = math.rsqrt %23 : vector<16x1xf32>
    %25 = vector.broadcast %24 : vector<16x1xf32> to vector<16x32xf32>
    %26 = arith.mulf %15, %25 : vector<16x32xf32>
    %27 = vector.broadcast %16 : vector<1x32xf32> to vector<16x32xf32>
    %28 = arith.mulf %26, %27 : vector<16x32xf32>
    %29 = arith.truncf %28 : vector<16x32xf32> to vector<16x32xbf16>
    %c0_12 = arith.constant 0 : index
    %c0_13 = arith.constant 0 : index
    %c0_14 = arith.constant 0 : index
    %30 = vector.load %arg4[%c0_12, %c0_13, %c0_14] : memref<2x32x96xbf16, #tpu.memory_space<vmem>>, vector<1x32x96xbf16>
    %31 = vector.shape_cast %30 : vector<1x32x96xbf16> to vector<32x96xbf16>
    %cst_15 = arith.constant dense<0.000000e+00> : vector<16x96xf32>
    %32 = tpu.matmul %29, %31, %cst_15 {dimension_numbers = #tpu.dot_dimension_numbers<[1], [0], [0], [1], [0, 0, 1, 1], [], []>} : vector<16x32xbf16>, vector<32x96xbf16>, vector<16x96xf32> -> vector<16x96xf32>
    %33 = vector.extract_strided_slice %32 {offsets = [0, 0], sizes = [16, 32], strides = [1, 1]} : vector<16x96xf32> to vector<16x32xf32>
    %34 = vector.shape_cast %33 : vector<16x32xf32> to vector<2x8x32xf32>
    %35 = vector.extract_strided_slice %32 {offsets = [0, 32], sizes = [16, 32], strides = [1, 1]} : vector<16x96xf32> to vector<16x32xf32>
    %36 = vector.shape_cast %35 : vector<16x32xf32> to vector<2x8x32xf32>
    %37 = vector.extract_strided_slice %32 {offsets = [0, 64], sizes = [16, 32], strides = [1, 1]} : vector<16x96xf32> to vector<16x32xf32>
    %38 = vector.shape_cast %37 : vector<16x32xf32> to vector<2x8x32xf32>
    %39 = vector.extract_strided_slice %34 {offsets = [0, 0, 0], sizes = [2, 8, 8], strides = [1, 1, 1]} : vector<2x8x32xf32> to vector<2x8x8xf32>
    %40 = arith.truncf %39 : vector<2x8x8xf32> to vector<2x8x8xbf16>
    %41 = vector.extract_strided_slice %36 {offsets = [0, 0, 0], sizes = [2, 8, 8], strides = [1, 1, 1]} : vector<2x8x32xf32> to vector<2x8x8xf32>
    %42 = arith.truncf %41 : vector<2x8x8xf32> to vector<2x8x8xbf16>
    %43 = vector.extract_strided_slice %38 {offsets = [0, 0, 0], sizes = [2, 8, 8], strides = [1, 1, 1]} : vector<2x8x32xf32> to vector<2x8x8xf32>
    %44 = arith.truncf %43 : vector<2x8x8xf32> to vector<2x8x8xbf16>
    "tpu.trace_start"() <{level = 10 : i32, message = "bqd,bkd->bqk"}> : () -> ()
    %cst_16 = arith.constant dense<0.000000e+00> : vector<2x8x8xf32>
    %45 = tpu.matmul %40, %42, %cst_16 {dimension_numbers = #tpu.dot_dimension_numbers<[2], [2], [1], [1], [0, 0, 0, 1, 1, 1], [0], [0]>} : vector<2x8x8xbf16>, vector<2x8x8xbf16>, vector<2x8x8xf32> -> vector<2x8x8xf32>
    "tpu.trace_stop"() : () -> ()
    %cst_17 = arith.constant 0.353553385 : f32
    %46 = vector.broadcast %cst_17 : f32 to vector<2x8x8xf32>
    %47 = arith.mulf %45, %46 : vector<2x8x8xf32>
    %cst_18 = arith.constant dense<0xFF800000> : vector<2x8xf32>
    %48 = vector.multi_reduction <maximumf>, %47, %cst_18 [2] : vector<2x8x8xf32> to vector<2x8xf32>
    %49 = vector.shape_cast %48 : vector<2x8xf32> to vector<2x8x1xf32>
    %50 = vector.broadcast %49 : vector<2x8x1xf32> to vector<2x8x8xf32>
    %51 = arith.subf %47, %50 : vector<2x8x8xf32>
    %52 = math.exp %51 : vector<2x8x8xf32>
    %cst_19 = arith.constant dense<0.000000e+00> : vector<2x8xf32>
    %53 = vector.multi_reduction <add>, %52, %cst_19 [2] : vector<2x8x8xf32> to vector<2x8xf32>
    %54 = vector.shape_cast %53 : vector<2x8xf32> to vector<2x8x1xf32>
    %55 = vector.broadcast %54 : vector<2x8x1xf32> to vector<2x8x8xf32>
    %56 = arith.divf %52, %55 : vector<2x8x8xf32>
    %57 = arith.truncf %56 : vector<2x8x8xf32> to vector<2x8x8xbf16>
    "tpu.trace_start"() <{level = 10 : i32, message = "bqk,bkd->bqd"}> : () -> ()
    %cst_20 = arith.constant dense<0.000000e+00> : vector<2x8x8xf32>
    %58 = tpu.matmul %57, %44, %cst_20 {dimension_numbers = #tpu.dot_dimension_numbers<[2], [1], [1], [2], [0, 0, 0, 1, 1, 2], [0], [0]>} : vector<2x8x8xbf16>, vector<2x8x8xbf16>, vector<2x8x8xf32> -> vector<2x8x8xf32>
    "tpu.trace_stop"() : () -> ()
    %59 = vector.extract_strided_slice %34 {offsets = [0, 0, 8], sizes = [2, 8, 8], strides = [1, 1, 1]} : vector<2x8x32xf32> to vector<2x8x8xf32>
    %60 = arith.truncf %59 : vector<2x8x8xf32> to vector<2x8x8xbf16>
    %61 = vector.extract_strided_slice %36 {offsets = [0, 0, 8], sizes = [2, 8, 8], strides = [1, 1, 1]} : vector<2x8x32xf32> to vector<2x8x8xf32>
    %62 = arith.truncf %61 : vector<2x8x8xf32> to vector<2x8x8xbf16>
    %63 = vector.extract_strided_slice %38 {offsets = [0, 0, 8], sizes = [2, 8, 8], strides = [1, 1, 1]} : vector<2x8x32xf32> to vector<2x8x8xf32>
    %64 = arith.truncf %63 : vector<2x8x8xf32> to vector<2x8x8xbf16>
    "tpu.trace_start"() <{level = 10 : i32, message = "bqd,bkd->bqk"}> : () -> ()
    %cst_21 = arith.constant dense<0.000000e+00> : vector<2x8x8xf32>
    %65 = tpu.matmul %60, %62, %cst_21 {dimension_numbers = #tpu.dot_dimension_numbers<[2], [2], [1], [1], [0, 0, 0, 1, 1, 1], [0], [0]>} : vector<2x8x8xbf16>, vector<2x8x8xbf16>, vector<2x8x8xf32> -> vector<2x8x8xf32>
    "tpu.trace_stop"() : () -> ()
    %cst_22 = arith.constant 0.353553385 : f32
    %66 = vector.broadcast %cst_22 : f32 to vector<2x8x8xf32>
    %67 = arith.mulf %65, %66 : vector<2x8x8xf32>
    %cst_23 = arith.constant dense<0xFF800000> : vector<2x8xf32>
    %68 = vector.multi_reduction <maximumf>, %67, %cst_23 [2] : vector<2x8x8xf32> to vector<2x8xf32>
    %69 = vector.shape_cast %68 : vector<2x8xf32> to vector<2x8x1xf32>
    %70 = vector.broadcast %69 : vector<2x8x1xf32> to vector<2x8x8xf32>
    %71 = arith.subf %67, %70 : vector<2x8x8xf32>
    %72 = math.exp %71 : vector<2x8x8xf32>
    %cst_24 = arith.constant dense<0.000000e+00> : vector<2x8xf32>
    %73 = vector.multi_reduction <add>, %72, %cst_24 [2] : vector<2x8x8xf32> to vector<2x8xf32>
    %74 = vector.shape_cast %73 : vector<2x8xf32> to vector<2x8x1xf32>
    %75 = vector.broadcast %74 : vector<2x8x1xf32> to vector<2x8x8xf32>
    %76 = arith.divf %72, %75 : vector<2x8x8xf32>
    %77 = arith.truncf %76 : vector<2x8x8xf32> to vector<2x8x8xbf16>
    "tpu.trace_start"() <{level = 10 : i32, message = "bqk,bkd->bqd"}> : () -> ()
    %cst_25 = arith.constant dense<0.000000e+00> : vector<2x8x8xf32>
    %78 = tpu.matmul %77, %64, %cst_25 {dimension_numbers = #tpu.dot_dimension_numbers<[2], [1], [1], [2], [0, 0, 0, 1, 1, 2], [0], [0]>} : vector<2x8x8xbf16>, vector<2x8x8xbf16>, vector<2x8x8xf32> -> vector<2x8x8xf32>
    "tpu.trace_stop"() : () -> ()
    %79 = vector.extract_strided_slice %34 {offsets = [0, 0, 16], sizes = [2, 8, 8], strides = [1, 1, 1]} : vector<2x8x32xf32> to vector<2x8x8xf32>
    %80 = arith.truncf %79 : vector<2x8x8xf32> to vector<2x8x8xbf16>
    %81 = vector.extract_strided_slice %36 {offsets = [0, 0, 16], sizes = [2, 8, 8], strides = [1, 1, 1]} : vector<2x8x32xf32> to vector<2x8x8xf32>
    %82 = arith.truncf %81 : vector<2x8x8xf32> to vector<2x8x8xbf16>
    %83 = vector.extract_strided_slice %38 {offsets = [0, 0, 16], sizes = [2, 8, 8], strides = [1, 1, 1]} : vector<2x8x32xf32> to vector<2x8x8xf32>
    %84 = arith.truncf %83 : vector<2x8x8xf32> to vector<2x8x8xbf16>
    "tpu.trace_start"() <{level = 10 : i32, message = "bqd,bkd->bqk"}> : () -> ()
    %cst_26 = arith.constant dense<0.000000e+00> : vector<2x8x8xf32>
    %85 = tpu.matmul %80, %82, %cst_26 {dimension_numbers = #tpu.dot_dimension_numbers<[2], [2], [1], [1], [0, 0, 0, 1, 1, 1], [0], [0]>} : vector<2x8x8xbf16>, vector<2x8x8xbf16>, vector<2x8x8xf32> -> vector<2x8x8xf32>
    "tpu.trace_stop"() : () -> ()
    %cst_27 = arith.constant 0.353553385 : f32
    %86 = vector.broadcast %cst_27 : f32 to vector<2x8x8xf32>
    %87 = arith.mulf %85, %86 : vector<2x8x8xf32>
    %cst_28 = arith.constant dense<0xFF800000> : vector<2x8xf32>
    %88 = vector.multi_reduction <maximumf>, %87, %cst_28 [2] : vector<2x8x8xf32> to vector<2x8xf32>
    %89 = vector.shape_cast %88 : vector<2x8xf32> to vector<2x8x1xf32>
    %90 = vector.broadcast %89 : vector<2x8x1xf32> to vector<2x8x8xf32>
    %91 = arith.subf %87, %90 : vector<2x8x8xf32>
    %92 = math.exp %91 : vector<2x8x8xf32>
    %cst_29 = arith.constant dense<0.000000e+00> : vector<2x8xf32>
    %93 = vector.multi_reduction <add>, %92, %cst_29 [2] : vector<2x8x8xf32> to vector<2x8xf32>
    %94 = vector.shape_cast %93 : vector<2x8xf32> to vector<2x8x1xf32>
    %95 = vector.broadcast %94 : vector<2x8x1xf32> to vector<2x8x8xf32>
    %96 = arith.divf %92, %95 : vector<2x8x8xf32>
    %97 = arith.truncf %96 : vector<2x8x8xf32> to vector<2x8x8xbf16>
    "tpu.trace_start"() <{level = 10 : i32, message = "bqk,bkd->bqd"}> : () -> ()
    %cst_30 = arith.constant dense<0.000000e+00> : vector<2x8x8xf32>
    %98 = tpu.matmul %97, %84, %cst_30 {dimension_numbers = #tpu.dot_dimension_numbers<[2], [1], [1], [2], [0, 0, 0, 1, 1, 2], [0], [0]>} : vector<2x8x8xbf16>, vector<2x8x8xbf16>, vector<2x8x8xf32> -> vector<2x8x8xf32>
    "tpu.trace_stop"() : () -> ()
    %99 = vector.extract_strided_slice %34 {offsets = [0, 0, 24], sizes = [2, 8, 8], strides = [1, 1, 1]} : vector<2x8x32xf32> to vector<2x8x8xf32>
    %100 = arith.truncf %99 : vector<2x8x8xf32> to vector<2x8x8xbf16>
    %101 = vector.extract_strided_slice %36 {offsets = [0, 0, 24], sizes = [2, 8, 8], strides = [1, 1, 1]} : vector<2x8x32xf32> to vector<2x8x8xf32>
    %102 = arith.truncf %101 : vector<2x8x8xf32> to vector<2x8x8xbf16>
    %103 = vector.extract_strided_slice %38 {offsets = [0, 0, 24], sizes = [2, 8, 8], strides = [1, 1, 1]} : vector<2x8x32xf32> to vector<2x8x8xf32>
    %104 = arith.truncf %103 : vector<2x8x8xf32> to vector<2x8x8xbf16>
    "tpu.trace_start"() <{level = 10 : i32, message = "bqd,bkd->bqk"}> : () -> ()
    %cst_31 = arith.constant dense<0.000000e+00> : vector<2x8x8xf32>
    %105 = tpu.matmul %100, %102, %cst_31 {dimension_numbers = #tpu.dot_dimension_numbers<[2], [2], [1], [1], [0, 0, 0, 1, 1, 1], [0], [0]>} : vector<2x8x8xbf16>, vector<2x8x8xbf16>, vector<2x8x8xf32> -> vector<2x8x8xf32>
    "tpu.trace_stop"() : () -> ()
    %cst_32 = arith.constant 0.353553385 : f32
    %106 = vector.broadcast %cst_32 : f32 to vector<2x8x8xf32>
    %107 = arith.mulf %105, %106 : vector<2x8x8xf32>
    %cst_33 = arith.constant dense<0xFF800000> : vector<2x8xf32>
    %108 = vector.multi_reduction <maximumf>, %107, %cst_33 [2] : vector<2x8x8xf32> to vector<2x8xf32>
    %109 = vector.shape_cast %108 : vector<2x8xf32> to vector<2x8x1xf32>
    %110 = vector.broadcast %109 : vector<2x8x1xf32> to vector<2x8x8xf32>
    %111 = arith.subf %107, %110 : vector<2x8x8xf32>
    %112 = math.exp %111 : vector<2x8x8xf32>
    %cst_34 = arith.constant dense<0.000000e+00> : vector<2x8xf32>
    %113 = vector.multi_reduction <add>, %112, %cst_34 [2] : vector<2x8x8xf32> to vector<2x8xf32>
    %114 = vector.shape_cast %113 : vector<2x8xf32> to vector<2x8x1xf32>
    %115 = vector.broadcast %114 : vector<2x8x1xf32> to vector<2x8x8xf32>
    %116 = arith.divf %112, %115 : vector<2x8x8xf32>
    %117 = arith.truncf %116 : vector<2x8x8xf32> to vector<2x8x8xbf16>
    "tpu.trace_start"() <{level = 10 : i32, message = "bqk,bkd->bqd"}> : () -> ()
    %cst_35 = arith.constant dense<0.000000e+00> : vector<2x8x8xf32>
    %118 = tpu.matmul %117, %104, %cst_35 {dimension_numbers = #tpu.dot_dimension_numbers<[2], [1], [1], [2], [0, 0, 0, 1, 1, 2], [0], [0]>} : vector<2x8x8xbf16>, vector<2x8x8xbf16>, vector<2x8x8xf32> -> vector<2x8x8xf32>
    "tpu.trace_stop"() : () -> ()
    %119 = tpu.concatenate %58, %78, %98, %118 in 2 : vector<2x8x8xf32>, vector<2x8x8xf32>, vector<2x8x8xf32>, vector<2x8x8xf32> -> vector<2x8x32xf32>
    %120 = vector.shape_cast %119 : vector<2x8x32xf32> to vector<16x32xf32>
    %121 = arith.truncf %120 : vector<16x32xf32> to vector<16x32xbf16>
    %c0_36 = arith.constant 0 : index
    %c0_37 = arith.constant 0 : index
    %c0_38 = arith.constant 0 : index
    %122 = vector.load %arg5[%c0_36, %c0_37, %c0_38] : memref<2x32x32xbf16, #tpu.memory_space<vmem>>, vector<1x32x32xbf16>
    %123 = vector.shape_cast %122 : vector<1x32x32xbf16> to vector<32x32xbf16>
    %cst_39 = arith.constant dense<0.000000e+00> : vector<16x32xf32>
    %124 = tpu.matmul %121, %123, %cst_39 {dimension_numbers = #tpu.dot_dimension_numbers<[1], [0], [0], [1], [0, 0, 1, 1], [], []>} : vector<16x32xbf16>, vector<32x32xbf16>, vector<16x32xf32> -> vector<16x32xf32>
    %125 = arith.addf %15, %124 : vector<16x32xf32>
    %c1 = arith.constant 1 : index
    %c0_40 = arith.constant 0 : index
    %126 = vector.load %arg3[%c1, %c0_40] : memref<4x32xf32, #tpu.memory_space<vmem>>, vector<1x32xf32>
    %127 = arith.mulf %125, %125 : vector<16x32xf32>
    %cst_41 = arith.constant dense<0.000000e+00> : vector<16xf32>
    %128 = vector.multi_reduction <add>, %127, %cst_41 [1] : vector<16x32xf32> to vector<16xf32>
    %129 = vector.shape_cast %128 : vector<16xf32> to vector<16x1xf32>
    %cst_42 = arith.constant 3.200000e+01 : f32
    %130 = vector.broadcast %cst_42 : f32 to vector<16x1xf32>
    %131 = arith.divf %129, %130 : vector<16x1xf32>
    %cst_43 = arith.constant 9.99999997E-7 : f32
    %132 = vector.broadcast %cst_43 : f32 to vector<16x1xf32>
    %133 = arith.addf %131, %132 : vector<16x1xf32>
    %134 = math.rsqrt %133 : vector<16x1xf32>
    %135 = vector.broadcast %134 : vector<16x1xf32> to vector<16x32xf32>
    %136 = arith.mulf %125, %135 : vector<16x32xf32>
    %137 = vector.broadcast %126 : vector<1x32xf32> to vector<16x32xf32>
    %138 = arith.mulf %136, %137 : vector<16x32xf32>
    %139 = arith.truncf %138 : vector<16x32xf32> to vector<16x32xbf16>
    %c0_44 = arith.constant 0 : index
    %c0_45 = arith.constant 0 : index
    %c0_46 = arith.constant 0 : index
    %140 = vector.load %arg6[%c0_44, %c0_45, %c0_46] : memref<2x32x2xbf16, #tpu.memory_space<vmem>>, vector<1x32x2xbf16>
    %141 = vector.shape_cast %140 : vector<1x32x2xbf16> to vector<32x2xbf16>
    %cst_47 = arith.constant dense<0.000000e+00> : vector<16x2xf32>
    %142 = tpu.matmul %139, %141, %cst_47 {dimension_numbers = #tpu.dot_dimension_numbers<[1], [0], [0], [1], [0, 0, 1, 1], [], []>} : vector<16x32xbf16>, vector<32x2xbf16>, vector<16x2xf32> -> vector<16x2xf32>
    %cst_48 = arith.constant dense<0xFF800000> : vector<16xf32>
    %143 = vector.multi_reduction <maximumf>, %142, %cst_48 [1] : vector<16x2xf32> to vector<16xf32>
    %144 = vector.shape_cast %143 : vector<16xf32> to vector<16x1xf32>
    %145 = vector.broadcast %144 : vector<16x1xf32> to vector<16x2xf32>
    %146 = arith.subf %142, %145 : vector<16x2xf32>
    %147 = math.exp %146 : vector<16x2xf32>
    %cst_49 = arith.constant dense<0.000000e+00> : vector<16xf32>
    %148 = vector.multi_reduction <add>, %147, %cst_49 [1] : vector<16x2xf32> to vector<16xf32>
    %149 = vector.shape_cast %148 : vector<16xf32> to vector<16x1xf32>
    %150 = vector.broadcast %149 : vector<16x1xf32> to vector<16x2xf32>
    %151 = arith.divf %147, %150 : vector<16x2xf32>
    %c0_50 = arith.constant 0 : index
    %c0_51 = arith.constant 0 : index
    %c0_52 = arith.constant 0 : index
    %152 = vector.load %arg7[%c0_50, %c0_51, %c0_52] : memref<2x32x256xbf16, #tpu.memory_space<vmem>>, vector<1x32x256xbf16>
    %153 = vector.shape_cast %152 : vector<1x32x256xbf16> to vector<32x256xbf16>
    %cst_53 = arith.constant dense<0.000000e+00> : vector<16x256xf32>
    %154 = tpu.matmul %139, %153, %cst_53 {dimension_numbers = #tpu.dot_dimension_numbers<[1], [0], [0], [1], [0, 0, 1, 1], [], []>} : vector<16x32xbf16>, vector<32x256xbf16>, vector<16x256xf32> -> vector<16x256xf32>
    %cst_54 = arith.constant 0.000000e+00 : f32
    %155 = vector.broadcast %cst_54 : f32 to vector<16x256xf32>
    %156 = arith.maximumf %154, %155 : vector<16x256xf32>
    %157 = vector.extract_strided_slice %151 {offsets = [0, 0], sizes = [16, 1], strides = [1, 1]} : vector<16x2xf32> to vector<16x1xf32>
    %158 = vector.shape_cast %157 : vector<16x1xf32> to vector<16x1xf32>
    %159 = vector.broadcast %158 : vector<16x1xf32> to vector<16x128xf32>
    %160 = vector.extract_strided_slice %151 {offsets = [0, 1], sizes = [16, 1], strides = [1, 1]} : vector<16x2xf32> to vector<16x1xf32>
    %161 = vector.shape_cast %160 : vector<16x1xf32> to vector<16x1xf32>
    %162 = vector.broadcast %161 : vector<16x1xf32> to vector<16x128xf32>
    %163 = tpu.concatenate %159, %162 in 1 : vector<16x128xf32>, vector<16x128xf32> -> vector<16x256xf32>
    %164 = arith.mulf %156, %163 : vector<16x256xf32>
    %165 = arith.truncf %164 : vector<16x256xf32> to vector<16x256xbf16>
    %c0_55 = arith.constant 0 : index
    %c0_56 = arith.constant 0 : index
    %c0_57 = arith.constant 0 : index
    %166 = vector.load %arg8[%c0_55, %c0_56, %c0_57] : memref<2x256x32xbf16, #tpu.memory_space<vmem>>, vector<1x256x32xbf16>
    %167 = vector.shape_cast %166 : vector<1x256x32xbf16> to vector<256x32xbf16>
    %cst_58 = arith.constant dense<0.000000e+00> : vector<16x32xf32>
    %168 = tpu.matmul %165, %167, %cst_58 {dimension_numbers = #tpu.dot_dimension_numbers<[1], [0], [0], [1], [0, 0, 1, 1], [], []>} : vector<16x256xbf16>, vector<256x32xbf16>, vector<16x32xf32> -> vector<16x32xf32>
    %169 = arith.addf %125, %168 : vector<16x32xf32>
    %c2 = arith.constant 2 : index
    %c0_59 = arith.constant 0 : index
    %170 = vector.load %arg3[%c2, %c0_59] : memref<4x32xf32, #tpu.memory_space<vmem>>, vector<1x32xf32>
    %171 = arith.mulf %169, %169 : vector<16x32xf32>
    %cst_60 = arith.constant dense<0.000000e+00> : vector<16xf32>
    %172 = vector.multi_reduction <add>, %171, %cst_60 [1] : vector<16x32xf32> to vector<16xf32>
    %173 = vector.shape_cast %172 : vector<16xf32> to vector<16x1xf32>
    %cst_61 = arith.constant 3.200000e+01 : f32
    %174 = vector.broadcast %cst_61 : f32 to vector<16x1xf32>
    %175 = arith.divf %173, %174 : vector<16x1xf32>
    %cst_62 = arith.constant 9.99999997E-7 : f32
    %176 = vector.broadcast %cst_62 : f32 to vector<16x1xf32>
    %177 = arith.addf %175, %176 : vector<16x1xf32>
    %178 = math.rsqrt %177 : vector<16x1xf32>
    %179 = vector.broadcast %178 : vector<16x1xf32> to vector<16x32xf32>
    %180 = arith.mulf %169, %179 : vector<16x32xf32>
    %181 = vector.broadcast %170 : vector<1x32xf32> to vector<16x32xf32>
    %182 = arith.mulf %180, %181 : vector<16x32xf32>
    %183 = arith.truncf %182 : vector<16x32xf32> to vector<16x32xbf16>
    %c1_63 = arith.constant 1 : index
    %c0_64 = arith.constant 0 : index
    %c0_65 = arith.constant 0 : index
    %184 = vector.load %arg4[%c1_63, %c0_64, %c0_65] : memref<2x32x96xbf16, #tpu.memory_space<vmem>>, vector<1x32x96xbf16>
    %185 = vector.shape_cast %184 : vector<1x32x96xbf16> to vector<32x96xbf16>
    %cst_66 = arith.constant dense<0.000000e+00> : vector<16x96xf32>
    %186 = tpu.matmul %183, %185, %cst_66 {dimension_numbers = #tpu.dot_dimension_numbers<[1], [0], [0], [1], [0, 0, 1, 1], [], []>} : vector<16x32xbf16>, vector<32x96xbf16>, vector<16x96xf32> -> vector<16x96xf32>
    %187 = vector.extract_strided_slice %186 {offsets = [0, 0], sizes = [16, 32], strides = [1, 1]} : vector<16x96xf32> to vector<16x32xf32>
    %188 = vector.shape_cast %187 : vector<16x32xf32> to vector<2x8x32xf32>
    %189 = vector.extract_strided_slice %186 {offsets = [0, 32], sizes = [16, 32], strides = [1, 1]} : vector<16x96xf32> to vector<16x32xf32>
    %190 = vector.shape_cast %189 : vector<16x32xf32> to vector<2x8x32xf32>
    %191 = vector.extract_strided_slice %186 {offsets = [0, 64], sizes = [16, 32], strides = [1, 1]} : vector<16x96xf32> to vector<16x32xf32>
    %192 = vector.shape_cast %191 : vector<16x32xf32> to vector<2x8x32xf32>
    %193 = vector.extract_strided_slice %188 {offsets = [0, 0, 0], sizes = [2, 8, 8], strides = [1, 1, 1]} : vector<2x8x32xf32> to vector<2x8x8xf32>
    %194 = arith.truncf %193 : vector<2x8x8xf32> to vector<2x8x8xbf16>
    %195 = vector.extract_strided_slice %190 {offsets = [0, 0, 0], sizes = [2, 8, 8], strides = [1, 1, 1]} : vector<2x8x32xf32> to vector<2x8x8xf32>
    %196 = arith.truncf %195 : vector<2x8x8xf32> to vector<2x8x8xbf16>
    %197 = vector.extract_strided_slice %192 {offsets = [0, 0, 0], sizes = [2, 8, 8], strides = [1, 1, 1]} : vector<2x8x32xf32> to vector<2x8x8xf32>
    %198 = arith.truncf %197 : vector<2x8x8xf32> to vector<2x8x8xbf16>
    "tpu.trace_start"() <{level = 10 : i32, message = "bqd,bkd->bqk"}> : () -> ()
    %cst_67 = arith.constant dense<0.000000e+00> : vector<2x8x8xf32>
    %199 = tpu.matmul %194, %196, %cst_67 {dimension_numbers = #tpu.dot_dimension_numbers<[2], [2], [1], [1], [0, 0, 0, 1, 1, 1], [0], [0]>} : vector<2x8x8xbf16>, vector<2x8x8xbf16>, vector<2x8x8xf32> -> vector<2x8x8xf32>
    "tpu.trace_stop"() : () -> ()
    %cst_68 = arith.constant 0.353553385 : f32
    %200 = vector.broadcast %cst_68 : f32 to vector<2x8x8xf32>
    %201 = arith.mulf %199, %200 : vector<2x8x8xf32>
    %cst_69 = arith.constant dense<0xFF800000> : vector<2x8xf32>
    %202 = vector.multi_reduction <maximumf>, %201, %cst_69 [2] : vector<2x8x8xf32> to vector<2x8xf32>
    %203 = vector.shape_cast %202 : vector<2x8xf32> to vector<2x8x1xf32>
    %204 = vector.broadcast %203 : vector<2x8x1xf32> to vector<2x8x8xf32>
    %205 = arith.subf %201, %204 : vector<2x8x8xf32>
    %206 = math.exp %205 : vector<2x8x8xf32>
    %cst_70 = arith.constant dense<0.000000e+00> : vector<2x8xf32>
    %207 = vector.multi_reduction <add>, %206, %cst_70 [2] : vector<2x8x8xf32> to vector<2x8xf32>
    %208 = vector.shape_cast %207 : vector<2x8xf32> to vector<2x8x1xf32>
    %209 = vector.broadcast %208 : vector<2x8x1xf32> to vector<2x8x8xf32>
    %210 = arith.divf %206, %209 : vector<2x8x8xf32>
    %211 = arith.truncf %210 : vector<2x8x8xf32> to vector<2x8x8xbf16>
    "tpu.trace_start"() <{level = 10 : i32, message = "bqk,bkd->bqd"}> : () -> ()
    %cst_71 = arith.constant dense<0.000000e+00> : vector<2x8x8xf32>
    %212 = tpu.matmul %211, %198, %cst_71 {dimension_numbers = #tpu.dot_dimension_numbers<[2], [1], [1], [2], [0, 0, 0, 1, 1, 2], [0], [0]>} : vector<2x8x8xbf16>, vector<2x8x8xbf16>, vector<2x8x8xf32> -> vector<2x8x8xf32>
    "tpu.trace_stop"() : () -> ()
    %213 = vector.extract_strided_slice %188 {offsets = [0, 0, 8], sizes = [2, 8, 8], strides = [1, 1, 1]} : vector<2x8x32xf32> to vector<2x8x8xf32>
    %214 = arith.truncf %213 : vector<2x8x8xf32> to vector<2x8x8xbf16>
    %215 = vector.extract_strided_slice %190 {offsets = [0, 0, 8], sizes = [2, 8, 8], strides = [1, 1, 1]} : vector<2x8x32xf32> to vector<2x8x8xf32>
    %216 = arith.truncf %215 : vector<2x8x8xf32> to vector<2x8x8xbf16>
    %217 = vector.extract_strided_slice %192 {offsets = [0, 0, 8], sizes = [2, 8, 8], strides = [1, 1, 1]} : vector<2x8x32xf32> to vector<2x8x8xf32>
    %218 = arith.truncf %217 : vector<2x8x8xf32> to vector<2x8x8xbf16>
    "tpu.trace_start"() <{level = 10 : i32, message = "bqd,bkd->bqk"}> : () -> ()
    %cst_72 = arith.constant dense<0.000000e+00> : vector<2x8x8xf32>
    %219 = tpu.matmul %214, %216, %cst_72 {dimension_numbers = #tpu.dot_dimension_numbers<[2], [2], [1], [1], [0, 0, 0, 1, 1, 1], [0], [0]>} : vector<2x8x8xbf16>, vector<2x8x8xbf16>, vector<2x8x8xf32> -> vector<2x8x8xf32>
    "tpu.trace_stop"() : () -> ()
    %cst_73 = arith.constant 0.353553385 : f32
    %220 = vector.broadcast %cst_73 : f32 to vector<2x8x8xf32>
    %221 = arith.mulf %219, %220 : vector<2x8x8xf32>
    %cst_74 = arith.constant dense<0xFF800000> : vector<2x8xf32>
    %222 = vector.multi_reduction <maximumf>, %221, %cst_74 [2] : vector<2x8x8xf32> to vector<2x8xf32>
    %223 = vector.shape_cast %222 : vector<2x8xf32> to vector<2x8x1xf32>
    %224 = vector.broadcast %223 : vector<2x8x1xf32> to vector<2x8x8xf32>
    %225 = arith.subf %221, %224 : vector<2x8x8xf32>
    %226 = math.exp %225 : vector<2x8x8xf32>
    %cst_75 = arith.constant dense<0.000000e+00> : vector<2x8xf32>
    %227 = vector.multi_reduction <add>, %226, %cst_75 [2] : vector<2x8x8xf32> to vector<2x8xf32>
    %228 = vector.shape_cast %227 : vector<2x8xf32> to vector<2x8x1xf32>
    %229 = vector.broadcast %228 : vector<2x8x1xf32> to vector<2x8x8xf32>
    %230 = arith.divf %226, %229 : vector<2x8x8xf32>
    %231 = arith.truncf %230 : vector<2x8x8xf32> to vector<2x8x8xbf16>
    "tpu.trace_start"() <{level = 10 : i32, message = "bqk,bkd->bqd"}> : () -> ()
    %cst_76 = arith.constant dense<0.000000e+00> : vector<2x8x8xf32>
    %232 = tpu.matmul %231, %218, %cst_76 {dimension_numbers = #tpu.dot_dimension_numbers<[2], [1], [1], [2], [0, 0, 0, 1, 1, 2], [0], [0]>} : vector<2x8x8xbf16>, vector<2x8x8xbf16>, vector<2x8x8xf32> -> vector<2x8x8xf32>
    "tpu.trace_stop"() : () -> ()
    %233 = vector.extract_strided_slice %188 {offsets = [0, 0, 16], sizes = [2, 8, 8], strides = [1, 1, 1]} : vector<2x8x32xf32> to vector<2x8x8xf32>
    %234 = arith.truncf %233 : vector<2x8x8xf32> to vector<2x8x8xbf16>
    %235 = vector.extract_strided_slice %190 {offsets = [0, 0, 16], sizes = [2, 8, 8], strides = [1, 1, 1]} : vector<2x8x32xf32> to vector<2x8x8xf32>
    %236 = arith.truncf %235 : vector<2x8x8xf32> to vector<2x8x8xbf16>
    %237 = vector.extract_strided_slice %192 {offsets = [0, 0, 16], sizes = [2, 8, 8], strides = [1, 1, 1]} : vector<2x8x32xf32> to vector<2x8x8xf32>
    %238 = arith.truncf %237 : vector<2x8x8xf32> to vector<2x8x8xbf16>
    "tpu.trace_start"() <{level = 10 : i32, message = "bqd,bkd->bqk"}> : () -> ()
    %cst_77 = arith.constant dense<0.000000e+00> : vector<2x8x8xf32>
    %239 = tpu.matmul %234, %236, %cst_77 {dimension_numbers = #tpu.dot_dimension_numbers<[2], [2], [1], [1], [0, 0, 0, 1, 1, 1], [0], [0]>} : vector<2x8x8xbf16>, vector<2x8x8xbf16>, vector<2x8x8xf32> -> vector<2x8x8xf32>
    "tpu.trace_stop"() : () -> ()
    %cst_78 = arith.constant 0.353553385 : f32
    %240 = vector.broadcast %cst_78 : f32 to vector<2x8x8xf32>
    %241 = arith.mulf %239, %240 : vector<2x8x8xf32>
    %cst_79 = arith.constant dense<0xFF800000> : vector<2x8xf32>
    %242 = vector.multi_reduction <maximumf>, %241, %cst_79 [2] : vector<2x8x8xf32> to vector<2x8xf32>
    %243 = vector.shape_cast %242 : vector<2x8xf32> to vector<2x8x1xf32>
    %244 = vector.broadcast %243 : vector<2x8x1xf32> to vector<2x8x8xf32>
    %245 = arith.subf %241, %244 : vector<2x8x8xf32>
    %246 = math.exp %245 : vector<2x8x8xf32>
    %cst_80 = arith.constant dense<0.000000e+00> : vector<2x8xf32>
    %247 = vector.multi_reduction <add>, %246, %cst_80 [2] : vector<2x8x8xf32> to vector<2x8xf32>
    %248 = vector.shape_cast %247 : vector<2x8xf32> to vector<2x8x1xf32>
    %249 = vector.broadcast %248 : vector<2x8x1xf32> to vector<2x8x8xf32>
    %250 = arith.divf %246, %249 : vector<2x8x8xf32>
    %251 = arith.truncf %250 : vector<2x8x8xf32> to vector<2x8x8xbf16>
    "tpu.trace_start"() <{level = 10 : i32, message = "bqk,bkd->bqd"}> : () -> ()
    %cst_81 = arith.constant dense<0.000000e+00> : vector<2x8x8xf32>
    %252 = tpu.matmul %251, %238, %cst_81 {dimension_numbers = #tpu.dot_dimension_numbers<[2], [1], [1], [2], [0, 0, 0, 1, 1, 2], [0], [0]>} : vector<2x8x8xbf16>, vector<2x8x8xbf16>, vector<2x8x8xf32> -> vector<2x8x8xf32>
    "tpu.trace_stop"() : () -> ()
    %253 = vector.extract_strided_slice %188 {offsets = [0, 0, 24], sizes = [2, 8, 8], strides = [1, 1, 1]} : vector<2x8x32xf32> to vector<2x8x8xf32>
    %254 = arith.truncf %253 : vector<2x8x8xf32> to vector<2x8x8xbf16>
    %255 = vector.extract_strided_slice %190 {offsets = [0, 0, 24], sizes = [2, 8, 8], strides = [1, 1, 1]} : vector<2x8x32xf32> to vector<2x8x8xf32>
    %256 = arith.truncf %255 : vector<2x8x8xf32> to vector<2x8x8xbf16>
    %257 = vector.extract_strided_slice %192 {offsets = [0, 0, 24], sizes = [2, 8, 8], strides = [1, 1, 1]} : vector<2x8x32xf32> to vector<2x8x8xf32>
    %258 = arith.truncf %257 : vector<2x8x8xf32> to vector<2x8x8xbf16>
    "tpu.trace_start"() <{level = 10 : i32, message = "bqd,bkd->bqk"}> : () -> ()
    %cst_82 = arith.constant dense<0.000000e+00> : vector<2x8x8xf32>
    %259 = tpu.matmul %254, %256, %cst_82 {dimension_numbers = #tpu.dot_dimension_numbers<[2], [2], [1], [1], [0, 0, 0, 1, 1, 1], [0], [0]>} : vector<2x8x8xbf16>, vector<2x8x8xbf16>, vector<2x8x8xf32> -> vector<2x8x8xf32>
    "tpu.trace_stop"() : () -> ()
    %cst_83 = arith.constant 0.353553385 : f32
    %260 = vector.broadcast %cst_83 : f32 to vector<2x8x8xf32>
    %261 = arith.mulf %259, %260 : vector<2x8x8xf32>
    %cst_84 = arith.constant dense<0xFF800000> : vector<2x8xf32>
    %262 = vector.multi_reduction <maximumf>, %261, %cst_84 [2] : vector<2x8x8xf32> to vector<2x8xf32>
    %263 = vector.shape_cast %262 : vector<2x8xf32> to vector<2x8x1xf32>
    %264 = vector.broadcast %263 : vector<2x8x1xf32> to vector<2x8x8xf32>
    %265 = arith.subf %261, %264 : vector<2x8x8xf32>
    %266 = math.exp %265 : vector<2x8x8xf32>
    %cst_85 = arith.constant dense<0.000000e+00> : vector<2x8xf32>
    %267 = vector.multi_reduction <add>, %266, %cst_85 [2] : vector<2x8x8xf32> to vector<2x8xf32>
    %268 = vector.shape_cast %267 : vector<2x8xf32> to vector<2x8x1xf32>
    %269 = vector.broadcast %268 : vector<2x8x1xf32> to vector<2x8x8xf32>
    %270 = arith.divf %266, %269 : vector<2x8x8xf32>
    %271 = arith.truncf %270 : vector<2x8x8xf32> to vector<2x8x8xbf16>
    "tpu.trace_start"() <{level = 10 : i32, message = "bqk,bkd->bqd"}> : () -> ()
    %cst_86 = arith.constant dense<0.000000e+00> : vector<2x8x8xf32>
    %272 = tpu.matmul %271, %258, %cst_86 {dimension_numbers = #tpu.dot_dimension_numbers<[2], [1], [1], [2], [0, 0, 0, 1, 1, 2], [0], [0]>} : vector<2x8x8xbf16>, vector<2x8x8xbf16>, vector<2x8x8xf32> -> vector<2x8x8xf32>
    "tpu.trace_stop"() : () -> ()
    %273 = tpu.concatenate %212, %232, %252, %272 in 2 : vector<2x8x8xf32>, vector<2x8x8xf32>, vector<2x8x8xf32>, vector<2x8x8xf32> -> vector<2x8x32xf32>
    %274 = vector.shape_cast %273 : vector<2x8x32xf32> to vector<16x32xf32>
    %275 = arith.truncf %274 : vector<16x32xf32> to vector<16x32xbf16>
    %c1_87 = arith.constant 1 : index
    %c0_88 = arith.constant 0 : index
    %c0_89 = arith.constant 0 : index
    %276 = vector.load %arg5[%c1_87, %c0_88, %c0_89] : memref<2x32x32xbf16, #tpu.memory_space<vmem>>, vector<1x32x32xbf16>
    %277 = vector.shape_cast %276 : vector<1x32x32xbf16> to vector<32x32xbf16>
    %cst_90 = arith.constant dense<0.000000e+00> : vector<16x32xf32>
    %278 = tpu.matmul %275, %277, %cst_90 {dimension_numbers = #tpu.dot_dimension_numbers<[1], [0], [0], [1], [0, 0, 1, 1], [], []>} : vector<16x32xbf16>, vector<32x32xbf16>, vector<16x32xf32> -> vector<16x32xf32>
    %279 = arith.addf %169, %278 : vector<16x32xf32>
    %c3 = arith.constant 3 : index
    %c0_91 = arith.constant 0 : index
    %280 = vector.load %arg3[%c3, %c0_91] : memref<4x32xf32, #tpu.memory_space<vmem>>, vector<1x32xf32>
    %281 = arith.mulf %279, %279 : vector<16x32xf32>
    %cst_92 = arith.constant dense<0.000000e+00> : vector<16xf32>
    %282 = vector.multi_reduction <add>, %281, %cst_92 [1] : vector<16x32xf32> to vector<16xf32>
    %283 = vector.shape_cast %282 : vector<16xf32> to vector<16x1xf32>
    %cst_93 = arith.constant 3.200000e+01 : f32
    %284 = vector.broadcast %cst_93 : f32 to vector<16x1xf32>
    %285 = arith.divf %283, %284 : vector<16x1xf32>
    %cst_94 = arith.constant 9.99999997E-7 : f32
    %286 = vector.broadcast %cst_94 : f32 to vector<16x1xf32>
    %287 = arith.addf %285, %286 : vector<16x1xf32>
    %288 = math.rsqrt %287 : vector<16x1xf32>
    %289 = vector.broadcast %288 : vector<16x1xf32> to vector<16x32xf32>
    %290 = arith.mulf %279, %289 : vector<16x32xf32>
    %291 = vector.broadcast %280 : vector<1x32xf32> to vector<16x32xf32>
    %292 = arith.mulf %290, %291 : vector<16x32xf32>
    %293 = arith.truncf %292 : vector<16x32xf32> to vector<16x32xbf16>
    %c1_95 = arith.constant 1 : index
    %c0_96 = arith.constant 0 : index
    %c0_97 = arith.constant 0 : index
    %294 = vector.load %arg6[%c1_95, %c0_96, %c0_97] : memref<2x32x2xbf16, #tpu.memory_space<vmem>>, vector<1x32x2xbf16>
    %295 = vector.shape_cast %294 : vector<1x32x2xbf16> to vector<32x2xbf16>
    %cst_98 = arith.constant dense<0.000000e+00> : vector<16x2xf32>
    %296 = tpu.matmul %293, %295, %cst_98 {dimension_numbers = #tpu.dot_dimension_numbers<[1], [0], [0], [1], [0, 0, 1, 1], [], []>} : vector<16x32xbf16>, vector<32x2xbf16>, vector<16x2xf32> -> vector<16x2xf32>
    %cst_99 = arith.constant dense<0xFF800000> : vector<16xf32>
    %297 = vector.multi_reduction <maximumf>, %296, %cst_99 [1] : vector<16x2xf32> to vector<16xf32>
    %298 = vector.shape_cast %297 : vector<16xf32> to vector<16x1xf32>
    %299 = vector.broadcast %298 : vector<16x1xf32> to vector<16x2xf32>
    %300 = arith.subf %296, %299 : vector<16x2xf32>
    %301 = math.exp %300 : vector<16x2xf32>
    %cst_100 = arith.constant dense<0.000000e+00> : vector<16xf32>
    %302 = vector.multi_reduction <add>, %301, %cst_100 [1] : vector<16x2xf32> to vector<16xf32>
    %303 = vector.shape_cast %302 : vector<16xf32> to vector<16x1xf32>
    %304 = vector.broadcast %303 : vector<16x1xf32> to vector<16x2xf32>
    %305 = arith.divf %301, %304 : vector<16x2xf32>
    %c1_101 = arith.constant 1 : index
    %c0_102 = arith.constant 0 : index
    %c0_103 = arith.constant 0 : index
    %306 = vector.load %arg7[%c1_101, %c0_102, %c0_103] : memref<2x32x256xbf16, #tpu.memory_space<vmem>>, vector<1x32x256xbf16>
    %307 = vector.shape_cast %306 : vector<1x32x256xbf16> to vector<32x256xbf16>
    %cst_104 = arith.constant dense<0.000000e+00> : vector<16x256xf32>
    %308 = tpu.matmul %293, %307, %cst_104 {dimension_numbers = #tpu.dot_dimension_numbers<[1], [0], [0], [1], [0, 0, 1, 1], [], []>} : vector<16x32xbf16>, vector<32x256xbf16>, vector<16x256xf32> -> vector<16x256xf32>
    %cst_105 = arith.constant 0.000000e+00 : f32
    %309 = vector.broadcast %cst_105 : f32 to vector<16x256xf32>
    %310 = arith.maximumf %308, %309 : vector<16x256xf32>
    %311 = vector.extract_strided_slice %305 {offsets = [0, 0], sizes = [16, 1], strides = [1, 1]} : vector<16x2xf32> to vector<16x1xf32>
    %312 = vector.shape_cast %311 : vector<16x1xf32> to vector<16x1xf32>
    %313 = vector.broadcast %312 : vector<16x1xf32> to vector<16x128xf32>
    %314 = vector.extract_strided_slice %305 {offsets = [0, 1], sizes = [16, 1], strides = [1, 1]} : vector<16x2xf32> to vector<16x1xf32>
    %315 = vector.shape_cast %314 : vector<16x1xf32> to vector<16x1xf32>
    %316 = vector.broadcast %315 : vector<16x1xf32> to vector<16x128xf32>
    %317 = tpu.concatenate %313, %316 in 1 : vector<16x128xf32>, vector<16x128xf32> -> vector<16x256xf32>
    %318 = arith.mulf %310, %317 : vector<16x256xf32>
    %319 = arith.truncf %318 : vector<16x256xf32> to vector<16x256xbf16>
    %c1_106 = arith.constant 1 : index
    %c0_107 = arith.constant 0 : index
    %c0_108 = arith.constant 0 : index
    %320 = vector.load %arg8[%c1_106, %c0_107, %c0_108] : memref<2x256x32xbf16, #tpu.memory_space<vmem>>, vector<1x256x32xbf16>
    %321 = vector.shape_cast %320 : vector<1x256x32xbf16> to vector<256x32xbf16>
    %cst_109 = arith.constant dense<0.000000e+00> : vector<16x32xf32>
    %322 = tpu.matmul %319, %321, %cst_109 {dimension_numbers = #tpu.dot_dimension_numbers<[1], [0], [0], [1], [0, 0, 1, 1], [], []>} : vector<16x256xbf16>, vector<256x32xbf16>, vector<16x32xf32> -> vector<16x32xf32>
    %323 = arith.addf %279, %322 : vector<16x32xf32>
    %324 = vector.shape_cast %323 : vector<16x32xf32> to vector<2x8x32xf32>
    %325 = vector.extract_strided_slice %324 {offsets = [0, 0, 0], sizes = [2, 1, 32], strides = [1, 1, 1]} : vector<2x8x32xf32> to vector<2x1x32xf32>
    %326 = vector.shape_cast %325 : vector<2x1x32xf32> to vector<2x32xf32>
    %327 = vector.extract_strided_slice %324 {offsets = [0, 1, 0], sizes = [2, 1, 32], strides = [1, 1, 1]} : vector<2x8x32xf32> to vector<2x1x32xf32>
    %328 = vector.shape_cast %327 : vector<2x1x32xf32> to vector<2x32xf32>
    %329 = vector.extract_strided_slice %324 {offsets = [0, 2, 0], sizes = [2, 1, 32], strides = [1, 1, 1]} : vector<2x8x32xf32> to vector<2x1x32xf32>
    %330 = vector.shape_cast %329 : vector<2x1x32xf32> to vector<2x32xf32>
    %331 = vector.extract_strided_slice %324 {offsets = [0, 3, 0], sizes = [2, 1, 32], strides = [1, 1, 1]} : vector<2x8x32xf32> to vector<2x1x32xf32>
    %332 = vector.shape_cast %331 : vector<2x1x32xf32> to vector<2x32xf32>
    %333 = vector.extract_strided_slice %324 {offsets = [0, 4, 0], sizes = [2, 1, 32], strides = [1, 1, 1]} : vector<2x8x32xf32> to vector<2x1x32xf32>
    %334 = vector.shape_cast %333 : vector<2x1x32xf32> to vector<2x32xf32>
    %335 = vector.extract_strided_slice %324 {offsets = [0, 5, 0], sizes = [2, 1, 32], strides = [1, 1, 1]} : vector<2x8x32xf32> to vector<2x1x32xf32>
    %336 = vector.shape_cast %335 : vector<2x1x32xf32> to vector<2x32xf32>
    %337 = vector.extract_strided_slice %324 {offsets = [0, 6, 0], sizes = [2, 1, 32], strides = [1, 1, 1]} : vector<2x8x32xf32> to vector<2x1x32xf32>
    %338 = vector.shape_cast %337 : vector<2x1x32xf32> to vector<2x32xf32>
    %339 = vector.extract_strided_slice %324 {offsets = [0, 7, 0], sizes = [2, 1, 32], strides = [1, 1, 1]} : vector<2x8x32xf32> to vector<2x1x32xf32>
    %340 = vector.shape_cast %339 : vector<2x1x32xf32> to vector<2x32xf32>
    %341 = tpu.concatenate %326, %328, %330, %332, %334, %336, %338, %340 in 1 : vector<2x32xf32>, vector<2x32xf32>, vector<2x32xf32>, vector<2x32xf32>, vector<2x32xf32>, vector<2x32xf32>, vector<2x32xf32>, vector<2x32xf32> -> vector<2x256xf32>
    %342 = arith.truncf %341 : vector<2x256xf32> to vector<2x256xbf16>
    %c0_110 = arith.constant 0 : index
    %c0_111 = arith.constant 0 : index
    %343 = vector.load %arg9[%c0_110, %c0_111] : memref<256x128xbf16, #tpu.memory_space<vmem>>, vector<256x128xbf16>
    %cst_112 = arith.constant dense<0.000000e+00> : vector<2x128xf32>
    %344 = tpu.matmul %342, %343, %cst_112 {dimension_numbers = #tpu.dot_dimension_numbers<[1], [0], [0], [1], [0, 0, 1, 1], [], []>} : vector<2x256xbf16>, vector<256x128xbf16>, vector<2x128xf32> -> vector<2x128xf32>
    %c0_113 = arith.constant 0 : index
    %c0_114 = arith.constant 0 : index
    %345 = vector.load %arg10[%c0_113, %c0_114] : memref<1x128xf32, #tpu.memory_space<vmem>>, vector<1x128xf32>
    %346 = vector.broadcast %345 : vector<1x128xf32> to vector<2x128xf32>
    %347 = arith.addf %344, %346 : vector<2x128xf32>
    %c0_115 = arith.constant 0 : index
    %c0_116 = arith.constant 0 : index
    %348 = vector.load %arg11[%c0_115, %c0_116] : memref<2x128xf32, #tpu.memory_space<vmem>>, vector<2x128xf32>
    tpu.vector_store %arg11[%c0_115, %c0_116], %347 {strides = array<i32>} : memref<2x128xf32, #tpu.memory_space<vmem>>, vector<2x128xf32>,
    return
  }
}

</mosaic_0001>

<llo_original>
// kernel: moe_encoder_transformer.1
$region0: #{moe_encoder_transformer.1}
  #allocation0 [shape = 'u32[]', space=smem, size = 0x4, offset = 0x4, fixed_abs, tag = 'smem constant byte address 0x4 - core index']
  #allocation1 [shape = 'u32[144,128]{1,0:T(1,128)}', space=vmem, size = 0x12000, scoped, tag = 'internal scratch']
  %s0 = inlined_call_operand.vmem [shape: s32[16,1], index: 0, kind: input, shape index: {}]
  %s1 = inlined_call_operand.vmem [shape: bf16[32,32], index: 1, kind: input, shape index: {}]
  %s2 = inlined_call_operand.vmem [shape: f32[8,32], index: 2, kind: input, shape index: {}]
  %s3 = inlined_call_operand.vmem [shape: f32[4,32], index: 3, kind: input, shape index: {}]
  %s4 = inlined_call_operand.vmem [shape: bf16[2,32,96], index: 4, kind: input, shape index: {}]
  %s5 = inlined_call_operand.vmem [shape: bf16[2,32,32], index: 5, kind: input, shape index: {}]
  %s6 = inlined_call_operand.vmem [shape: bf16[2,32,2], index: 6, kind: input, shape index: {}]
  %s7 = inlined_call_operand.vmem [shape: bf16[2,32,256], index: 7, kind: input, shape index: {}]
  %s8 = inlined_call_operand.vmem [shape: bf16[2,256,32], index: 8, kind: input, shape index: {}]
  %s9 = inlined_call_operand.vmem [shape: bf16[256,128], index: 9, kind: input, shape index: {}]
  %s10 = inlined_call_operand.vmem [shape: f32[1,128], index: 10, kind: input, shape index: {}]
  %s11 = inlined_call_operand.hbm [shape: f32[2,128], index: 11, kind: output, shape index: {}]
  %s12 = sld [smem:[#allocation0]]
  $region54: #{moe_encoder_transformer.1} parent=0
    _
  %s14 = ssub.s32 1, %s12
  %s15 = scalar_select 0, %s14, %s12
  $region1: #{moe_encoder_transformer.1} parent=0
    #allocation2 [shape = 'u8[1024]{0}', space=vmem, size = 0x400, scoped, tag = 'output window, operand 0, single buffered']
    #allocation3 [shape = 's32[1]{0}', space=sflag, size = 0x4, scoped, tag = 'scoped memory for moe_encoder_transformer.1']
    %16 = vsyncpa [#allocation3], 0
    // Predicated region
    $region2: #{moe_encoder_transformer.1} parent=1 // pred_check
      _
    $region3: #{moe_encoder_transformer.1} parent=1 // pred_check_branch
      %18 = sbr.rel (0) target = $region5
    $region4: #{moe_encoder_transformer.1} parent=1 // pred_region
      _
    $region5: #{moe_encoder_transformer.1} parent=1 // pred_fallthru
      _
    // Predicated region
    $region6: #{moe_encoder_transformer.1} parent=1 // pred_check
      _
    $region7: #{moe_encoder_transformer.1} parent=1 // pred_check_branch
      %20 = sbr.rel (0) target = $region9
    $region8: #{moe_encoder_transformer.1} parent=1 // pred_region
      _
    $region9: #{moe_encoder_transformer.1} parent=1 // pred_fallthru
      _
    // Predicated region
    $region10: #{moe_encoder_transformer.1} parent=1 // pred_check
      _
    $region11: #{moe_encoder_transformer.1} parent=1 // pred_check_branch
      %22 = sbr.rel (0) target = $region13
    $region12: #{moe_encoder_transformer.1} parent=1 // pred_region
      _
    $region13: #{moe_encoder_transformer.1} parent=1 // pred_fallthru
      _
    // Predicated region
    $region14: #{moe_encoder_transformer.1} parent=1 // pred_check
      _
    $region15: #{moe_encoder_transformer.1} parent=1 // pred_check_branch
      %24 = sbr.rel (0) target = $region17
    $region16: #{moe_encoder_transformer.1} parent=1 // pred_region
      _
    $region17: #{moe_encoder_transformer.1} parent=1 // pred_fallthru
      _
    // Predicated region
    $region18: #{moe_encoder_transformer.1} parent=1 // pred_check
      _
    $region19: #{moe_encoder_transformer.1} parent=1 // pred_check_branch
      %26 = sbr.rel (0) target = $region21
    $region20: #{moe_encoder_transformer.1} parent=1 // pred_region
      _
    $region21: #{moe_encoder_transformer.1} parent=1 // pred_fallthru
      _
    // Predicated region
    $region22: #{moe_encoder_transformer.1} parent=1 // pred_check
      _
    $region23: #{moe_encoder_transformer.1} parent=1 // pred_check_branch
      %28 = sbr.rel (0) target = $region25
    $region24: #{moe_encoder_transformer.1} parent=1 // pred_region
      _
    $region25: #{moe_encoder_transformer.1} parent=1 // pred_fallthru
      _
    // Predicated region
    $region26: #{moe_encoder_transformer.1} parent=1 // pred_check
      _
    $region27: #{moe_encoder_transformer.1} parent=1 // pred_check_branch
      %30 = sbr.rel (0) target = $region29
    $region28: #{moe_encoder_transformer.1} parent=1 // pred_region
      _
    $region29: #{moe_encoder_transformer.1} parent=1 // pred_fallthru
      _
    // Predicated region
    $region30: #{moe_encoder_transformer.1} parent=1 // pred_check
      _
    $region31: #{moe_encoder_transformer.1} parent=1 // pred_check_branch
      %32 = sbr.rel (0) target = $region33
    $region32: #{moe_encoder_transformer.1} parent=1 // pred_region
      _
    $region33: #{moe_encoder_transformer.1} parent=1 // pred_fallthru
      _
    // Predicated region
    $region34: #{moe_encoder_transformer.1} parent=1 // pred_check
      _
    $region35: #{moe_encoder_transformer.1} parent=1 // pred_check_branch
      %34 = sbr.rel (0) target = $region37
    $region36: #{moe_encoder_transformer.1} parent=1 // pred_region
      _
    $region37: #{moe_encoder_transformer.1} parent=1 // pred_fallthru
      _
    // Predicated region
    $region38: #{moe_encoder_transformer.1} parent=1 // pred_check
      _
    $region39: #{moe_encoder_transformer.1} parent=1 // pred_check_branch
      %36 = sbr.rel (0) target = $region41
    $region40: #{moe_encoder_transformer.1} parent=1 // pred_region
      _
    $region41: #{moe_encoder_transformer.1} parent=1 // pred_fallthru
      _
    // Predicated region
    $region42: #{moe_encoder_transformer.1} parent=1 // pred_check
      _
    $region43: #{moe_encoder_transformer.1} parent=1 // pred_check_branch
      %38 = sbr.rel (0) target = $region45
    $region44: #{moe_encoder_transformer.1} parent=1 // pred_region
      _
    $region45: #{moe_encoder_transformer.1} parent=1 // pred_fallthru
      _
    %v40 = vld [vmem:[%s0] sm:$0xff]
    %v41 = vld [vmem:[%s0 + $0x8] sm:$0xff]
    %v42 = vlaneseq
    %v43 = vand.u32 %v42, 127
    %44 = vset.pattern.permute.xlu0 0
    %45 = vperm.xlu0 %44, %v40
    %v46 = vpop.permute.xlu0 %45
    %47 = vset.pattern.permute.xlu0 0
    %48 = vperm.xlu0 %47, %v41
    %v49 = vpop.permute.xlu0 %48
    %vm50 = vcmp.eq.s32.totalorder %v46, %v43
    %vm51 = vcmp.eq.s32.totalorder %v49, %v43
    %v52 = vsel %vm50, 1.0, 0.0
    %v53 = vsel %vm51, 1.0, 0.0
    %v54 = vpack.c.bf16 %v53, %v52
    %v55 = vld [vmem:[%s1] sm:$0xf]
    %v56 = vld [vmem:[%s1 + $0x4] sm:$0xf]
    %v57 = vld [vmem:[%s1 + $0x8] sm:$0xf]
    %v58 = vld [vmem:[%s1 + $0xc] sm:$0xf]
    %v63 = vunpack.c.l.b16 %v55
    %v64 = vunpack.c.l.b16 %v56
    %v65 = vunpack.c.l.b16 %v57
    %v66 = vunpack.c.l.b16 %v58
    %v67 = vpack.c.b16 %v64, %v63
    %v68 = vpack.c.b16 %v66, %v65
    %vm71 = vcmask 261120
    %v73 = vsel %vm71, %v54, 0
    %75 = vmatprep.subr.bf16.mxu0 0
    %76 = vmatpush1.bf16.msra.mxu0 %v67
    %77 = vmatprep.subr.bf16.mxu0 0
    %78 = vmatpush1.bf16.msra.mxu0 %v68
    %79 = vmatprep.subr.bf16.mxu0 0
    %80 = vmatpush1.bf16.msra.mxu0 0
    %81 = vmatprep.subr.bf16.mxu0 0
    %82 = vmatpush1.bf16.msra.mxu0 0
    %83 = vmatprep.subr.bf16.mxu0 0
    %84 = vmatpush1.bf16.msra.mxu0 0
    %85 = vmatprep.subr.bf16.mxu0 0
    %86 = vmatpush1.bf16.msra.mxu0 0
    %87 = vmatprep.subr.bf16.mxu0 0
    %88 = vmatpush1.bf16.msra.mxu0 0
    %89 = vmatprep.subr.bf16.mxu0 0
    %90 = vmatpush1.bf16.msra.mxu0 0
    %91 = vmatprep.subr.bf16.mxu0 0
    %92 = vmatpush1.bf16.msra.mxu0 0
    %93 = vmatprep.subr.bf16.mxu0 0
    %94 = vmatpush1.bf16.msra.mxu0 0
    %95 = vmatprep.subr.bf16.mxu0 0
    %96 = vmatpush1.bf16.msra.mxu0 0
    %97 = vmatprep.subr.bf16.mxu0 0
    %98 = vmatpush1.bf16.msra.mxu0 0
    %99 = vmatprep.subr.bf16.mxu0 0
    %100 = vmatpush1.bf16.msra.mxu0 0
    %101 = vmatprep.subr.bf16.mxu0 0
    %102 = vmatpush1.bf16.msra.mxu0 0
    %103 = vmatprep.subr.bf16.mxu0 0
    %104 = vmatpush1.bf16.msra.mxu0 0
    %105 = vmatprep.subr.bf16.mxu0 0
    %106 = vmatpush1.bf16.msra.mxu0 0
    %107 = vmatprep.mubr.bf16.mxu0 0
    %108 = vmatmul.mubr.bf16.gmra.mrb[0].mxu0 %v73
    %v109 = vpop.f32.mrb[0].mxu0
    %v110 = vadd.f32 0.0, %v109
    %v111 = vpop.f32.mrb[0].mxu0
    %v112 = vpop.f32.mrb[0].mxu0
    %v113 = vadd.f32 0.0, %v112
    %v114 = vpop.f32.mrb[0].mxu0
    %115 = vdwg.mxu0
    %v116 = vld [vmem:[%s2] sm:$0xff]
    %v117 = vadd.f32 %v110, %v116
    %v118 = vadd.f32 %v113, %v116
    %v119 = vld [vmem:[%s3] sm:$0x1]
    %v120 = vmul.f32 %v117, %v117
    %v121 = vmul.f32 %v118, %v118
    %v122 = vsel %vm71, %v120, 0.0
    %123 = vadd.xlane.f32.xlu0 %v122
    %v124 = vpop.xlane.xlu0 %123
    %v125 = vsel %vm71, %v121, 0.0
    %126 = vadd.xlane.f32.xlu0 %v125
    %v127 = vpop.xlane.xlu0 %126
    %v128 = vrcp.pop 32.0
    %v129 = vmul.f32 %v124, %v128
    %v130 = vmul.f32 %v127, %v128
    %v131 = vadd.f32 %v129, 1e-06
    %v132 = vadd.f32 %v130, 1e-06
    %v133 = vrsqrt.pop %v131
    %v134 = vrsqrt.pop %v132
    %v135 = vmul.f32 %v117, %v133
    %v136 = vmul.f32 %v118, %v134
    %v137 = vlaneseq
    %v138 = vshrl.u32 %v137, 7
    %v139 = vsub.s32 0, %v138
    %v140 = vrot.slane %v119, %v139
    %v141 = vmul.f32 %v135, %v140
    %v142 = vmul.f32 %v136, %v140
    %v143 = vpack.c.bf16 %v142, %v141
    %v144 = vld [vmem:[%s4] sm:$0xf]
    %v145 = vld [vmem:[%s4 + $0x4] sm:$0xf]
    %v146 = vld [vmem:[%s4 + $0x8] sm:$0xf]
    %v147 = vld [vmem:[%s4 + $0xc] sm:$0xf]
    %v152 = vunpack.c.l.b16 %v144
    %v153 = vunpack.c.l.b16 %v145
    %v154 = vunpack.c.l.b16 %v146
    %v155 = vunpack.c.l.b16 %v147
    %v156 = vpack.c.b16 %v153, %v152
    %v157 = vpack.c.b16 %v155, %v154
    %v161 = vsel %vm71, %v143, 0
    %163 = vmatprep.subr.bf16.mxu0 0
    %164 = vmatpush1.bf16.msra.mxu0 %v156
    %165 = vmatprep.subr.bf16.mxu0 0
    %166 = vmatpush1.bf16.msra.mxu0 %v157
    %167 = vmatprep.subr.bf16.mxu0 0
    %168 = vmatpush1.bf16.msra.mxu0 0
    %169 = vmatprep.subr.bf16.mxu0 0
    %170 = vmatpush1.bf16.msra.mxu0 0
    %171 = vmatprep.subr.bf16.mxu0 0
    %172 = vmatpush1.bf16.msra.mxu0 0
    %173 = vmatprep.subr.bf16.mxu0 0
    %174 = vmatpush1.bf16.msra.mxu0 0
    %175 = vmatprep.subr.bf16.mxu0 0
    %176 = vmatpush1.bf16.msra.mxu0 0
    %177 = vmatprep.subr.bf16.mxu0 0
    %178 = vmatpush1.bf16.msra.mxu0 0
    %179 = vmatprep.subr.bf16.mxu0 0
    %180 = vmatpush1.bf16.msra.mxu0 0
    %181 = vmatprep.subr.bf16.mxu0 0
    %182 = vmatpush1.bf16.msra.mxu0 0
    %183 = vmatprep.subr.bf16.mxu0 0
    %184 = vmatpush1.bf16.msra.mxu0 0
    %185 = vmatprep.subr.bf16.mxu0 0
    %186 = vmatpush1.bf16.msra.mxu0 0
    %187 = vmatprep.subr.bf16.mxu0 0
    %188 = vmatpush1.bf16.msra.mxu0 0
    %189 = vmatprep.subr.bf16.mxu0 0
    %190 = vmatpush1.bf16.msra.mxu0 0
    %191 = vmatprep.subr.bf16.mxu0 0
    %192 = vmatpush1.bf16.msra.mxu0 0
    %193 = vmatprep.subr.bf16.mxu0 0
    %194 = vmatpush1.bf16.msra.mxu0 0
    %195 = vmatprep.mubr.bf16.mxu0 0
    %196 = vmatmul.mubr.bf16.gmra.mrb[0].mxu0 %v161
    %v197 = vpop.f32.mrb[0].mxu0
    %v198 = vadd.f32 0.0, %v197
    %v199 = vpop.f32.mrb[0].mxu0
    %v200 = vpop.f32.mrb[0].mxu0
    %v201 = vadd.f32 0.0, %v200
    %v202 = vpop.f32.mrb[0].mxu0
    %203 = vdwg.mxu0
    %v204 = vpack.c.bf16 %v198, %v198
    %v205 = vpack.c.bf16 %v201, %v201
    %207 = vrot.lane.b32.xlu0 %v204, 96
    %v208 = vpop.permute.xlu0 %207
    %vm209 = vcmask 64512
    %v211 = vsel %vm209, %v204, 0
    %v214 = vsel %vm209, %v208, 0
    %216 = vmatprep.subr.bf16.mxu0 0
    %217 = vmatpush1.bf16.xpose.msra.mxu0 %v214
    %218 = vmatprep.subr.bf16.mxu0 0
    %219 = vmatpush1.bf16.xpose.msra.mxu0 0
    %220 = vmatprep.subr.bf16.mxu0 0
    %221 = vmatpush1.bf16.xpose.msra.mxu0 0
    %222 = vmatprep.subr.bf16.mxu0 0
    %223 = vmatpush1.bf16.xpose.msra.mxu0 0
    %224 = vmatprep.subr.bf16.mxu0 0
    %225 = vmatpush1.bf16.xpose.msra.mxu0 0
    %226 = vmatprep.subr.bf16.mxu0 0
    %227 = vmatpush1.bf16.xpose.msra.mxu0 0
    %228 = vmatprep.subr.bf16.mxu0 0
    %229 = vmatpush1.bf16.xpose.msra.mxu0 0
    %230 = vmatprep.subr.bf16.mxu0 0
    %231 = vmatpush1.bf16.xpose.msra.mxu0 0
    %232 = vmatprep.subr.bf16.mxu0 0
    %233 = vmatpush1.bf16.xpose.msra.mxu0 0
    %234 = vmatprep.subr.bf16.mxu0 0
    %235 = vmatpush1.bf16.xpose.msra.mxu0 0
    %236 = vmatprep.subr.bf16.mxu0 0
    %237 = vmatpush1.bf16.xpose.msra.mxu0 0
    %238 = vmatprep.subr.bf16.mxu0 0
    %239 = vmatpush1.bf16.xpose.msra.mxu0 0
    %240 = vmatprep.subr.bf16.mxu0 0
    %241 = vmatpush1.bf16.xpose.msra.mxu0 0
    %242 = vmatprep.subr.bf16.mxu0 0
    %243 = vmatpush1.bf16.xpose.msra.mxu0 0
    %244 = vmatprep.subr.bf16.mxu0 0
    %245 = vmatpush1.bf16.xpose.msra.mxu0 0
    %246 = vmatprep.subr.bf16.mxu0 0
    %247 = vmatpush1.bf16.xpose.msra.mxu0 0
    %248 = vmatprep.mubr.bf16.mxu0 0
    %249 = vmatmul.mubr.bf16.gmra.mrb[0].mxu0 %v211
    %v250 = vpop.f32.mrb[0].mxu0
    %v251 = vadd.f32 0.0, %v250
    %v252 = vpop.f32.mrb[0].mxu0
    %v253 = vpop.f32.mrb[0].mxu0
    %v254 = vpop.f32.mrb[0].mxu0
    %255 = vdwg.mxu0
    %257 = vrot.lane.b32.xlu0 %v205, 96
    %v258 = vpop.permute.xlu0 %257
    %v260 = vsel %vm209, %v205, 0
    %v263 = vsel %vm209, %v258, 0
    %265 = vmatprep.subr.bf16.mxu0 0
    %266 = vmatpush1.bf16.xpose.msra.mxu0 %v263
    %267 = vmatprep.subr.bf16.mxu0 0
    %268 = vmatpush1.bf16.xpose.msra.mxu0 0
    %269 = vmatprep.subr.bf16.mxu0 0
    %270 = vmatpush1.bf16.xpose.msra.mxu0 0
    %271 = vmatprep.subr.bf16.mxu0 0
    %272 = vmatpush1.bf16.xpose.msra.mxu0 0
    %273 = vmatprep.subr.bf16.mxu0 0
    %274 = vmatpush1.bf16.xpose.msra.mxu0 0
    %275 = vmatprep.subr.bf16.mxu0 0
    %276 = vmatpush1.bf16.xpose.msra.mxu0 0
    %277 = vmatprep.subr.bf16.mxu0 0
    %278 = vmatpush1.bf16.xpose.msra.mxu0 0
    %279 = vmatprep.subr.bf16.mxu0 0
    %280 = vmatpush1.bf16.xpose.msra.mxu0 0
    %281 = vmatprep.subr.bf16.mxu0 0
    %282 = vmatpush1.bf16.xpose.msra.mxu0 0
    %283 = vmatprep.subr.bf16.mxu0 0
    %284 = vmatpush1.bf16.xpose.msra.mxu0 0
    %285 = vmatprep.subr.bf16.mxu0 0
    %286 = vmatpush1.bf16.xpose.msra.mxu0 0
    %287 = vmatprep.subr.bf16.mxu0 0
    %288 = vmatpush1.bf16.xpose.msra.mxu0 0
    %289 = vmatprep.subr.bf16.mxu0 0
    %290 = vmatpush1.bf16.xpose.msra.mxu0 0
    %291 = vmatprep.subr.bf16.mxu0 0
    %292 = vmatpush1.bf16.xpose.msra.mxu0 0
    %293 = vmatprep.subr.bf16.mxu0 0
    %294 = vmatpush1.bf16.xpose.msra.mxu0 0
    %295 = vmatprep.subr.bf16.mxu0 0
    %296 = vmatpush1.bf16.xpose.msra.mxu0 0
    %297 = vmatprep.mubr.bf16.mxu0 0
    %298 = vmatmul.mubr.bf16.gmra.mrb[0].mxu0 %v260
    %v299 = vpop.f32.mrb[0].mxu0
    %v300 = vadd.f32 0.0, %v299
    %v301 = vpop.f32.mrb[0].mxu0
    %v302 = vpop.f32.mrb[0].mxu0
    %v303 = vpop.f32.mrb[0].mxu0
    %304 = vdwg.mxu0
    %v305 = vmul.f32 %v251, 0.35355338
    %v306 = vmul.f32 %v300, 0.35355338
    %v307 = vsel %vm209, %v305, -inf
    %308 = vmax.xlane.f32.xlu0 %v307
    %v309 = vpop.xlane.xlu0 %308
    %v310 = vsel %vm209, %v306, -inf
    %311 = vmax.xlane.f32.xlu0 %v310
    %v312 = vpop.xlane.xlu0 %311
    %v313 = vsub.f32 %v305, %v309
    %v314 = vsub.f32 %v306, %v312
    %v315 = vmul.f32 %v313, 1.442695
    %v316 = vpow.pop %v315
    %v317 = vmul.f32 %v314, 1.442695
    %v318 = vpow.pop %v317
    %v319 = vsel %vm209, %v316, 0.0
    %320 = vadd.xlane.f32.xlu0 %v319
    %v321 = vpop.xlane.xlu0 %320
    %v322 = vsel %vm209, %v318, 0.0
    %323 = vadd.xlane.f32.xlu0 %v322
    %v324 = vpop.xlane.xlu0 %323
    %v325 = vrcp.pop %v321
    %v326 = vmul.f32 %v316, %v325
    %v327 = vrcp.pop %v324
    %v328 = vmul.f32 %v318, %v327
    %v329 = vpack.c.bf16 %v326, %v326
    %v330 = vpack.c.bf16 %v328, %v328
    %331 = vrot.lane.b32.xlu0 %v204, 64
    %v332 = vpop.permute.xlu0 %331
    %v334 = vsel %vm209, %v329, 0
    %vm336 = vcmask 1043456
    %v338 = vsel %vm336, %v332, 0
    %340 = vmatprep.subr.bf16.mxu0 0
    %341 = vmatpush1.bf16.msra.mxu0 %v338
    %342 = vmatprep.subr.bf16.mxu0 0
    %343 = vmatpush1.bf16.msra.mxu0 0
    %344 = vmatprep.subr.bf16.mxu0 0
    %345 = vmatpush1.bf16.msra.mxu0 0
    %346 = vmatprep.subr.bf16.mxu0 0
    %347 = vmatpush1.bf16.msra.mxu0 0
    %348 = vmatprep.subr.bf16.mxu0 0
    %349 = vmatpush1.bf16.msra.mxu0 0
    %350 = vmatprep.subr.bf16.mxu0 0
    %351 = vmatpush1.bf16.msra.mxu0 0
    %352 = vmatprep.subr.bf16.mxu0 0
    %353 = vmatpush1.bf16.msra.mxu0 0
    %354 = vmatprep.subr.bf16.mxu0 0
    %355 = vmatpush1.bf16.msra.mxu0 0
    %356 = vmatprep.subr.bf16.mxu0 0
    %357 = vmatpush1.bf16.msra.mxu0 0
    %358 = vmatprep.subr.bf16.mxu0 0
    %359 = vmatpush1.bf16.msra.mxu0 0
    %360 = vmatprep.subr.bf16.mxu0 0
    %361 = vmatpush1.bf16.msra.mxu0 0
    %362 = vmatprep.subr.bf16.mxu0 0
    %363 = vmatpush1.bf16.msra.mxu0 0
    %364 = vmatprep.subr.bf16.mxu0 0
    %365 = vmatpush1.bf16.msra.mxu0 0
    %366 = vmatprep.subr.bf16.mxu0 0
    %367 = vmatpush1.bf16.msra.mxu0 0
    %368 = vmatprep.subr.bf16.mxu0 0
    %369 = vmatpush1.bf16.msra.mxu0 0
    %370 = vmatprep.subr.bf16.mxu0 0
    %371 = vmatpush1.bf16.msra.mxu0 0
    %372 = vmatprep.mubr.bf16.mxu0 0
    %373 = vmatmul.mubr.bf16.gmra.mrb[0].mxu0 %v334
    %v374 = vpop.f32.mrb[0].mxu0
    %v375 = vadd.f32 0.0, %v374
    %v376 = vpop.f32.mrb[0].mxu0
    %v377 = vpop.f32.mrb[0].mxu0
    %v378 = vpop.f32.mrb[0].mxu0
    %379 = vdwg.mxu0
    %380 = vrot.lane.b32.xlu0 %v205, 64
    %v381 = vpop.permute.xlu0 %380
    %v383 = vsel %vm209, %v330, 0
    %v386 = vsel %vm336, %v381, 0
    %388 = vmatprep.subr.bf16.mxu0 0
    %389 = vmatpush1.bf16.msra.mxu0 %v386
    %390 = vmatprep.subr.bf16.mxu0 0
    %391 = vmatpush1.bf16.msra.mxu0 0
    %392 = vmatprep.subr.bf16.mxu0 0
    %393 = vmatpush1.bf16.msra.mxu0 0
    %394 = vmatprep.subr.bf16.mxu0 0
    %395 = vmatpush1.bf16.msra.mxu0 0
    %396 = vmatprep.subr.bf16.mxu0 0
    %397 = vmatpush1.bf16.msra.mxu0 0
    %398 = vmatprep.subr.bf16.mxu0 0
    %399 = vmatpush1.bf16.msra.mxu0 0
    %400 = vmatprep.subr.bf16.mxu0 0
    %401 = vmatpush1.bf16.msra.mxu0 0
    %402 = vmatprep.subr.bf16.mxu0 0
    %403 = vmatpush1.bf16.msra.mxu0 0
    %404 = vmatprep.subr.bf16.mxu0 0
    %405 = vmatpush1.bf16.msra.mxu0 0
    %406 = vmatprep.subr.bf16.mxu0 0
    %407 = vmatpush1.bf16.msra.mxu0 0
    %408 = vmatprep.subr.bf16.mxu0 0
    %409 = vmatpush1.bf16.msra.mxu0 0
    %410 = vmatprep.subr.bf16.mxu0 0
    %411 = vmatpush1.bf16.msra.mxu0 0
    %412 = vmatprep.subr.bf16.mxu0 0
    %413 = vmatpush1.bf16.msra.mxu0 0
    %414 = vmatprep.subr.bf16.mxu0 0
    %415 = vmatpush1.bf16.msra.mxu0 0
    %416 = vmatprep.subr.bf16.mxu0 0
    %417 = vmatpush1.bf16.msra.mxu0 0
    %418 = vmatprep.subr.bf16.mxu0 0
    %419 = vmatpush1.bf16.msra.mxu0 0
    %420 = vmatprep.mubr.bf16.mxu0 0
    %421 = vmatmul.mubr.bf16.gmra.mrb[0].mxu0 %v383
    %v422 = vpop.f32.mrb[0].mxu0
    %v423 = vadd.f32 0.0, %v422
    %v424 = vpop.f32.mrb[0].mxu0
    %v425 = vpop.f32.mrb[0].mxu0
    %v426 = vpop.f32.mrb[0].mxu0
    %427 = vdwg.mxu0
    %428 = vrot.lane.b32.xlu0 %v204, 120
    %v429 = vpop.permute.xlu0 %428
    %430 = vrot.lane.b32.xlu0 %v204, 88
    %v431 = vpop.permute.xlu0 %430
    %v433 = vsel %vm209, %v429, 0
    %v436 = vsel %vm209, %v431, 0
    %438 = vmatprep.subr.bf16.mxu0 0
    %439 = vmatpush1.bf16.xpose.msra.mxu0 %v436
    %440 = vmatprep.subr.bf16.mxu0 0
    %441 = vmatpush1.bf16.xpose.msra.mxu0 0
    %442 = vmatprep.subr.bf16.mxu0 0
    %443 = vmatpush1.bf16.xpose.msra.mxu0 0
    %444 = vmatprep.subr.bf16.mxu0 0
    %445 = vmatpush1.bf16.xpose.msra.mxu0 0
    %446 = vmatprep.subr.bf16.mxu0 0
    %447 = vmatpush1.bf16.xpose.msra.mxu0 0
    %448 = vmatprep.subr.bf16.mxu0 0
    %449 = vmatpush1.bf16.xpose.msra.mxu0 0
    %450 = vmatprep.subr.bf16.mxu0 0
    %451 = vmatpush1.bf16.xpose.msra.mxu0 0
    %452 = vmatprep.subr.bf16.mxu0 0
    %453 = vmatpush1.bf16.xpose.msra.mxu0 0
    %454 = vmatprep.subr.bf16.mxu0 0
    %455 = vmatpush1.bf16.xpose.msra.mxu0 0
    %456 = vmatprep.subr.bf16.mxu0 0
    %457 = vmatpush1.bf16.xpose.msra.mxu0 0
    %458 = vmatprep.subr.bf16.mxu0 0
    %459 = vmatpush1.bf16.xpose.msra.mxu0 0
    %460 = vmatprep.subr.bf16.mxu0 0
    %461 = vmatpush1.bf16.xpose.msra.mxu0 0
    %462 = vmatprep.subr.bf16.mxu0 0
    %463 = vmatpush1.bf16.xpose.msra.mxu0 0
    %464 = vmatprep.subr.bf16.mxu0 0
    %465 = vmatpush1.bf16.xpose.msra.mxu0 0
    %466 = vmatprep.subr.bf16.mxu0 0
    %467 = vmatpush1.bf16.xpose.msra.mxu0 0
    %468 = vmatprep.subr.bf16.mxu0 0
    %469 = vmatpush1.bf16.xpose.msra.mxu0 0
    %470 = vmatprep.mubr.bf16.mxu0 0
    %471 = vmatmul.mubr.bf16.gmra.mrb[0].mxu0 %v433
    %v472 = vpop.f32.mrb[0].mxu0
    %v473 = vadd.f32 0.0, %v472
    %v474 = vpop.f32.mrb[0].mxu0
    %v475 = vpop.f32.mrb[0].mxu0
    %v476 = vpop.f32.mrb[0].mxu0
    %477 = vdwg.mxu0
    %478 = vrot.lane.b32.xlu0 %v205, 120
    %v479 = vpop.permute.xlu0 %478
    %480 = vrot.lane.b32.xlu0 %v205, 88
    %v481 = vpop.permute.xlu0 %480
    %v483 = vsel %vm209, %v479, 0
    %v486 = vsel %vm209, %v481, 0
    %488 = vmatprep.subr.bf16.mxu0 0
    %489 = vmatpush1.bf16.xpose.msra.mxu0 %v486
    %490 = vmatprep.subr.bf16.mxu0 0
    %491 = vmatpush1.bf16.xpose.msra.mxu0 0
    %492 = vmatprep.subr.bf16.mxu0 0
    %493 = vmatpush1.bf16.xpose.msra.mxu0 0
    %494 = vmatprep.subr.bf16.mxu0 0
    %495 = vmatpush1.bf16.xpose.msra.mxu0 0
    %496 = vmatprep.subr.bf16.mxu0 0
    %497 = vmatpush1.bf16.xpose.msra.mxu0 0
    %498 = vmatprep.subr.bf16.mxu0 0
    %499 = vmatpush1.bf16.xpose.msra.mxu0 0
    %500 = vmatprep.subr.bf16.mxu0 0
    %501 = vmatpush1.bf16.xpose.msra.mxu0 0
    %502 = vmatprep.subr.bf16.mxu0 0
    %503 = vmatpush1.bf16.xpose.msra.mxu0 0
    %504 = vmatprep.subr.bf16.mxu0 0
    %505 = vmatpush1.bf16.xpose.msra.mxu0 0
    %506 = vmatprep.subr.bf16.mxu0 0
    %507 = vmatpush1.bf16.xpose.msra.mxu0 0
    %508 = vmatprep.subr.bf16.mxu0 0
    %509 = vmatpush1.bf16.xpose.msra.mxu0 0
    %510 = vmatprep.subr.bf16.mxu0 0
    %511 = vmatpush1.bf16.xpose.msra.mxu0 0
    %512 = vmatprep.subr.bf16.mxu0 0
    %513 = vmatpush1.bf16.xpose.msra.mxu0 0
    %514 = vmatprep.subr.bf16.mxu0 0
    %515 = vmatpush1.bf16.xpose.msra.mxu0 0
    %516 = vmatprep.subr.bf16.mxu0 0
    %517 = vmatpush1.bf16.xpose.msra.mxu0 0
    %518 = vmatprep.subr.bf16.mxu0 0
    %519 = vmatpush1.bf16.xpose.msra.mxu0 0
    %520 = vmatprep.mubr.bf16.mxu0 0
    %521 = vmatmul.mubr.bf16.gmra.mrb[0].mxu0 %v483
    %v522 = vpop.f32.mrb[0].mxu0
    %v523 = vadd.f32 0.0, %v522
    %v524 = vpop.f32.mrb[0].mxu0
    %v525 = vpop.f32.mrb[0].mxu0
    %v526 = vpop.f32.mrb[0].mxu0
    %527 = vdwg.mxu0
    %v528 = vmul.f32 %v473, 0.35355338
    %v529 = vmul.f32 %v523, 0.35355338
    %v530 = vsel %vm209, %v528, -inf
    %531 = vmax.xlane.f32.xlu0 %v530
    %v532 = vpop.xlane.xlu0 %531
    %v533 = vsel %vm209, %v529, -inf
    %534 = vmax.xlane.f32.xlu0 %v533
    %v535 = vpop.xlane.xlu0 %534
    %v536 = vsub.f32 %v528, %v532
    %v537 = vsub.f32 %v529, %v535
    %v538 = vmul.f32 %v536, 1.442695
    %v539 = vpow.pop %v538
    %v540 = vmul.f32 %v537, 1.442695
    %v541 = vpow.pop %v540
    %v542 = vsel %vm209, %v539, 0.0
    %543 = vadd.xlane.f32.xlu0 %v542
    %v544 = vpop.xlane.xlu0 %543
    %v545 = vsel %vm209, %v541, 0.0
    %546 = vadd.xlane.f32.xlu0 %v545
    %v547 = vpop.xlane.xlu0 %546
    %v548 = vrcp.pop %v544
    %v549 = vmul.f32 %v539, %v548
    %v550 = vrcp.pop %v547
    %v551 = vmul.f32 %v541, %v550
    %v552 = vpack.c.bf16 %v549, %v549
    %v553 = vpack.c.bf16 %v551, %v551
    %554 = vrot.lane.b32.xlu0 %v204, 56
    %v555 = vpop.permute.xlu0 %554
    %v557 = vsel %vm209, %v552, 0
    %v560 = vsel %vm336, %v555, 0
    %562 = vmatprep.subr.bf16.mxu0 0
    %563 = vmatpush1.bf16.msra.mxu0 %v560
    %564 = vmatprep.subr.bf16.mxu0 0
    %565 = vmatpush1.bf16.msra.mxu0 0
    %566 = vmatprep.subr.bf16.mxu0 0
    %567 = vmatpush1.bf16.msra.mxu0 0
    %568 = vmatprep.subr.bf16.mxu0 0
    %569 = vmatpush1.bf16.msra.mxu0 0
    %570 = vmatprep.subr.bf16.mxu0 0
    %571 = vmatpush1.bf16.msra.mxu0 0
    %572 = vmatprep.subr.bf16.mxu0 0
    %573 = vmatpush1.bf16.msra.mxu0 0
    %574 = vmatprep.subr.bf16.mxu0 0
    %575 = vmatpush1.bf16.msra.mxu0 0
    %576 = vmatprep.subr.bf16.mxu0 0
    %577 = vmatpush1.bf16.msra.mxu0 0
    %578 = vmatprep.subr.bf16.mxu0 0
    %579 = vmatpush1.bf16.msra.mxu0 0
    %580 = vmatprep.subr.bf16.mxu0 0
    %581 = vmatpush1.bf16.msra.mxu0 0
    %582 = vmatprep.subr.bf16.mxu0 0
    %583 = vmatpush1.bf16.msra.mxu0 0
    %584 = vmatprep.subr.bf16.mxu0 0
    %585 = vmatpush1.bf16.msra.mxu0 0
    %586 = vmatprep.subr.bf16.mxu0 0
    %587 = vmatpush1.bf16.msra.mxu0 0
    %588 = vmatprep.subr.bf16.mxu0 0
    %589 = vmatpush1.bf16.msra.mxu0 0
    %590 = vmatprep.subr.bf16.mxu0 0
    %591 = vmatpush1.bf16.msra.mxu0 0
    %592 = vmatprep.subr.bf16.mxu0 0
    %593 = vmatpush1.bf16.msra.mxu0 0
    %594 = vmatprep.mubr.bf16.mxu0 0
    %595 = vmatmul.mubr.bf16.gmra.mrb[0].mxu0 %v557
    %v596 = vpop.f32.mrb[0].mxu0
    %v597 = vadd.f32 0.0, %v596
    %v598 = vpop.f32.mrb[0].mxu0
    %v599 = vpop.f32.mrb[0].mxu0
    %v600 = vpop.f32.mrb[0].mxu0
    %601 = vdwg.mxu0
    %602 = vrot.lane.b32.xlu0 %v205, 56
    %v603 = vpop.permute.xlu0 %602
    %v605 = vsel %vm209, %v553, 0
    %v608 = vsel %vm336, %v603, 0
    %610 = vmatprep.subr.bf16.mxu0 0
    %611 = vmatpush1.bf16.msra.mxu0 %v608
    %612 = vmatprep.subr.bf16.mxu0 0
    %613 = vmatpush1.bf16.msra.mxu0 0
    %614 = vmatprep.subr.bf16.mxu0 0
    %615 = vmatpush1.bf16.msra.mxu0 0
    %616 = vmatprep.subr.bf16.mxu0 0
    %617 = vmatpush1.bf16.msra.mxu0 0
    %618 = vmatprep.subr.bf16.mxu0 0
    %619 = vmatpush1.bf16.msra.mxu0 0
    %620 = vmatprep.subr.bf16.mxu0 0
    %621 = vmatpush1.bf16.msra.mxu0 0
    %622 = vmatprep.subr.bf16.mxu0 0
    %623 = vmatpush1.bf16.msra.mxu0 0
    %624 = vmatprep.subr.bf16.mxu0 0
    %625 = vmatpush1.bf16.msra.mxu0 0
    %626 = vmatprep.subr.bf16.mxu0 0
    %627 = vmatpush1.bf16.msra.mxu0 0
    %628 = vmatprep.subr.bf16.mxu0 0
    %629 = vmatpush1.bf16.msra.mxu0 0
    %630 = vmatprep.subr.bf16.mxu0 0
    %631 = vmatpush1.bf16.msra.mxu0 0
    %632 = vmatprep.subr.bf16.mxu0 0
    %633 = vmatpush1.bf16.msra.mxu0 0
    %634 = vmatprep.subr.bf16.mxu0 0
    %635 = vmatpush1.bf16.msra.mxu0 0
    %636 = vmatprep.subr.bf16.mxu0 0
    %637 = vmatpush1.bf16.msra.mxu0 0
    %638 = vmatprep.subr.bf16.mxu0 0
    %639 = vmatpush1.bf16.msra.mxu0 0
    %640 = vmatprep.subr.bf16.mxu0 0
    %641 = vmatpush1.bf16.msra.mxu0 0
    %642 = vmatprep.mubr.bf16.mxu0 0
    %643 = vmatmul.mubr.bf16.gmra.mrb[0].mxu0 %v605
    %v644 = vpop.f32.mrb[0].mxu0
    %v645 = vadd.f32 0.0, %v644
    %v646 = vpop.f32.mrb[0].mxu0
    %v647 = vpop.f32.mrb[0].mxu0
    %v648 = vpop.f32.mrb[0].mxu0
    %649 = vdwg.mxu0
    %650 = vrot.lane.b32.xlu0 %v204, 112
    %v651 = vpop.permute.xlu0 %650
    %652 = vrot.lane.b32.xlu0 %v204, 80
    %v653 = vpop.permute.xlu0 %652
    %v655 = vsel %vm209, %v651, 0
    %v658 = vsel %vm209, %v653, 0
    %660 = vmatprep.subr.bf16.mxu0 0
    %661 = vmatpush1.bf16.xpose.msra.mxu0 %v658
    %662 = vmatprep.subr.bf16.mxu0 0
    %663 = vmatpush1.bf16.xpose.msra.mxu0 0
    %664 = vmatprep.subr.bf16.mxu0 0
    %665 = vmatpush1.bf16.xpose.msra.mxu0 0
    %666 = vmatprep.subr.bf16.mxu0 0
    %667 = vmatpush1.bf16.xpose.msra.mxu0 0
    %668 = vmatprep.subr.bf16.mxu0 0
    %669 = vmatpush1.bf16.xpose.msra.mxu0 0
    %670 = vmatprep.subr.bf16.mxu0 0
    %671 = vmatpush1.bf16.xpose.msra.mxu0 0
    %672 = vmatprep.subr.bf16.mxu0 0
    %673 = vmatpush1.bf16.xpose.msra.mxu0 0
    %674 = vmatprep.subr.bf16.mxu0 0
    %675 = vmatpush1.bf16.xpose.msra.mxu0 0
    %676 = vmatprep.subr.bf16.mxu0 0
    %677 = vmatpush1.bf16.xpose.msra.mxu0 0
    %678 = vmatprep.subr.bf16.mxu0 0
    %679 = vmatpush1.bf16.xpose.msra.mxu0 0
    %680 = vmatprep.subr.bf16.mxu0 0
    %681 = vmatpush1.bf16.xpose.msra.mxu0 0
    %682 = vmatprep.subr.bf16.mxu0 0
    %683 = vmatpush1.bf16.xpose.msra.mxu0 0
    %684 = vmatprep.subr.bf16.mxu0 0
    %685 = vmatpush1.bf16.xpose.msra.mxu0 0
    %686 = vmatprep.subr.bf16.mxu0 0
    %687 = vmatpush1.bf16.xpose.msra.mxu0 0
    %688 = vmatprep.subr.bf16.mxu0 0
    %689 = vmatpush1.bf16.xpose.msra.mxu0 0
    %690 = vmatprep.subr.bf16.mxu0 0
    %691 = vmatpush1.bf16.xpose.msra.mxu0 0
    %692 = vmatprep.mubr.bf16.mxu0 0
    %693 = vmatmul.mubr.bf16.gmra.mrb[0].mxu0 %v655
    %v694 = vpop.f32.mrb[0].mxu0
    %v695 = vadd.f32 0.0, %v694
    %v696 = vpop.f32.mrb[0].mxu0
    %v697 = vpop.f32.mrb[0].mxu0
    %v698 = vpop.f32.mrb[0].mxu0
    %699 = vdwg.mxu0
    %700 = vrot.lane.b32.xlu0 %v205, 112
    %v701 = vpop.permute.xlu0 %700
    %702 = vrot.lane.b32.xlu0 %v205, 80
    %v703 = vpop.permute.xlu0 %702
    %v705 = vsel %vm209, %v701, 0
    %v708 = vsel %vm209, %v703, 0
    %710 = vmatprep.subr.bf16.mxu0 0
    %711 = vmatpush1.bf16.xpose.msra.mxu0 %v708
    %712 = vmatprep.subr.bf16.mxu0 0
    %713 = vmatpush1.bf16.xpose.msra.mxu0 0
    %714 = vmatprep.subr.bf16.mxu0 0
    %715 = vmatpush1.bf16.xpose.msra.mxu0 0
    %716 = vmatprep.subr.bf16.mxu0 0
    %717 = vmatpush1.bf16.xpose.msra.mxu0 0
    %718 = vmatprep.subr.bf16.mxu0 0
    %719 = vmatpush1.bf16.xpose.msra.mxu0 0
    %720 = vmatprep.subr.bf16.mxu0 0
    %721 = vmatpush1.bf16.xpose.msra.mxu0 0
    %722 = vmatprep.subr.bf16.mxu0 0
    %723 = vmatpush1.bf16.xpose.msra.mxu0 0
    %724 = vmatprep.subr.bf16.mxu0 0
    %725 = vmatpush1.bf16.xpose.msra.mxu0 0
    %726 = vmatprep.subr.bf16.mxu0 0
    %727 = vmatpush1.bf16.xpose.msra.mxu0 0
    %728 = vmatprep.subr.bf16.mxu0 0
    %729 = vmatpush1.bf16.xpose.msra.mxu0 0
    %730 = vmatprep.subr.bf16.mxu0 0
    %731 = vmatpush1.bf16.xpose.msra.mxu0 0
    %732 = vmatprep.subr.bf16.mxu0 0
    %733 = vmatpush1.bf16.xpose.msra.mxu0 0
    %734 = vmatprep.subr.bf16.mxu0 0
    %735 = vmatpush1.bf16.xpose.msra.mxu0 0
    %736 = vmatprep.subr.bf16.mxu0 0
    %737 = vmatpush1.bf16.xpose.msra.mxu0 0
    %738 = vmatprep.subr.bf16.mxu0 0
    %739 = vmatpush1.bf16.xpose.msra.mxu0 0
    %740 = vmatprep.subr.bf16.mxu0 0
    %741 = vmatpush1.bf16.xpose.msra.mxu0 0
    %742 = vmatprep.mubr.bf16.mxu0 0
    %743 = vmatmul.mubr.bf16.gmra.mrb[0].mxu0 %v705
    %v744 = vpop.f32.mrb[0].mxu0
    %v745 = vadd.f32 0.0, %v744
    %v746 = vpop.f32.mrb[0].mxu0
    %v747 = vpop.f32.mrb[0].mxu0
    %v748 = vpop.f32.mrb[0].mxu0
    %749 = vdwg.mxu0
    %v750 = vmul.f32 %v695, 0.35355338
    %v751 = vmul.f32 %v745, 0.35355338
    %v752 = vsel %vm209, %v750, -inf
    %753 = vmax.xlane.f32.xlu0 %v752
    %v754 = vpop.xlane.xlu0 %753
    %v755 = vsel %vm209, %v751, -inf
    %756 = vmax.xlane.f32.xlu0 %v755
    %v757 = vpop.xlane.xlu0 %756
    %v758 = vsub.f32 %v750, %v754
    %v759 = vsub.f32 %v751, %v757
    %v760 = vmul.f32 %v758, 1.442695
    %v761 = vpow.pop %v760
    %v762 = vmul.f32 %v759, 1.442695
    %v763 = vpow.pop %v762
    %v764 = vsel %vm209, %v761, 0.0
    %765 = vadd.xlane.f32.xlu0 %v764
    %v766 = vpop.xlane.xlu0 %765
    %v767 = vsel %vm209, %v763, 0.0
    %768 = vadd.xlane.f32.xlu0 %v767
    %v769 = vpop.xlane.xlu0 %768
    %v770 = vrcp.pop %v766
    %v771 = vmul.f32 %v761, %v770
    %v772 = vrcp.pop %v769
    %v773 = vmul.f32 %v763, %v772
    %v774 = vpack.c.bf16 %v771, %v771
    %v775 = vpack.c.bf16 %v773, %v773
    %776 = vrot.lane.b32.xlu0 %v204, 48
    %v777 = vpop.permute.xlu0 %776
    %v779 = vsel %vm209, %v774, 0
    %v782 = vsel %vm336, %v777, 0
    %784 = vmatprep.subr.bf16.mxu0 0
    %785 = vmatpush1.bf16.msra.mxu0 %v782
    %786 = vmatprep.subr.bf16.mxu0 0
    %787 = vmatpush1.bf16.msra.mxu0 0
    %788 = vmatprep.subr.bf16.mxu0 0
    %789 = vmatpush1.bf16.msra.mxu0 0
    %790 = vmatprep.subr.bf16.mxu0 0
    %791 = vmatpush1.bf16.msra.mxu0 0
    %792 = vmatprep.subr.bf16.mxu0 0
    %793 = vmatpush1.bf16.msra.mxu0 0
    %794 = vmatprep.subr.bf16.mxu0 0
    %795 = vmatpush1.bf16.msra.mxu0 0
    %796 = vmatprep.subr.bf16.mxu0 0
    %797 = vmatpush1.bf16.msra.mxu0 0
    %798 = vmatprep.subr.bf16.mxu0 0
    %799 = vmatpush1.bf16.msra.mxu0 0
    %800 = vmatprep.subr.bf16.mxu0 0
    %801 = vmatpush1.bf16.msra.mxu0 0
    %802 = vmatprep.subr.bf16.mxu0 0
    %803 = vmatpush1.bf16.msra.mxu0 0
    %804 = vmatprep.subr.bf16.mxu0 0
    %805 = vmatpush1.bf16.msra.mxu0 0
    %806 = vmatprep.subr.bf16.mxu0 0
    %807 = vmatpush1.bf16.msra.mxu0 0
    %808 = vmatprep.subr.bf16.mxu0 0
    %809 = vmatpush1.bf16.msra.mxu0 0
    %810 = vmatprep.subr.bf16.mxu0 0
    %811 = vmatpush1.bf16.msra.mxu0 0
    %812 = vmatprep.subr.bf16.mxu0 0
    %813 = vmatpush1.bf16.msra.mxu0 0
    %814 = vmatprep.subr.bf16.mxu0 0
    %815 = vmatpush1.bf16.msra.mxu0 0
    %816 = vmatprep.mubr.bf16.mxu0 0
    %817 = vmatmul.mubr.bf16.gmra.mrb[0].mxu0 %v779
    %v818 = vpop.f32.mrb[0].mxu0
    %v819 = vadd.f32 0.0, %v818
    %v820 = vpop.f32.mrb[0].mxu0
    %v821 = vpop.f32.mrb[0].mxu0
    %v822 = vpop.f32.mrb[0].mxu0
    %823 = vdwg.mxu0
    %824 = vrot.lane.b32.xlu0 %v205, 48
    %v825 = vpop.permute.xlu0 %824
    %v827 = vsel %vm209, %v775, 0
    %v830 = vsel %vm336, %v825, 0
    %832 = vmatprep.subr.bf16.mxu0 0
    %833 = vmatpush1.bf16.msra.mxu0 %v830
    %834 = vmatprep.subr.bf16.mxu0 0
    %835 = vmatpush1.bf16.msra.mxu0 0
    %836 = vmatprep.subr.bf16.mxu0 0
    %837 = vmatpush1.bf16.msra.mxu0 0
    %838 = vmatprep.subr.bf16.mxu0 0
    %839 = vmatpush1.bf16.msra.mxu0 0
    %840 = vmatprep.subr.bf16.mxu0 0
    %841 = vmatpush1.bf16.msra.mxu0 0
    %842 = vmatprep.subr.bf16.mxu0 0
    %843 = vmatpush1.bf16.msra.mxu0 0
    %844 = vmatprep.subr.bf16.mxu0 0
    %845 = vmatpush1.bf16.msra.mxu0 0
    %846 = vmatprep.subr.bf16.mxu0 0
    %847 = vmatpush1.bf16.msra.mxu0 0
    %848 = vmatprep.subr.bf16.mxu0 0
    %849 = vmatpush1.bf16.msra.mxu0 0
    %850 = vmatprep.subr.bf16.mxu0 0
    %851 = vmatpush1.bf16.msra.mxu0 0
    %852 = vmatprep.subr.bf16.mxu0 0
    %853 = vmatpush1.bf16.msra.mxu0 0
    %854 = vmatprep.subr.bf16.mxu0 0
    %855 = vmatpush1.bf16.msra.mxu0 0
    %856 = vmatprep.subr.bf16.mxu0 0
    %857 = vmatpush1.bf16.msra.mxu0 0
    %858 = vmatprep.subr.bf16.mxu0 0
    %859 = vmatpush1.bf16.msra.mxu0 0
    %860 = vmatprep.subr.bf16.mxu0 0
    %861 = vmatpush1.bf16.msra.mxu0 0
    %862 = vmatprep.subr.bf16.mxu0 0
    %863 = vmatpush1.bf16.msra.mxu0 0
    %864 = vmatprep.mubr.bf16.mxu0 0
    %865 = vmatmul.mubr.bf16.gmra.mrb[0].mxu0 %v827
    %v866 = vpop.f32.mrb[0].mxu0
    %v867 = vadd.f32 0.0, %v866
    %v868 = vpop.f32.mrb[0].mxu0
    %v869 = vpop.f32.mrb[0].mxu0
    %v870 = vpop.f32.mrb[0].mxu0
    %871 = vdwg.mxu0
    %872 = vrot.lane.b32.xlu0 %v204, 104
    %v873 = vpop.permute.xlu0 %872
    %874 = vrot.lane.b32.xlu0 %v204, 72
    %v875 = vpop.permute.xlu0 %874
    %v877 = vsel %vm209, %v873, 0
    %v880 = vsel %vm209, %v875, 0
    %882 = vmatprep.subr.bf16.mxu0 0
    %883 = vmatpush1.bf16.xpose.msra.mxu0 %v880
    %884 = vmatprep.subr.bf16.mxu0 0
    %885 = vmatpush1.bf16.xpose.msra.mxu0 0
    %886 = vmatprep.subr.bf16.mxu0 0
    %887 = vmatpush1.bf16.xpose.msra.mxu0 0
    %888 = vmatprep.subr.bf16.mxu0 0
    %889 = vmatpush1.bf16.xpose.msra.mxu0 0
    %890 = vmatprep.subr.bf16.mxu0 0
    %891 = vmatpush1.bf16.xpose.msra.mxu0 0
    %892 = vmatprep.subr.bf16.mxu0 0
    %893 = vmatpush1.bf16.xpose.msra.mxu0 0
    %894 = vmatprep.subr.bf16.mxu0 0
    %895 = vmatpush1.bf16.xpose.msra.mxu0 0
    %896 = vmatprep.subr.bf16.mxu0 0
    %897 = vmatpush1.bf16.xpose.msra.mxu0 0
    %898 = vmatprep.subr.bf16.mxu0 0
    %899 = vmatpush1.bf16.xpose.msra.mxu0 0
    %900 = vmatprep.subr.bf16.mxu0 0
    %901 = vmatpush1.bf16.xpose.msra.mxu0 0
    %902 = vmatprep.subr.bf16.mxu0 0
    %903 = vmatpush1.bf16.xpose.msra.mxu0 0
    %904 = vmatprep.subr.bf16.mxu0 0
    %905 = vmatpush1.bf16.xpose.msra.mxu0 0
    %906 = vmatprep.subr.bf16.mxu0 0
    %907 = vmatpush1.bf16.xpose.msra.mxu0 0
    %908 = vmatprep.subr.bf16.mxu0 0
    %909 = vmatpush1.bf16.xpose.msra.mxu0 0
    %910 = vmatprep.subr.bf16.mxu0 0
    %911 = vmatpush1.bf16.xpose.msra.mxu0 0
    %912 = vmatprep.subr.bf16.mxu0 0
    %913 = vmatpush1.bf16.xpose.msra.mxu0 0
    %914 = vmatprep.mubr.bf16.mxu0 0
    %915 = vmatmul.mubr.bf16.gmra.mrb[0].mxu0 %v877
    %v916 = vpop.f32.mrb[0].mxu0
    %v917 = vadd.f32 0.0, %v916
    %v918 = vpop.f32.mrb[0].mxu0
    %v919 = vpop.f32.mrb[0].mxu0
    %v920 = vpop.f32.mrb[0].mxu0
    %921 = vdwg.mxu0
    %922 = vrot.lane.b32.xlu0 %v205, 104
    %v923 = vpop.permute.xlu0 %922
    %924 = vrot.lane.b32.xlu0 %v205, 72
    %v925 = vpop.permute.xlu0 %924
    %v927 = vsel %vm209, %v923, 0
    %v930 = vsel %vm209, %v925, 0
    %932 = vmatprep.subr.bf16.mxu0 0
    %933 = vmatpush1.bf16.xpose.msra.mxu0 %v930
    %934 = vmatprep.subr.bf16.mxu0 0
    %935 = vmatpush1.bf16.xpose.msra.mxu0 0
    %936 = vmatprep.subr.bf16.mxu0 0
    %937 = vmatpush1.bf16.xpose.msra.mxu0 0
    %938 = vmatprep.subr.bf16.mxu0 0
    %939 = vmatpush1.bf16.xpose.msra.mxu0 0
    %940 = vmatprep.subr.bf16.mxu0 0
    %941 = vmatpush1.bf16.xpose.msra.mxu0 0
    %942 = vmatprep.subr.bf16.mxu0 0
    %943 = vmatpush1.bf16.xpose.msra.mxu0 0
    %944 = vmatprep.subr.bf16.mxu0 0
    %945 = vmatpush1.bf16.xpose.msra.mxu0 0
    %946 = vmatprep.subr.bf16.mxu0 0
    %947 = vmatpush1.bf16.xpose.msra.mxu0 0
    %948 = vmatprep.subr.bf16.mxu0 0
    %949 = vmatpush1.bf16.xpose.msra.mxu0 0
    %950 = vmatprep.subr.bf16.mxu0 0
    %951 = vmatpush1.bf16.xpose.msra.mxu0 0
    %952 = vmatprep.subr.bf16.mxu0 0
    %953 = vmatpush1.bf16.xpose.msra.mxu0 0
    %954 = vmatprep.subr.bf16.mxu0 0
    %955 = vmatpush1.bf16.xpose.msra.mxu0 0
    %956 = vmatprep.subr.bf16.mxu0 0
    %957 = vmatpush1.bf16.xpose.msra.mxu0 0
    %958 = vmatprep.subr.bf16.mxu0 0
    %959 = vmatpush1.bf16.xpose.msra.mxu0 0
    %960 = vmatprep.subr.bf16.mxu0 0
    %961 = vmatpush1.bf16.xpose.msra.mxu0 0
    %962 = vmatprep.subr.bf16.mxu0 0
    %963 = vmatpush1.bf16.xpose.msra.mxu0 0
    %964 = vmatprep.mubr.bf16.mxu0 0
    %965 = vmatmul.mubr.bf16.gmra.mrb[0].mxu0 %v927
    %v966 = vpop.f32.mrb[0].mxu0
    %v967 = vadd.f32 0.0, %v966
    %v968 = vpop.f32.mrb[0].mxu0
    %v969 = vpop.f32.mrb[0].mxu0
    %v970 = vpop.f32.mrb[0].mxu0
    %971 = vdwg.mxu0
    %v972 = vmul.f32 %v917, 0.35355338
    %v973 = vmul.f32 %v967, 0.35355338
    %v974 = vsel %vm209, %v972, -inf
    %975 = vmax.xlane.f32.xlu0 %v974
    %v976 = vpop.xlane.xlu0 %975
    %v977 = vsel %vm209, %v973, -inf
    %978 = vmax.xlane.f32.xlu0 %v977
    %v979 = vpop.xlane.xlu0 %978
    %v980 = vsub.f32 %v972, %v976
    %v981 = vsub.f32 %v973, %v979
    %v982 = vmul.f32 %v980, 1.442695
    %v983 = vpow.pop %v982
    %v984 = vmul.f32 %v981, 1.442695
    %v985 = vpow.pop %v984
    %v986 = vsel %vm209, %v983, 0.0
    %987 = vadd.xlane.f32.xlu0 %v986
    %v988 = vpop.xlane.xlu0 %987
    %v989 = vsel %vm209, %v985, 0.0
    %990 = vadd.xlane.f32.xlu0 %v989
    %v991 = vpop.xlane.xlu0 %990
    %v992 = vrcp.pop %v988
    %v993 = vmul.f32 %v983, %v992
    %v994 = vrcp.pop %v991
    %v995 = vmul.f32 %v985, %v994
    %v996 = vpack.c.bf16 %v993, %v993
    %v997 = vpack.c.bf16 %v995, %v995
    %998 = vrot.lane.b32.xlu0 %v204, 40
    %v999 = vpop.permute.xlu0 %998
    %v1001 = vsel %vm209, %v996, 0
    %v1004 = vsel %vm336, %v999, 0
    %1006 = vmatprep.subr.bf16.mxu0 0
    %1007 = vmatpush1.bf16.msra.mxu0 %v1004
    %1008 = vmatprep.subr.bf16.mxu0 0
    %1009 = vmatpush1.bf16.msra.mxu0 0
    %1010 = vmatprep.subr.bf16.mxu0 0
    %1011 = vmatpush1.bf16.msra.mxu0 0
    %1012 = vmatprep.subr.bf16.mxu0 0
    %1013 = vmatpush1.bf16.msra.mxu0 0
    %1014 = vmatprep.subr.bf16.mxu0 0
    %1015 = vmatpush1.bf16.msra.mxu0 0
    %1016 = vmatprep.subr.bf16.mxu0 0
    %1017 = vmatpush1.bf16.msra.mxu0 0
    %1018 = vmatprep.subr.bf16.mxu0 0
    %1019 = vmatpush1.bf16.msra.mxu0 0
    %1020 = vmatprep.subr.bf16.mxu0 0
    %1021 = vmatpush1.bf16.msra.mxu0 0
    %1022 = vmatprep.subr.bf16.mxu0 0
    %1023 = vmatpush1.bf16.msra.mxu0 0
    %1024 = vmatprep.subr.bf16.mxu0 0
    %1025 = vmatpush1.bf16.msra.mxu0 0
    %1026 = vmatprep.subr.bf16.mxu0 0
    %1027 = vmatpush1.bf16.msra.mxu0 0
    %1028 = vmatprep.subr.bf16.mxu0 0
    %1029 = vmatpush1.bf16.msra.mxu0 0
    %1030 = vmatprep.subr.bf16.mxu0 0
    %1031 = vmatpush1.bf16.msra.mxu0 0
    %1032 = vmatprep.subr.bf16.mxu0 0
    %1033 = vmatpush1.bf16.msra.mxu0 0
    %1034 = vmatprep.subr.bf16.mxu0 0
    %1035 = vmatpush1.bf16.msra.mxu0 0
    %1036 = vmatprep.subr.bf16.mxu0 0
    %1037 = vmatpush1.bf16.msra.mxu0 0
    %1038 = vmatprep.mubr.bf16.mxu0 0
    %1039 = vmatmul.mubr.bf16.gmra.mrb[0].mxu0 %v1001
    %v1040 = vpop.f32.mrb[0].mxu0
    %v1041 = vadd.f32 0.0, %v1040
    %v1042 = vpop.f32.mrb[0].mxu0
    %v1043 = vpop.f32.mrb[0].mxu0
    %v1044 = vpop.f32.mrb[0].mxu0
    %1045 = vdwg.mxu0
    %1046 = vrot.lane.b32.xlu0 %v205, 40
    %v1047 = vpop.permute.xlu0 %1046
    %v1049 = vsel %vm209, %v997, 0
    %v1052 = vsel %vm336, %v1047, 0
    %1054 = vmatprep.subr.bf16.mxu0 0
    %1055 = vmatpush1.bf16.msra.mxu0 %v1052
    %1056 = vmatprep.subr.bf16.mxu0 0
    %1057 = vmatpush1.bf16.msra.mxu0 0
    %1058 = vmatprep.subr.bf16.mxu0 0
    %1059 = vmatpush1.bf16.msra.mxu0 0
    %1060 = vmatprep.subr.bf16.mxu0 0
    %1061 = vmatpush1.bf16.msra.mxu0 0
    %1062 = vmatprep.subr.bf16.mxu0 0
    %1063 = vmatpush1.bf16.msra.mxu0 0
    %1064 = vmatprep.subr.bf16.mxu0 0
    %1065 = vmatpush1.bf16.msra.mxu0 0
    %1066 = vmatprep.subr.bf16.mxu0 0
    %1067 = vmatpush1.bf16.msra.mxu0 0
    %1068 = vmatprep.subr.bf16.mxu0 0
    %1069 = vmatpush1.bf16.msra.mxu0 0
    %1070 = vmatprep.subr.bf16.mxu0 0
    %1071 = vmatpush1.bf16.msra.mxu0 0
    %1072 = vmatprep.subr.bf16.mxu0 0
    %1073 = vmatpush1.bf16.msra.mxu0 0
    %1074 = vmatprep.subr.bf16.mxu0 0
    %1075 = vmatpush1.bf16.msra.mxu0 0
    %1076 = vmatprep.subr.bf16.mxu0 0
    %1077 = vmatpush1.bf16.msra.mxu0 0
    %1078 = vmatprep.subr.bf16.mxu0 0
    %1079 = vmatpush1.bf16.msra.mxu0 0
    %1080 = vmatprep.subr.bf16.mxu0 0
    %1081 = vmatpush1.bf16.msra.mxu0 0
    %1082 = vmatprep.subr.bf16.mxu0 0
    %1083 = vmatpush1.bf16.msra.mxu0 0
    %1084 = vmatprep.subr.bf16.mxu0 0
    %1085 = vmatpush1.bf16.msra.mxu0 0
    %1086 = vmatprep.mubr.bf16.mxu0 0
    %1087 = vmatmul.mubr.bf16.gmra.mrb[0].mxu0 %v1049
    %v1088 = vpop.f32.mrb[0].mxu0
    %v1089 = vadd.f32 0.0, %v1088
    %v1090 = vpop.f32.mrb[0].mxu0
    %v1091 = vpop.f32.mrb[0].mxu0
    %v1092 = vpop.f32.mrb[0].mxu0
    %1093 = vdwg.mxu0
    %1096 = vrot.lane.b32.xlu0 %v597, 8
    %v1097 = vpop.permute.xlu0 %1096
    %1098 = vrot.lane.b32.xlu0 %v645, 8
    %v1099 = vpop.permute.xlu0 %1098
    %1104 = vrot.lane.b32.xlu0 %v819, 16
    %v1105 = vpop.permute.xlu0 %1104
    %1106 = vrot.lane.b32.xlu0 %v867, 16
    %v1107 = vpop.permute.xlu0 %1106
    %1112 = vrot.lane.b32.xlu0 %v1041, 24
    %v1113 = vpop.permute.xlu0 %1112
    %1114 = vrot.lane.b32.xlu0 %v1089, 24
    %v1115 = vpop.permute.xlu0 %1114
    %v1118 = vsel %vm209, %v375, %v1097
    %v1119 = vsel %vm209, %v423, %v1099
    %vm1120 = vcmask 130048
    %v1121 = vsel %vm1120, %v1118, %v1105
    %v1122 = vsel %vm1120, %v1119, %v1107
    %vm1123 = vcmask 195584
    %v1124 = vsel %vm1123, %v1121, %v1113
    %v1125 = vsel %vm1123, %v1122, %v1115
    %v1126 = vpack.c.bf16 %v1125, %v1124
    %v1127 = vld [vmem:[%s5] sm:$0xf]
    %v1128 = vld [vmem:[%s5 + $0x4] sm:$0xf]
    %v1129 = vld [vmem:[%s5 + $0x8] sm:$0xf]
    %v1130 = vld [vmem:[%s5 + $0xc] sm:$0xf]
    %v1135 = vunpack.c.l.b16 %v1127
    %v1136 = vunpack.c.l.b16 %v1128
    %v1137 = vunpack.c.l.b16 %v1129
    %v1138 = vunpack.c.l.b16 %v1130
    %v1139 = vpack.c.b16 %v1136, %v1135
    %v1140 = vpack.c.b16 %v1138, %v1137
    %v1144 = vsel %vm71, %v1126, 0
    %1146 = vmatprep.subr.bf16.mxu0 0
    %1147 = vmatpush1.bf16.msra.mxu0 %v1139
    %1148 = vmatprep.subr.bf16.mxu0 0
    %1149 = vmatpush1.bf16.msra.mxu0 %v1140
    %1150 = vmatprep.subr.bf16.mxu0 0
    %1151 = vmatpush1.bf16.msra.mxu0 0
    %1152 = vmatprep.subr.bf16.mxu0 0
    %1153 = vmatpush1.bf16.msra.mxu0 0
    %1154 = vmatprep.subr.bf16.mxu0 0
    %1155 = vmatpush1.bf16.msra.mxu0 0
    %1156 = vmatprep.subr.bf16.mxu0 0
    %1157 = vmatpush1.bf16.msra.mxu0 0
    %1158 = vmatprep.subr.bf16.mxu0 0
    %1159 = vmatpush1.bf16.msra.mxu0 0
    %1160 = vmatprep.subr.bf16.mxu0 0
    %1161 = vmatpush1.bf16.msra.mxu0 0
    %1162 = vmatprep.subr.bf16.mxu0 0
    %1163 = vmatpush1.bf16.msra.mxu0 0
    %1164 = vmatprep.subr.bf16.mxu0 0
    %1165 = vmatpush1.bf16.msra.mxu0 0
    %1166 = vmatprep.subr.bf16.mxu0 0
    %1167 = vmatpush1.bf16.msra.mxu0 0
    %1168 = vmatprep.subr.bf16.mxu0 0
    %1169 = vmatpush1.bf16.msra.mxu0 0
    %1170 = vmatprep.subr.bf16.mxu0 0
    %1171 = vmatpush1.bf16.msra.mxu0 0
    %1172 = vmatprep.subr.bf16.mxu0 0
    %1173 = vmatpush1.bf16.msra.mxu0 0
    %1174 = vmatprep.subr.bf16.mxu0 0
    %1175 = vmatpush1.bf16.msra.mxu0 0
    %1176 = vmatprep.subr.bf16.mxu0 0
    %1177 = vmatpush1.bf16.msra.mxu0 0
    %1178 = vmatprep.mubr.bf16.mxu0 0
    %1179 = vmatmul.mubr.bf16.gmra.mrb[0].mxu0 %v1144
    %v1180 = vpop.f32.mrb[0].mxu0
    %v1181 = vadd.f32 0.0, %v1180
    %v1182 = vpop.f32.mrb[0].mxu0
    %v1183 = vpop.f32.mrb[0].mxu0
    %v1184 = vadd.f32 0.0, %v1183
    %v1185 = vpop.f32.mrb[0].mxu0
    %1186 = vdwg.mxu0
    %v1187 = vadd.f32 %v117, %v1181
    %v1188 = vadd.f32 %v118, %v1184
    %v1189 = vld [vmem:[%s3 + $0x1] sm:$0x1]
    %v1190 = vmul.f32 %v1187, %v1187
    %v1191 = vmul.f32 %v1188, %v1188
    %v1192 = vsel %vm71, %v1190, 0.0
    %1193 = vadd.xlane.f32.xlu0 %v1192
    %v1194 = vpop.xlane.xlu0 %1193
    %v1195 = vsel %vm71, %v1191, 0.0
    %1196 = vadd.xlane.f32.xlu0 %v1195
    %v1197 = vpop.xlane.xlu0 %1196
    %v1198 = vmul.f32 %v1194, %v128
    %v1199 = vmul.f32 %v1197, %v128
    %v1200 = vadd.f32 %v1198, 1e-06
    %v1201 = vadd.f32 %v1199, 1e-06
    %v1202 = vrsqrt.pop %v1200
    %v1203 = vrsqrt.pop %v1201
    %v1204 = vmul.f32 %v1187, %v1202
    %v1205 = vmul.f32 %v1188, %v1203
    %v1206 = vlaneseq
    %v1207 = vshrl.u32 %v1206, 7
    %v1208 = vsub.s32 0, %v1207
    %v1209 = vrot.slane %v1189, %v1208
    %v1210 = vmul.f32 %v1204, %v1209
    %v1211 = vmul.f32 %v1205, %v1209
    %v1212 = vpack.c.bf16 %v1211, %v1210
    %v1213 = vld [vmem:[%s6] sm:$0xf]
    %v1214 = vld [vmem:[%s6 + $0x4] sm:$0xf]
    %v1215 = vld [vmem:[%s6 + $0x8] sm:$0xf]
    %v1216 = vld [vmem:[%s6 + $0xc] sm:$0xf]
    %v1221 = vunpack.c.l.b16 %v1213
    %v1222 = vunpack.c.l.b16 %v1214
    %v1223 = vunpack.c.l.b16 %v1215
    %v1224 = vunpack.c.l.b16 %v1216
    %v1225 = vpack.c.b16 %v1222, %v1221
    %v1226 = vpack.c.b16 %v1224, %v1223
    %v1230 = vsel %vm71, %v1212, 0
    %1232 = vmatprep.subr.bf16.mxu0 0
    %1233 = vmatpush1.bf16.msra.mxu0 %v1225
    %1234 = vmatprep.subr.bf16.mxu0 0
    %1235 = vmatpush1.bf16.msra.mxu0 %v1226
    %1236 = vmatprep.subr.bf16.mxu0 0
    %1237 = vmatpush1.bf16.msra.mxu0 0
    %1238 = vmatprep.subr.bf16.mxu0 0
    %1239 = vmatpush1.bf16.msra.mxu0 0
    %1240 = vmatprep.subr.bf16.mxu0 0
    %1241 = vmatpush1.bf16.msra.mxu0 0
    %1242 = vmatprep.subr.bf16.mxu0 0
    %1243 = vmatpush1.bf16.msra.mxu0 0
    %1244 = vmatprep.subr.bf16.mxu0 0
    %1245 = vmatpush1.bf16.msra.mxu0 0
    %1246 = vmatprep.subr.bf16.mxu0 0
    %1247 = vmatpush1.bf16.msra.mxu0 0
    %1248 = vmatprep.subr.bf16.mxu0 0
    %1249 = vmatpush1.bf16.msra.mxu0 0
    %1250 = vmatprep.subr.bf16.mxu0 0
    %1251 = vmatpush1.bf16.msra.mxu0 0
    %1252 = vmatprep.subr.bf16.mxu0 0
    %1253 = vmatpush1.bf16.msra.mxu0 0
    %1254 = vmatprep.subr.bf16.mxu0 0
    %1255 = vmatpush1.bf16.msra.mxu0 0
    %1256 = vmatprep.subr.bf16.mxu0 0
    %1257 = vmatpush1.bf16.msra.mxu0 0
    %1258 = vmatprep.subr.bf16.mxu0 0
    %1259 = vmatpush1.bf16.msra.mxu0 0
    %1260 = vmatprep.subr.bf16.mxu0 0
    %1261 = vmatpush1.bf16.msra.mxu0 0
    %1262 = vmatprep.subr.bf16.mxu0 0
    %1263 = vmatpush1.bf16.msra.mxu0 0
    %1264 = vmatprep.mubr.bf16.mxu0 0
    %1265 = vmatmul.mubr.bf16.gmra.mrb[0].mxu0 %v1230
    %v1266 = vpop.f32.mrb[0].mxu0
    %v1267 = vadd.f32 0.0, %v1266
    %v1268 = vpop.f32.mrb[0].mxu0
    %v1269 = vpop.f32.mrb[0].mxu0
    %v1270 = vadd.f32 0.0, %v1269
    %v1271 = vpop.f32.mrb[0].mxu0
    %1272 = vdwg.mxu0
    %vm1273 = vcmask 15360
    %v1274 = vsel %vm1273, %v1267, -inf
    %1275 = vmax.xlane.f32.xlu0 %v1274
    %v1276 = vpop.xlane.xlu0 %1275
    %v1277 = vsel %vm1273, %v1270, -inf
    %1278 = vmax.xlane.f32.xlu0 %v1277
    %v1279 = vpop.xlane.xlu0 %1278
    %v1280 = vsub.f32 %v1267, %v1276
    %v1281 = vsub.f32 %v1270, %v1279
    %v1282 = vmul.f32 %v1280, 1.442695
    %v1283 = vpow.pop %v1282
    %v1284 = vmul.f32 %v1281, 1.442695
    %v1285 = vpow.pop %v1284
    %v1286 = vsel %vm1273, %v1283, 0.0
    %1287 = vadd.xlane.f32.xlu0 %v1286
    %v1288 = vpop.xlane.xlu0 %1287
    %v1289 = vsel %vm1273, %v1285, 0.0
    %1290 = vadd.xlane.f32.xlu0 %v1289
    %v1291 = vpop.xlane.xlu0 %1290
    %v1292 = vrcp.pop %v1288
    %v1293 = vmul.f32 %v1283, %v1292
    %v1294 = vrcp.pop %v1291
    %v1295 = vmul.f32 %v1285, %v1294
    %v1296 = vld [vmem:[%s7] sm:$0xff]
    %v1297 = vld [vmem:[%s7 + $0x8] sm:$0xff]
    %v1298 = vld [vmem:[%s7 + $0x10] sm:$0xff]
    %v1299 = vld [vmem:[%s7 + $0x18] sm:$0xff]
    %v1304 = vunpack.c.l.b16 %v1296
    %v1305 = vunpack.c.h.b16 %v1296
    %v1306 = vunpack.c.l.b16 %v1297
    %v1307 = vunpack.c.h.b16 %v1297
    %v1308 = vunpack.c.l.b16 %v1298
    %v1309 = vunpack.c.h.b16 %v1298
    %v1310 = vunpack.c.l.b16 %v1299
    %v1311 = vunpack.c.h.b16 %v1299
    %v1312 = vpack.c.b16 %v1306, %v1304
    %v1313 = vpack.c.b16 %v1307, %v1305
    %v1314 = vpack.c.b16 %v1310, %v1308
    %v1315 = vpack.c.b16 %v1311, %v1309
    %1320 = vmatprep.subr.bf16.mxu0 %v1313
    %1321 = vmatpush1.bf16.msra.mxu0 %v1312
    %1322 = vmatprep.subr.bf16.mxu0 %v1315
    %1323 = vmatpush1.bf16.msra.mxu0 %v1314
    %1324 = vmatprep.subr.bf16.mxu0 0
    %1325 = vmatpush1.bf16.msra.mxu0 0
    %1326 = vmatprep.subr.bf16.mxu0 0
    %1327 = vmatpush1.bf16.msra.mxu0 0
    %1328 = vmatprep.subr.bf16.mxu0 0
    %1329 = vmatpush1.bf16.msra.mxu0 0
    %1330 = vmatprep.subr.bf16.mxu0 0
    %1331 = vmatpush1.bf16.msra.mxu0 0
    %1332 = vmatprep.subr.bf16.mxu0 0
    %1333 = vmatpush1.bf16.msra.mxu0 0
    %1334 = vmatprep.subr.bf16.mxu0 0
    %1335 = vmatpush1.bf16.msra.mxu0 0
    %1336 = vmatprep.subr.bf16.mxu0 0
    %1337 = vmatpush1.bf16.msra.mxu0 0
    %1338 = vmatprep.subr.bf16.mxu0 0
    %1339 = vmatpush1.bf16.msra.mxu0 0
    %1340 = vmatprep.subr.bf16.mxu0 0
    %1341 = vmatpush1.bf16.msra.mxu0 0
    %1342 = vmatprep.subr.bf16.mxu0 0
    %1343 = vmatpush1.bf16.msra.mxu0 0
    %1344 = vmatprep.subr.bf16.mxu0 0
    %1345 = vmatpush1.bf16.msra.mxu0 0
    %1346 = vmatprep.subr.bf16.mxu0 0
    %1347 = vmatpush1.bf16.msra.mxu0 0
    %1348 = vmatprep.subr.bf16.mxu0 0
    %1349 = vmatpush1.bf16.msra.mxu0 0
    %1350 = vmatprep.subr.bf16.mxu0 0
    %1351 = vmatpush1.bf16.msra.mxu0 0
    %1352 = vmatprep.mubr.bf16.mxu0 0
    %1353 = vmatmul.mubr.bf16.gmra.mrb[0].mxu0 %v1230
    %v1354 = vpop.f32.mrb[0].mxu0
    %v1355 = vadd.f32 0.0, %v1354
    %v1356 = vpop.f32.mrb[0].mxu0
    %v1357 = vadd.f32 0.0, %v1356
    %v1358 = vpop.f32.mrb[0].mxu0
    %v1359 = vadd.f32 0.0, %v1358
    %v1360 = vpop.f32.mrb[0].mxu0
    %v1361 = vadd.f32 0.0, %v1360
    %1362 = vdwg.mxu0
    %v1363 = vmax.f32 %v1355, 0.0
    %v1364 = vmax.f32 %v1357, 0.0
    %v1365 = vmax.f32 %v1359, 0.0
    %v1366 = vmax.f32 %v1361, 0.0
    %1368 = vset.pattern.permute.xlu0 0
    %1369 = vperm.xlu0 %1368, %v1293
    %v1370 = vpop.permute.xlu0 %1369
    %1373 = vset.pattern.permute.xlu0 0
    %1374 = vperm.xlu0 %1373, %v1295
    %v1375 = vpop.permute.xlu0 %1374
    %1377 = vset.pattern.permute.xlu0 1
    %1378 = vperm.xlu0 %1377, %v1293
    %v1379 = vpop.permute.xlu0 %1378
    %1381 = vset.pattern.permute.xlu0 1
    %1382 = vperm.xlu0 %1381, %v1295
    %v1383 = vpop.permute.xlu0 %1382
    %v1385 = vmul.f32 %v1363, %v1370
    %v1386 = vmul.f32 %v1364, %v1379
    %v1387 = vmul.f32 %v1365, %v1375
    %v1388 = vmul.f32 %v1366, %v1383
    %v1389 = vpack.c.bf16 %v1387, %v1385
    %v1390 = vpack.c.bf16 %v1388, %v1386
    %v1391 = vld [vmem:[%s8] sm:$0xf]
    %v1392 = vld [vmem:[%s8 + $0x4] sm:$0xf]
    %v1393 = vld [vmem:[%s8 + $0x8] sm:$0xf]
    %v1394 = vld [vmem:[%s8 + $0xc] sm:$0xf]
    %v1395 = vld [vmem:[%s8 + $0x10] sm:$0xf]
    %v1396 = vld [vmem:[%s8 + $0x14] sm:$0xf]
    %v1397 = vld [vmem:[%s8 + $0x18] sm:$0xf]
    %v1398 = vld [vmem:[%s8 + $0x1c] sm:$0xf]
    %v1399 = vld [vmem:[%s8 + $0x20] sm:$0xf]
    %v1400 = vld [vmem:[%s8 + $0x24] sm:$0xf]
    %v1401 = vld [vmem:[%s8 + $0x28] sm:$0xf]
    %v1402 = vld [vmem:[%s8 + $0x2c] sm:$0xf]
    %v1403 = vld [vmem:[%s8 + $0x30] sm:$0xf]
    %v1404 = vld [vmem:[%s8 + $0x34] sm:$0xf]
    %v1405 = vld [vmem:[%s8 + $0x38] sm:$0xf]
    %v1406 = vld [vmem:[%s8 + $0x3c] sm:$0xf]
    %v1407 = vld [vmem:[%s8 + $0x40] sm:$0xf]
    %v1408 = vld [vmem:[%s8 + $0x44] sm:$0xf]
    %v1409 = vld [vmem:[%s8 + $0x48] sm:$0xf]
    %v1410 = vld [vmem:[%s8 + $0x4c] sm:$0xf]
    %v1411 = vld [vmem:[%s8 + $0x50] sm:$0xf]
    %v1412 = vld [vmem:[%s8 + $0x54] sm:$0xf]
    %v1413 = vld [vmem:[%s8 + $0x58] sm:$0xf]
    %v1414 = vld [vmem:[%s8 + $0x5c] sm:$0xf]
    %v1415 = vld [vmem:[%s8 + $0x60] sm:$0xf]
    %v1416 = vld [vmem:[%s8 + $0x64] sm:$0xf]
    %v1417 = vld [vmem:[%s8 + $0x68] sm:$0xf]
    %v1418 = vld [vmem:[%s8 + $0x6c] sm:$0xf]
    %v1419 = vld [vmem:[%s8 + $0x70] sm:$0xf]
    %v1420 = vld [vmem:[%s8 + $0x74] sm:$0xf]
    %v1421 = vld [vmem:[%s8 + $0x78] sm:$0xf]
    %v1422 = vld [vmem:[%s8 + $0x7c] sm:$0xf]
    %v1455 = vunpack.c.l.b16 %v1391
    %v1456 = vunpack.c.l.b16 %v1392
    %v1457 = vunpack.c.l.b16 %v1393
    %v1458 = vunpack.c.l.b16 %v1394
    %v1459 = vunpack.c.l.b16 %v1395
    %v1460 = vunpack.c.l.b16 %v1396
    %v1461 = vunpack.c.l.b16 %v1397
    %v1462 = vunpack.c.l.b16 %v1398
    %v1463 = vunpack.c.l.b16 %v1399
    %v1464 = vunpack.c.l.b16 %v1400
    %v1465 = vunpack.c.l.b16 %v1401
    %v1466 = vunpack.c.l.b16 %v1402
    %v1467 = vunpack.c.l.b16 %v1403
    %v1468 = vunpack.c.l.b16 %v1404
    %v1469 = vunpack.c.l.b16 %v1405
    %v1470 = vunpack.c.l.b16 %v1406
    %v1471 = vunpack.c.l.b16 %v1407
    %v1472 = vunpack.c.l.b16 %v1408
    %v1473 = vunpack.c.l.b16 %v1409
    %v1474 = vunpack.c.l.b16 %v1410
    %v1475 = vunpack.c.l.b16 %v1411
    %v1476 = vunpack.c.l.b16 %v1412
    %v1477 = vunpack.c.l.b16 %v1413
    %v1478 = vunpack.c.l.b16 %v1414
    %v1479 = vunpack.c.l.b16 %v1415
    %v1480 = vunpack.c.l.b16 %v1416
    %v1481 = vunpack.c.l.b16 %v1417
    %v1482 = vunpack.c.l.b16 %v1418
    %v1483 = vunpack.c.l.b16 %v1419
    %v1484 = vunpack.c.l.b16 %v1420
    %v1485 = vunpack.c.l.b16 %v1421
    %v1486 = vunpack.c.l.b16 %v1422
    %v1487 = vpack.c.b16 %v1456, %v1455
    %v1488 = vpack.c.b16 %v1458, %v1457
    %v1489 = vpack.c.b16 %v1460, %v1459
    %v1490 = vpack.c.b16 %v1462, %v1461
    %v1491 = vpack.c.b16 %v1464, %v1463
    %v1492 = vpack.c.b16 %v1466, %v1465
    %v1493 = vpack.c.b16 %v1468, %v1467
    %v1494 = vpack.c.b16 %v1470, %v1469
    %v1495 = vpack.c.b16 %v1472, %v1471
    %v1496 = vpack.c.b16 %v1474, %v1473
    %v1497 = vpack.c.b16 %v1476, %v1475
    %v1498 = vpack.c.b16 %v1478, %v1477
    %v1499 = vpack.c.b16 %v1480, %v1479
    %v1500 = vpack.c.b16 %v1482, %v1481
    %v1501 = vpack.c.b16 %v1484, %v1483
    %v1502 = vpack.c.b16 %v1486, %v1485
    %1519 = vmatprep.subr.bf16.mxu0 0
    %1520 = vmatpush1.bf16.msra.mxu0 %v1487
    %1521 = vmatprep.subr.bf16.mxu0 0
    %1522 = vmatpush1.bf16.msra.mxu0 %v1488
    %1523 = vmatprep.subr.bf16.mxu0 0
    %1524 = vmatpush1.bf16.msra.mxu0 %v1489
    %1525 = vmatprep.subr.bf16.mxu0 0
    %1526 = vmatpush1.bf16.msra.mxu0 %v1490
    %1527 = vmatprep.subr.bf16.mxu0 0
    %1528 = vmatpush1.bf16.msra.mxu0 %v1491
    %1529 = vmatprep.subr.bf16.mxu0 0
    %1530 = vmatpush1.bf16.msra.mxu0 %v1492
    %1531 = vmatprep.subr.bf16.mxu0 0
    %1532 = vmatpush1.bf16.msra.mxu0 %v1493
    %1533 = vmatprep.subr.bf16.mxu0 0
    %1534 = vmatpush1.bf16.msra.mxu0 %v1494
    %1535 = vmatprep.subr.bf16.mxu0 0
    %1536 = vmatpush1.bf16.msra.mxu0 %v1495
    %1537 = vmatprep.subr.bf16.mxu0 0
    %1538 = vmatpush1.bf16.msra.mxu0 %v1496
    %1539 = vmatprep.subr.bf16.mxu0 0
    %1540 = vmatpush1.bf16.msra.mxu0 %v1497
    %1541 = vmatprep.subr.bf16.mxu0 0
    %1542 = vmatpush1.bf16.msra.mxu0 %v1498
    %1543 = vmatprep.subr.bf16.mxu0 0
    %1544 = vmatpush1.bf16.msra.mxu0 %v1499
    %1545 = vmatprep.subr.bf16.mxu0 0
    %1546 = vmatpush1.bf16.msra.mxu0 %v1500
    %1547 = vmatprep.subr.bf16.mxu0 0
    %1548 = vmatpush1.bf16.msra.mxu0 %v1501
    %1549 = vmatprep.subr.bf16.mxu0 0
    %1550 = vmatpush1.bf16.msra.mxu0 %v1502
    %1551 = vmatprep.mubr.bf16.mxu0 %v1390
    %1552 = vmatmul.mubr.bf16.gmra.mrb[0].mxu0 %v1389
    %v1553 = vpop.f32.mrb[0].mxu0
    %v1554 = vadd.f32 0.0, %v1553
    %v1555 = vpop.f32.mrb[0].mxu0
    %v1556 = vpop.f32.mrb[0].mxu0
    %v1557 = vadd.f32 0.0, %v1556
    %v1558 = vpop.f32.mrb[0].mxu0
    %1559 = vdwg.mxu0
    %v1560 = vadd.f32 %v1187, %v1554
    %v1561 = vadd.f32 %v1188, %v1557
    %v1562 = vld [vmem:[%s3 + $0x2] sm:$0x1]
    %v1563 = vmul.f32 %v1560, %v1560
    %v1564 = vmul.f32 %v1561, %v1561
    %v1565 = vsel %vm71, %v1563, 0.0
    %1566 = vadd.xlane.f32.xlu0 %v1565
    %v1567 = vpop.xlane.xlu0 %1566
    %v1568 = vsel %vm71, %v1564, 0.0
    %1569 = vadd.xlane.f32.xlu0 %v1568
    %v1570 = vpop.xlane.xlu0 %1569
    %v1571 = vmul.f32 %v1567, %v128
    %v1572 = vmul.f32 %v1570, %v128
    %v1573 = vadd.f32 %v1571, 1e-06
    %v1574 = vadd.f32 %v1572, 1e-06
    %v1575 = vrsqrt.pop %v1573
    %v1576 = vrsqrt.pop %v1574
    %v1577 = vmul.f32 %v1560, %v1575
    %v1578 = vmul.f32 %v1561, %v1576
    %v1579 = vlaneseq
    %v1580 = vshrl.u32 %v1579, 7
    %v1581 = vsub.s32 0, %v1580
    %v1582 = vrot.slane %v1562, %v1581
    %v1583 = vmul.f32 %v1577, %v1582
    %v1584 = vmul.f32 %v1578, %v1582
    %v1585 = vpack.c.bf16 %v1584, %v1583
    %s1586 = scalar_lea.vmem %s4, 16
    %v1587 = vld [vmem:[%s1586] sm:$0xf]
    %v1588 = vld [vmem:[%s1586 + $0x4] sm:$0xf]
    %v1589 = vld [vmem:[%s1586 + $0x8] sm:$0xf]
    %v1590 = vld [vmem:[%s1586 + $0xc] sm:$0xf]
    %v1595 = vunpack.c.l.b16 %v1587
    %v1596 = vunpack.c.l.b16 %v1588
    %v1597 = vunpack.c.l.b16 %v1589
    %v1598 = vunpack.c.l.b16 %v1590
    %v1599 = vpack.c.b16 %v1596, %v1595
    %v1600 = vpack.c.b16 %v1598, %v1597
    %v1604 = vsel %vm71, %v1585, 0
    %1606 = vmatprep.subr.bf16.mxu0 0
    %1607 = vmatpush1.bf16.msra.mxu0 %v1599
    %1608 = vmatprep.subr.bf16.mxu0 0
    %1609 = vmatpush1.bf16.msra.mxu0 %v1600
    %1610 = vmatprep.subr.bf16.mxu0 0
    %1611 = vmatpush1.bf16.msra.mxu0 0
    %1612 = vmatprep.subr.bf16.mxu0 0
    %1613 = vmatpush1.bf16.msra.mxu0 0
    %1614 = vmatprep.subr.bf16.mxu0 0
    %1615 = vmatpush1.bf16.msra.mxu0 0
    %1616 = vmatprep.subr.bf16.mxu0 0
    %1617 = vmatpush1.bf16.msra.mxu0 0
    %1618 = vmatprep.subr.bf16.mxu0 0
    %1619 = vmatpush1.bf16.msra.mxu0 0
    %1620 = vmatprep.subr.bf16.mxu0 0
    %1621 = vmatpush1.bf16.msra.mxu0 0
    %1622 = vmatprep.subr.bf16.mxu0 0
    %1623 = vmatpush1.bf16.msra.mxu0 0
    %1624 = vmatprep.subr.bf16.mxu0 0
    %1625 = vmatpush1.bf16.msra.mxu0 0
    %1626 = vmatprep.subr.bf16.mxu0 0
    %1627 = vmatpush1.bf16.msra.mxu0 0
    %1628 = vmatprep.subr.bf16.mxu0 0
    %1629 = vmatpush1.bf16.msra.mxu0 0
    %1630 = vmatprep.subr.bf16.mxu0 0
    %1631 = vmatpush1.bf16.msra.mxu0 0
    %1632 = vmatprep.subr.bf16.mxu0 0
    %1633 = vmatpush1.bf16.msra.mxu0 0
    %1634 = vmatprep.subr.bf16.mxu0 0
    %1635 = vmatpush1.bf16.msra.mxu0 0
    %1636 = vmatprep.subr.bf16.mxu0 0
    %1637 = vmatpush1.bf16.msra.mxu0 0
    %1638 = vmatprep.mubr.bf16.mxu0 0
    %1639 = vmatmul.mubr.bf16.gmra.mrb[0].mxu0 %v1604
    %v1640 = vpop.f32.mrb[0].mxu0
    %v1641 = vadd.f32 0.0, %v1640
    %v1642 = vpop.f32.mrb[0].mxu0
    %v1643 = vpop.f32.mrb[0].mxu0
    %v1644 = vadd.f32 0.0, %v1643
    %v1645 = vpop.f32.mrb[0].mxu0
    %1646 = vdwg.mxu0
    %v1647 = vpack.c.bf16 %v1641, %v1641
    %v1648 = vpack.c.bf16 %v1644, %v1644
    %1650 = vrot.lane.b32.xlu0 %v1647, 96
    %v1651 = vpop.permute.xlu0 %1650
    %v1653 = vsel %vm209, %v1647, 0
    %v1656 = vsel %vm209, %v1651, 0
    %1658 = vmatprep.subr.bf16.mxu0 0
    %1659 = vmatpush1.bf16.xpose.msra.mxu0 %v1656
    %1660 = vmatprep.subr.bf16.mxu0 0
    %1661 = vmatpush1.bf16.xpose.msra.mxu0 0
    %1662 = vmatprep.subr.bf16.mxu0 0
    %1663 = vmatpush1.bf16.xpose.msra.mxu0 0
    %1664 = vmatprep.subr.bf16.mxu0 0
    %1665 = vmatpush1.bf16.xpose.msra.mxu0 0
    %1666 = vmatprep.subr.bf16.mxu0 0
    %1667 = vmatpush1.bf16.xpose.msra.mxu0 0
    %1668 = vmatprep.subr.bf16.mxu0 0
    %1669 = vmatpush1.bf16.xpose.msra.mxu0 0
    %1670 = vmatprep.subr.bf16.mxu0 0
    %1671 = vmatpush1.bf16.xpose.msra.mxu0 0
    %1672 = vmatprep.subr.bf16.mxu0 0
    %1673 = vmatpush1.bf16.xpose.msra.mxu0 0
    %1674 = vmatprep.subr.bf16.mxu0 0
    %1675 = vmatpush1.bf16.xpose.msra.mxu0 0
    %1676 = vmatprep.subr.bf16.mxu0 0
    %1677 = vmatpush1.bf16.xpose.msra.mxu0 0
    %1678 = vmatprep.subr.bf16.mxu0 0
    %1679 = vmatpush1.bf16.xpose.msra.mxu0 0
    %1680 = vmatprep.subr.bf16.mxu0 0
    %1681 = vmatpush1.bf16.xpose.msra.mxu0 0
    %1682 = vmatprep.subr.bf16.mxu0 0
    %1683 = vmatpush1.bf16.xpose.msra.mxu0 0
    %1684 = vmatprep.subr.bf16.mxu0 0
    %1685 = vmatpush1.bf16.xpose.msra.mxu0 0
    %1686 = vmatprep.subr.bf16.mxu0 0
    %1687 = vmatpush1.bf16.xpose.msra.mxu0 0
    %1688 = vmatprep.subr.bf16.mxu0 0
    %1689 = vmatpush1.bf16.xpose.msra.mxu0 0
    %1690 = vmatprep.mubr.bf16.mxu0 0
    %1691 = vmatmul.mubr.bf16.gmra.mrb[0].mxu0 %v1653
    %v1692 = vpop.f32.mrb[0].mxu0
    %v1693 = vadd.f32 0.0, %v1692
    %v1694 = vpop.f32.mrb[0].mxu0
    %v1695 = vpop.f32.mrb[0].mxu0
    %v1696 = vpop.f32.mrb[0].mxu0
    %1697 = vdwg.mxu0
    %1699 = vrot.lane.b32.xlu0 %v1648, 96
    %v1700 = vpop.permute.xlu0 %1699
    %v1702 = vsel %vm209, %v1648, 0
    %v1705 = vsel %vm209, %v1700, 0
    %1707 = vmatprep.subr.bf16.mxu0 0
    %1708 = vmatpush1.bf16.xpose.msra.mxu0 %v1705
    %1709 = vmatprep.subr.bf16.mxu0 0
    %1710 = vmatpush1.bf16.xpose.msra.mxu0 0
    %1711 = vmatprep.subr.bf16.mxu0 0
    %1712 = vmatpush1.bf16.xpose.msra.mxu0 0
    %1713 = vmatprep.subr.bf16.mxu0 0
    %1714 = vmatpush1.bf16.xpose.msra.mxu0 0
    %1715 = vmatprep.subr.bf16.mxu0 0
    %1716 = vmatpush1.bf16.xpose.msra.mxu0 0
    %1717 = vmatprep.subr.bf16.mxu0 0
    %1718 = vmatpush1.bf16.xpose.msra.mxu0 0
    %1719 = vmatprep.subr.bf16.mxu0 0
    %1720 = vmatpush1.bf16.xpose.msra.mxu0 0
    %1721 = vmatprep.subr.bf16.mxu0 0
    %1722 = vmatpush1.bf16.xpose.msra.mxu0 0
    %1723 = vmatprep.subr.bf16.mxu0 0
    %1724 = vmatpush1.bf16.xpose.msra.mxu0 0
    %1725 = vmatprep.subr.bf16.mxu0 0
    %1726 = vmatpush1.bf16.xpose.msra.mxu0 0
    %1727 = vmatprep.subr.bf16.mxu0 0
    %1728 = vmatpush1.bf16.xpose.msra.mxu0 0
    %1729 = vmatprep.subr.bf16.mxu0 0
    %1730 = vmatpush1.bf16.xpose.msra.mxu0 0
    %1731 = vmatprep.subr.bf16.mxu0 0
    %1732 = vmatpush1.bf16.xpose.msra.mxu0 0
    %1733 = vmatprep.subr.bf16.mxu0 0
    %1734 = vmatpush1.bf16.xpose.msra.mxu0 0
    %1735 = vmatprep.subr.bf16.mxu0 0
    %1736 = vmatpush1.bf16.xpose.msra.mxu0 0
    %1737 = vmatprep.subr.bf16.mxu0 0
    %1738 = vmatpush1.bf16.xpose.msra.mxu0 0
    %1739 = vmatprep.mubr.bf16.mxu0 0
    %1740 = vmatmul.mubr.bf16.gmra.mrb[0].mxu0 %v1702
    %v1741 = vpop.f32.mrb[0].mxu0
    %v1742 = vadd.f32 0.0, %v1741
    %v1743 = vpop.f32.mrb[0].mxu0
    %v1744 = vpop.f32.mrb[0].mxu0
    %v1745 = vpop.f32.mrb[0].mxu0
    %1746 = vdwg.mxu0
    %v1747 = vmul.f32 %v1693, 0.35355338
    %v1748 = vmul.f32 %v1742, 0.35355338
    %v1749 = vsel %vm209, %v1747, -inf
    %1750 = vmax.xlane.f32.xlu0 %v1749
    %v1751 = vpop.xlane.xlu0 %1750
    %v1752 = vsel %vm209, %v1748, -inf
    %1753 = vmax.xlane.f32.xlu0 %v1752
    %v1754 = vpop.xlane.xlu0 %1753
    %v1755 = vsub.f32 %v1747, %v1751
    %v1756 = vsub.f32 %v1748, %v1754
    %v1757 = vmul.f32 %v1755, 1.442695
    %v1758 = vpow.pop %v1757
    %v1759 = vmul.f32 %v1756, 1.442695
    %v1760 = vpow.pop %v1759
    %v1761 = vsel %vm209, %v1758, 0.0
    %1762 = vadd.xlane.f32.xlu0 %v1761
    %v1763 = vpop.xlane.xlu0 %1762
    %v1764 = vsel %vm209, %v1760, 0.0
    %1765 = vadd.xlane.f32.xlu0 %v1764
    %v1766 = vpop.xlane.xlu0 %1765
    %v1767 = vrcp.pop %v1763
    %v1768 = vmul.f32 %v1758, %v1767
    %v1769 = vrcp.pop %v1766
    %v1770 = vmul.f32 %v1760, %v1769
    %v1771 = vpack.c.bf16 %v1768, %v1768
    %v1772 = vpack.c.bf16 %v1770, %v1770
    %1773 = vrot.lane.b32.xlu0 %v1647, 64
    %v1774 = vpop.permute.xlu0 %1773
    %v1776 = vsel %vm209, %v1771, 0
    %v1779 = vsel %vm336, %v1774, 0
    %1781 = vmatprep.subr.bf16.mxu0 0
    %1782 = vmatpush1.bf16.msra.mxu0 %v1779
    %1783 = vmatprep.subr.bf16.mxu0 0
    %1784 = vmatpush1.bf16.msra.mxu0 0
    %1785 = vmatprep.subr.bf16.mxu0 0
    %1786 = vmatpush1.bf16.msra.mxu0 0
    %1787 = vmatprep.subr.bf16.mxu0 0
    %1788 = vmatpush1.bf16.msra.mxu0 0
    %1789 = vmatprep.subr.bf16.mxu0 0
    %1790 = vmatpush1.bf16.msra.mxu0 0
    %1791 = vmatprep.subr.bf16.mxu0 0
    %1792 = vmatpush1.bf16.msra.mxu0 0
    %1793 = vmatprep.subr.bf16.mxu0 0
    %1794 = vmatpush1.bf16.msra.mxu0 0
    %1795 = vmatprep.subr.bf16.mxu0 0
    %1796 = vmatpush1.bf16.msra.mxu0 0
    %1797 = vmatprep.subr.bf16.mxu0 0
    %1798 = vmatpush1.bf16.msra.mxu0 0
    %1799 = vmatprep.subr.bf16.mxu0 0
    %1800 = vmatpush1.bf16.msra.mxu0 0
    %1801 = vmatprep.subr.bf16.mxu0 0
    %1802 = vmatpush1.bf16.msra.mxu0 0
    %1803 = vmatprep.subr.bf16.mxu0 0
    %1804 = vmatpush1.bf16.msra.mxu0 0
    %1805 = vmatprep.subr.bf16.mxu0 0
    %1806 = vmatpush1.bf16.msra.mxu0 0
    %1807 = vmatprep.subr.bf16.mxu0 0
    %1808 = vmatpush1.bf16.msra.mxu0 0
    %1809 = vmatprep.subr.bf16.mxu0 0
    %1810 = vmatpush1.bf16.msra.mxu0 0
    %1811 = vmatprep.subr.bf16.mxu0 0
    %1812 = vmatpush1.bf16.msra.mxu0 0
    %1813 = vmatprep.mubr.bf16.mxu0 0
    %1814 = vmatmul.mubr.bf16.gmra.mrb[0].mxu0 %v1776
    %v1815 = vpop.f32.mrb[0].mxu0
    %v1816 = vadd.f32 0.0, %v1815
    %v1817 = vpop.f32.mrb[0].mxu0
    %v1818 = vpop.f32.mrb[0].mxu0
    %v1819 = vpop.f32.mrb[0].mxu0
    %1820 = vdwg.mxu0
    %1821 = vrot.lane.b32.xlu0 %v1648, 64
    %v1822 = vpop.permute.xlu0 %1821
    %v1824 = vsel %vm209, %v1772, 0
    %v1827 = vsel %vm336, %v1822, 0
    %1829 = vmatprep.subr.bf16.mxu0 0
    %1830 = vmatpush1.bf16.msra.mxu0 %v1827
    %1831 = vmatprep.subr.bf16.mxu0 0
    %1832 = vmatpush1.bf16.msra.mxu0 0
    %1833 = vmatprep.subr.bf16.mxu0 0
    %1834 = vmatpush1.bf16.msra.mxu0 0
    %1835 = vmatprep.subr.bf16.mxu0 0
    %1836 = vmatpush1.bf16.msra.mxu0 0
    %1837 = vmatprep.subr.bf16.mxu0 0
    %1838 = vmatpush1.bf16.msra.mxu0 0
    %1839 = vmatprep.subr.bf16.mxu0 0
    %1840 = vmatpush1.bf16.msra.mxu0 0
    %1841 = vmatprep.subr.bf16.mxu0 0
    %1842 = vmatpush1.bf16.msra.mxu0 0
    %1843 = vmatprep.subr.bf16.mxu0 0
    %1844 = vmatpush1.bf16.msra.mxu0 0
    %1845 = vmatprep.subr.bf16.mxu0 0
    %1846 = vmatpush1.bf16.msra.mxu0 0
    %1847 = vmatprep.subr.bf16.mxu0 0
    %1848 = vmatpush1.bf16.msra.mxu0 0
    %1849 = vmatprep.subr.bf16.mxu0 0
    %1850 = vmatpush1.bf16.msra.mxu0 0
    %1851 = vmatprep.subr.bf16.mxu0 0
    %1852 = vmatpush1.bf16.msra.mxu0 0
    %1853 = vmatprep.subr.bf16.mxu0 0
    %1854 = vmatpush1.bf16.msra.mxu0 0
    %1855 = vmatprep.subr.bf16.mxu0 0
    %1856 = vmatpush1.bf16.msra.mxu0 0
    %1857 = vmatprep.subr.bf16.mxu0 0
    %1858 = vmatpush1.bf16.msra.mxu0 0
    %1859 = vmatprep.subr.bf16.mxu0 0
    %1860 = vmatpush1.bf16.msra.mxu0 0
    %1861 = vmatprep.mubr.bf16.mxu0 0
    %1862 = vmatmul.mubr.bf16.gmra.mrb[0].mxu0 %v1824
    %v1863 = vpop.f32.mrb[0].mxu0
    %v1864 = vadd.f32 0.0, %v1863
    %v1865 = vpop.f32.mrb[0].mxu0
    %v1866 = vpop.f32.mrb[0].mxu0
    %v1867 = vpop.f32.mrb[0].mxu0
    %1868 = vdwg.mxu0
    %1869 = vrot.lane.b32.xlu0 %v1647, 120
    %v1870 = vpop.permute.xlu0 %1869
    %1871 = vrot.lane.b32.xlu0 %v1647, 88
    %v1872 = vpop.permute.xlu0 %1871
    %v1874 = vsel %vm209, %v1870, 0
    %v1877 = vsel %vm209, %v1872, 0
    %1879 = vmatprep.subr.bf16.mxu0 0
    %1880 = vmatpush1.bf16.xpose.msra.mxu0 %v1877
    %1881 = vmatprep.subr.bf16.mxu0 0
    %1882 = vmatpush1.bf16.xpose.msra.mxu0 0
    %1883 = vmatprep.subr.bf16.mxu0 0
    %1884 = vmatpush1.bf16.xpose.msra.mxu0 0
    %1885 = vmatprep.subr.bf16.mxu0 0
    %1886 = vmatpush1.bf16.xpose.msra.mxu0 0
    %1887 = vmatprep.subr.bf16.mxu0 0
    %1888 = vmatpush1.bf16.xpose.msra.mxu0 0
    %1889 = vmatprep.subr.bf16.mxu0 0
    %1890 = vmatpush1.bf16.xpose.msra.mxu0 0
    %1891 = vmatprep.subr.bf16.mxu0 0
    %1892 = vmatpush1.bf16.xpose.msra.mxu0 0
    %1893 = vmatprep.subr.bf16.mxu0 0
    %1894 = vmatpush1.bf16.xpose.msra.mxu0 0
    %1895 = vmatprep.subr.bf16.mxu0 0
    %1896 = vmatpush1.bf16.xpose.msra.mxu0 0
    %1897 = vmatprep.subr.bf16.mxu0 0
    %1898 = vmatpush1.bf16.xpose.msra.mxu0 0
    %1899 = vmatprep.subr.bf16.mxu0 0
    %1900 = vmatpush1.bf16.xpose.msra.mxu0 0
    %1901 = vmatprep.subr.bf16.mxu0 0
    %1902 = vmatpush1.bf16.xpose.msra.mxu0 0
    %1903 = vmatprep.subr.bf16.mxu0 0
    %1904 = vmatpush1.bf16.xpose.msra.mxu0 0
    %1905 = vmatprep.subr.bf16.mxu0 0
    %1906 = vmatpush1.bf16.xpose.msra.mxu0 0
    %1907 = vmatprep.subr.bf16.mxu0 0
    %1908 = vmatpush1.bf16.xpose.msra.mxu0 0
    %1909 = vmatprep.subr.bf16.mxu0 0
    %1910 = vmatpush1.bf16.xpose.msra.mxu0 0
    %1911 = vmatprep.mubr.bf16.mxu0 0
    %1912 = vmatmul.mubr.bf16.gmra.mrb[0].mxu0 %v1874
    %v1913 = vpop.f32.mrb[0].mxu0
    %v1914 = vadd.f32 0.0, %v1913
    %v1915 = vpop.f32.mrb[0].mxu0
    %v1916 = vpop.f32.mrb[0].mxu0
    %v1917 = vpop.f32.mrb[0].mxu0
    %1918 = vdwg.mxu0
    %1919 = vrot.lane.b32.xlu0 %v1648, 120
    %v1920 = vpop.permute.xlu0 %1919
    %1921 = vrot.lane.b32.xlu0 %v1648, 88
    %v1922 = vpop.permute.xlu0 %1921
    %v1924 = vsel %vm209, %v1920, 0
    %v1927 = vsel %vm209, %v1922, 0
    %1929 = vmatprep.subr.bf16.mxu0 0
    %1930 = vmatpush1.bf16.xpose.msra.mxu0 %v1927
    %1931 = vmatprep.subr.bf16.mxu0 0
    %1932 = vmatpush1.bf16.xpose.msra.mxu0 0
    %1933 = vmatprep.subr.bf16.mxu0 0
    %1934 = vmatpush1.bf16.xpose.msra.mxu0 0
    %1935 = vmatprep.subr.bf16.mxu0 0
    %1936 = vmatpush1.bf16.xpose.msra.mxu0 0
    %1937 = vmatprep.subr.bf16.mxu0 0
    %1938 = vmatpush1.bf16.xpose.msra.mxu0 0
    %1939 = vmatprep.subr.bf16.mxu0 0
    %1940 = vmatpush1.bf16.xpose.msra.mxu0 0
    %1941 = vmatprep.subr.bf16.mxu0 0
    %1942 = vmatpush1.bf16.xpose.msra.mxu0 0
    %1943 = vmatprep.subr.bf16.mxu0 0
    %1944 = vmatpush1.bf16.xpose.msra.mxu0 0
    %1945 = vmatprep.subr.bf16.mxu0 0
    %1946 = vmatpush1.bf16.xpose.msra.mxu0 0
    %1947 = vmatprep.subr.bf16.mxu0 0
    %1948 = vmatpush1.bf16.xpose.msra.mxu0 0
    %1949 = vmatprep.subr.bf16.mxu0 0
    %1950 = vmatpush1.bf16.xpose.msra.mxu0 0
    %1951 = vmatprep.subr.bf16.mxu0 0
    %1952 = vmatpush1.bf16.xpose.msra.mxu0 0
    %1953 = vmatprep.subr.bf16.mxu0 0
    %1954 = vmatpush1.bf16.xpose.msra.mxu0 0
    %1955 = vmatprep.subr.bf16.mxu0 0
    %1956 = vmatpush1.bf16.xpose.msra.mxu0 0
    %1957 = vmatprep.subr.bf16.mxu0 0
    %1958 = vmatpush1.bf16.xpose.msra.mxu0 0
    %1959 = vmatprep.subr.bf16.mxu0 0
    %1960 = vmatpush1.bf16.xpose.msra.mxu0 0
    %1961 = vmatprep.mubr.bf16.mxu0 0
    %1962 = vmatmul.mubr.bf16.gmra.mrb[0].mxu0 %v1924
    %v1963 = vpop.f32.mrb[0].mxu0
    %v1964 = vadd.f32 0.0, %v1963
    %v1965 = vpop.f32.mrb[0].mxu0
    %v1966 = vpop.f32.mrb[0].mxu0
    %v1967 = vpop.f32.mrb[0].mxu0
    %1968 = vdwg.mxu0
    %v1969 = vmul.f32 %v1914, 0.35355338
    %v1970 = vmul.f32 %v1964, 0.35355338
    %v1971 = vsel %vm209, %v1969, -inf
    %1972 = vmax.xlane.f32.xlu0 %v1971
    %v1973 = vpop.xlane.xlu0 %1972
    %v1974 = vsel %vm209, %v1970, -inf
    %1975 = vmax.xlane.f32.xlu0 %v1974
    %v1976 = vpop.xlane.xlu0 %1975
    %v1977 = vsub.f32 %v1969, %v1973
    %v1978 = vsub.f32 %v1970, %v1976
    %v1979 = vmul.f32 %v1977, 1.442695
    %v1980 = vpow.pop %v1979
    %v1981 = vmul.f32 %v1978, 1.442695
    %v1982 = vpow.pop %v1981
    %v1983 = vsel %vm209, %v1980, 0.0
    %1984 = vadd.xlane.f32.xlu0 %v1983
    %v1985 = vpop.xlane.xlu0 %1984
    %v1986 = vsel %vm209, %v1982, 0.0
    %1987 = vadd.xlane.f32.xlu0 %v1986
    %v1988 = vpop.xlane.xlu0 %1987
    %v1989 = vrcp.pop %v1985
    %v1990 = vmul.f32 %v1980, %v1989
    %v1991 = vrcp.pop %v1988
    %v1992 = vmul.f32 %v1982, %v1991
    %v1993 = vpack.c.bf16 %v1990, %v1990
    %v1994 = vpack.c.bf16 %v1992, %v1992
    %1995 = vrot.lane.b32.xlu0 %v1647, 56
    %v1996 = vpop.permute.xlu0 %1995
    %v1998 = vsel %vm209, %v1993, 0
    %v2001 = vsel %vm336, %v1996, 0
    %2003 = vmatprep.subr.bf16.mxu0 0
    %2004 = vmatpush1.bf16.msra.mxu0 %v2001
    %2005 = vmatprep.subr.bf16.mxu0 0
    %2006 = vmatpush1.bf16.msra.mxu0 0
    %2007 = vmatprep.subr.bf16.mxu0 0
    %2008 = vmatpush1.bf16.msra.mxu0 0
    %2009 = vmatprep.subr.bf16.mxu0 0
    %2010 = vmatpush1.bf16.msra.mxu0 0
    %2011 = vmatprep.subr.bf16.mxu0 0
    %2012 = vmatpush1.bf16.msra.mxu0 0
    %2013 = vmatprep.subr.bf16.mxu0 0
    %2014 = vmatpush1.bf16.msra.mxu0 0
    %2015 = vmatprep.subr.bf16.mxu0 0
    %2016 = vmatpush1.bf16.msra.mxu0 0
    %2017 = vmatprep.subr.bf16.mxu0 0
    %2018 = vmatpush1.bf16.msra.mxu0 0
    %2019 = vmatprep.subr.bf16.mxu0 0
    %2020 = vmatpush1.bf16.msra.mxu0 0
    %2021 = vmatprep.subr.bf16.mxu0 0
    %2022 = vmatpush1.bf16.msra.mxu0 0
    %2023 = vmatprep.subr.bf16.mxu0 0
    %2024 = vmatpush1.bf16.msra.mxu0 0
    %2025 = vmatprep.subr.bf16.mxu0 0
    %2026 = vmatpush1.bf16.msra.mxu0 0
    %2027 = vmatprep.subr.bf16.mxu0 0
    %2028 = vmatpush1.bf16.msra.mxu0 0
    %2029 = vmatprep.subr.bf16.mxu0 0
    %2030 = vmatpush1.bf16.msra.mxu0 0
    %2031 = vmatprep.subr.bf16.mxu0 0
    %2032 = vmatpush1.bf16.msra.mxu0 0
    %2033 = vmatprep.subr.bf16.mxu0 0
    %2034 = vmatpush1.bf16.msra.mxu0 0
    %2035 = vmatprep.mubr.bf16.mxu0 0
    %2036 = vmatmul.mubr.bf16.gmra.mrb[0].mxu0 %v1998
    %v2037 = vpop.f32.mrb[0].mxu0
    %v2038 = vadd.f32 0.0, %v2037
    %v2039 = vpop.f32.mrb[0].mxu0
    %v2040 = vpop.f32.mrb[0].mxu0
    %v2041 = vpop.f32.mrb[0].mxu0
    %2042 = vdwg.mxu0
    %2043 = vrot.lane.b32.xlu0 %v1648, 56
    %v2044 = vpop.permute.xlu0 %2043
    %v2046 = vsel %vm209, %v1994, 0
    %v2049 = vsel %vm336, %v2044, 0
    %2051 = vmatprep.subr.bf16.mxu0 0
    %2052 = vmatpush1.bf16.msra.mxu0 %v2049
    %2053 = vmatprep.subr.bf16.mxu0 0
    %2054 = vmatpush1.bf16.msra.mxu0 0
    %2055 = vmatprep.subr.bf16.mxu0 0
    %2056 = vmatpush1.bf16.msra.mxu0 0
    %2057 = vmatprep.subr.bf16.mxu0 0
    %2058 = vmatpush1.bf16.msra.mxu0 0
    %2059 = vmatprep.subr.bf16.mxu0 0
    %2060 = vmatpush1.bf16.msra.mxu0 0
    %2061 = vmatprep.subr.bf16.mxu0 0
    %2062 = vmatpush1.bf16.msra.mxu0 0
    %2063 = vmatprep.subr.bf16.mxu0 0
    %2064 = vmatpush1.bf16.msra.mxu0 0
    %2065 = vmatprep.subr.bf16.mxu0 0
    %2066 = vmatpush1.bf16.msra.mxu0 0
    %2067 = vmatprep.subr.bf16.mxu0 0
    %2068 = vmatpush1.bf16.msra.mxu0 0
    %2069 = vmatprep.subr.bf16.mxu0 0
    %2070 = vmatpush1.bf16.msra.mxu0 0
    %2071 = vmatprep.subr.bf16.mxu0 0
    %2072 = vmatpush1.bf16.msra.mxu0 0
    %2073 = vmatprep.subr.bf16.mxu0 0
    %2074 = vmatpush1.bf16.msra.mxu0 0
    %2075 = vmatprep.subr.bf16.mxu0 0
    %2076 = vmatpush1.bf16.msra.mxu0 0
    %2077 = vmatprep.subr.bf16.mxu0 0
    %2078 = vmatpush1.bf16.msra.mxu0 0
    %2079 = vmatprep.subr.bf16.mxu0 0
    %2080 = vmatpush1.bf16.msra.mxu0 0
    %2081 = vmatprep.subr.bf16.mxu0 0
    %2082 = vmatpush1.bf16.msra.mxu0 0
    %2083 = vmatprep.mubr.bf16.mxu0 0
    %2084 = vmatmul.mubr.bf16.gmra.mrb[0].mxu0 %v2046
    %v2085 = vpop.f32.mrb[0].mxu0
    %v2086 = vadd.f32 0.0, %v2085
    %v2087 = vpop.f32.mrb[0].mxu0
    %v2088 = vpop.f32.mrb[0].mxu0
    %v2089 = vpop.f32.mrb[0].mxu0
    %2090 = vdwg.mxu0
    %2091 = vrot.lane.b32.xlu0 %v1647, 112
    %v2092 = vpop.permute.xlu0 %2091
    %2093 = vrot.lane.b32.xlu0 %v1647, 80
    %v2094 = vpop.permute.xlu0 %2093
    %v2096 = vsel %vm209, %v2092, 0
    %v2099 = vsel %vm209, %v2094, 0
    %2101 = vmatprep.subr.bf16.mxu0 0
    %2102 = vmatpush1.bf16.xpose.msra.mxu0 %v2099
    %2103 = vmatprep.subr.bf16.mxu0 0
    %2104 = vmatpush1.bf16.xpose.msra.mxu0 0
    %2105 = vmatprep.subr.bf16.mxu0 0
    %2106 = vmatpush1.bf16.xpose.msra.mxu0 0
    %2107 = vmatprep.subr.bf16.mxu0 0
    %2108 = vmatpush1.bf16.xpose.msra.mxu0 0
    %2109 = vmatprep.subr.bf16.mxu0 0
    %2110 = vmatpush1.bf16.xpose.msra.mxu0 0
    %2111 = vmatprep.subr.bf16.mxu0 0
    %2112 = vmatpush1.bf16.xpose.msra.mxu0 0
    %2113 = vmatprep.subr.bf16.mxu0 0
    %2114 = vmatpush1.bf16.xpose.msra.mxu0 0
    %2115 = vmatprep.subr.bf16.mxu0 0
    %2116 = vmatpush1.bf16.xpose.msra.mxu0 0
    %2117 = vmatprep.subr.bf16.mxu0 0
    %2118 = vmatpush1.bf16.xpose.msra.mxu0 0
    %2119 = vmatprep.subr.bf16.mxu0 0
    %2120 = vmatpush1.bf16.xpose.msra.mxu0 0
    %2121 = vmatprep.subr.bf16.mxu0 0
    %2122 = vmatpush1.bf16.xpose.msra.mxu0 0
    %2123 = vmatprep.subr.bf16.mxu0 0
    %2124 = vmatpush1.bf16.xpose.msra.mxu0 0
    %2125 = vmatprep.subr.bf16.mxu0 0
    %2126 = vmatpush1.bf16.xpose.msra.mxu0 0
    %2127 = vmatprep.subr.bf16.mxu0 0
    %2128 = vmatpush1.bf16.xpose.msra.mxu0 0
    %2129 = vmatprep.subr.bf16.mxu0 0
    %2130 = vmatpush1.bf16.xpose.msra.mxu0 0
    %2131 = vmatprep.subr.bf16.mxu0 0
    %2132 = vmatpush1.bf16.xpose.msra.mxu0 0
    %2133 = vmatprep.mubr.bf16.mxu0 0
    %2134 = vmatmul.mubr.bf16.gmra.mrb[0].mxu0 %v2096
    %v2135 = vpop.f32.mrb[0].mxu0
    %v2136 = vadd.f32 0.0, %v2135
    %v2137 = vpop.f32.mrb[0].mxu0
    %v2138 = vpop.f32.mrb[0].mxu0
    %v2139 = vpop.f32.mrb[0].mxu0
    %2140 = vdwg.mxu0
    %2141 = vrot.lane.b32.xlu0 %v1648, 112
    %v2142 = vpop.permute.xlu0 %2141
    %2143 = vrot.lane.b32.xlu0 %v1648, 80
    %v2144 = vpop.permute.xlu0 %2143
    %v2146 = vsel %vm209, %v2142, 0
    %v2149 = vsel %vm209, %v2144, 0
    %2151 = vmatprep.subr.bf16.mxu0 0
    %2152 = vmatpush1.bf16.xpose.msra.mxu0 %v2149
    %2153 = vmatprep.subr.bf16.mxu0 0
    %2154 = vmatpush1.bf16.xpose.msra.mxu0 0
    %2155 = vmatprep.subr.bf16.mxu0 0
    %2156 = vmatpush1.bf16.xpose.msra.mxu0 0
    %2157 = vmatprep.subr.bf16.mxu0 0
    %2158 = vmatpush1.bf16.xpose.msra.mxu0 0
    %2159 = vmatprep.subr.bf16.mxu0 0
    %2160 = vmatpush1.bf16.xpose.msra.mxu0 0
    %2161 = vmatprep.subr.bf16.mxu0 0
    %2162 = vmatpush1.bf16.xpose.msra.mxu0 0
    %2163 = vmatprep.subr.bf16.mxu0 0
    %2164 = vmatpush1.bf16.xpose.msra.mxu0 0
    %2165 = vmatprep.subr.bf16.mxu0 0
    %2166 = vmatpush1.bf16.xpose.msra.mxu0 0
    %2167 = vmatprep.subr.bf16.mxu0 0
    %2168 = vmatpush1.bf16.xpose.msra.mxu0 0
    %2169 = vmatprep.subr.bf16.mxu0 0
    %2170 = vmatpush1.bf16.xpose.msra.mxu0 0
    %2171 = vmatprep.subr.bf16.mxu0 0
    %2172 = vmatpush1.bf16.xpose.msra.mxu0 0
    %2173 = vmatprep.subr.bf16.mxu0 0
    %2174 = vmatpush1.bf16.xpose.msra.mxu0 0
    %2175 = vmatprep.subr.bf16.mxu0 0
    %2176 = vmatpush1.bf16.xpose.msra.mxu0 0
    %2177 = vmatprep.subr.bf16.mxu0 0
    %2178 = vmatpush1.bf16.xpose.msra.mxu0 0
    %2179 = vmatprep.subr.bf16.mxu0 0
    %2180 = vmatpush1.bf16.xpose.msra.mxu0 0
    %2181 = vmatprep.subr.bf16.mxu0 0
    %2182 = vmatpush1.bf16.xpose.msra.mxu0 0
    %2183 = vmatprep.mubr.bf16.mxu0 0
    %2184 = vmatmul.mubr.bf16.gmra.mrb[0].mxu0 %v2146
    %v2185 = vpop.f32.mrb[0].mxu0
    %v2186 = vadd.f32 0.0, %v2185
    %v2187 = vpop.f32.mrb[0].mxu0
    %v2188 = vpop.f32.mrb[0].mxu0
    %v2189 = vpop.f32.mrb[0].mxu0
    %2190 = vdwg.mxu0
    %v2191 = vmul.f32 %v2136, 0.35355338
    %v2192 = vmul.f32 %v2186, 0.35355338
    %v2193 = vsel %vm209, %v2191, -inf
    %2194 = vmax.xlane.f32.xlu0 %v2193
    %v2195 = vpop.xlane.xlu0 %2194
    %v2196 = vsel %vm209, %v2192, -inf
    %2197 = vmax.xlane.f32.xlu0 %v2196
    %v2198 = vpop.xlane.xlu0 %2197
    %v2199 = vsub.f32 %v2191, %v2195
    %v2200 = vsub.f32 %v2192, %v2198
    %v2201 = vmul.f32 %v2199, 1.442695
    %v2202 = vpow.pop %v2201
    %v2203 = vmul.f32 %v2200, 1.442695
    %v2204 = vpow.pop %v2203
    %v2205 = vsel %vm209, %v2202, 0.0
    %2206 = vadd.xlane.f32.xlu0 %v2205
    %v2207 = vpop.xlane.xlu0 %2206
    %v2208 = vsel %vm209, %v2204, 0.0
    %2209 = vadd.xlane.f32.xlu0 %v2208
    %v2210 = vpop.xlane.xlu0 %2209
    %v2211 = vrcp.pop %v2207
    %v2212 = vmul.f32 %v2202, %v2211
    %v2213 = vrcp.pop %v2210
    %v2214 = vmul.f32 %v2204, %v2213
    %v2215 = vpack.c.bf16 %v2212, %v2212
    %v2216 = vpack.c.bf16 %v2214, %v2214
    %2217 = vrot.lane.b32.xlu0 %v1647, 48
    %v2218 = vpop.permute.xlu0 %2217
    %v2220 = vsel %vm209, %v2215, 0
    %v2223 = vsel %vm336, %v2218, 0
    %2225 = vmatprep.subr.bf16.mxu0 0
    %2226 = vmatpush1.bf16.msra.mxu0 %v2223
    %2227 = vmatprep.subr.bf16.mxu0 0
    %2228 = vmatpush1.bf16.msra.mxu0 0
    %2229 = vmatprep.subr.bf16.mxu0 0
    %2230 = vmatpush1.bf16.msra.mxu0 0
    %2231 = vmatprep.subr.bf16.mxu0 0
    %2232 = vmatpush1.bf16.msra.mxu0 0
    %2233 = vmatprep.subr.bf16.mxu0 0
    %2234 = vmatpush1.bf16.msra.mxu0 0
    %2235 = vmatprep.subr.bf16.mxu0 0
    %2236 = vmatpush1.bf16.msra.mxu0 0
    %2237 = vmatprep.subr.bf16.mxu0 0
    %2238 = vmatpush1.bf16.msra.mxu0 0
    %2239 = vmatprep.subr.bf16.mxu0 0
    %2240 = vmatpush1.bf16.msra.mxu0 0
    %2241 = vmatprep.subr.bf16.mxu0 0
    %2242 = vmatpush1.bf16.msra.mxu0 0
    %2243 = vmatprep.subr.bf16.mxu0 0
    %2244 = vmatpush1.bf16.msra.mxu0 0
    %2245 = vmatprep.subr.bf16.mxu0 0
    %2246 = vmatpush1.bf16.msra.mxu0 0
    %2247 = vmatprep.subr.bf16.mxu0 0
    %2248 = vmatpush1.bf16.msra.mxu0 0
    %2249 = vmatprep.subr.bf16.mxu0 0
    %2250 = vmatpush1.bf16.msra.mxu0 0
    %2251 = vmatprep.subr.bf16.mxu0 0
    %2252 = vmatpush1.bf16.msra.mxu0 0
    %2253 = vmatprep.subr.bf16.mxu0 0
    %2254 = vmatpush1.bf16.msra.mxu0 0
    %2255 = vmatprep.subr.bf16.mxu0 0
    %2256 = vmatpush1.bf16.msra.mxu0 0
    %2257 = vmatprep.mubr.bf16.mxu0 0
    %2258 = vmatmul.mubr.bf16.gmra.mrb[0].mxu0 %v2220
    %v2259 = vpop.f32.mrb[0].mxu0
    %v2260 = vadd.f32 0.0, %v2259
    %v2261 = vpop.f32.mrb[0].mxu0
    %v2262 = vpop.f32.mrb[0].mxu0
    %v2263 = vpop.f32.mrb[0].mxu0
    %2264 = vdwg.mxu0
    %2265 = vrot.lane.b32.xlu0 %v1648, 48
    %v2266 = vpop.permute.xlu0 %2265
    %v2268 = vsel %vm209, %v2216, 0
    %v2271 = vsel %vm336, %v2266, 0
    %2273 = vmatprep.subr.bf16.mxu0 0
    %2274 = vmatpush1.bf16.msra.mxu0 %v2271
    %2275 = vmatprep.subr.bf16.mxu0 0
    %2276 = vmatpush1.bf16.msra.mxu0 0
    %2277 = vmatprep.subr.bf16.mxu0 0
    %2278 = vmatpush1.bf16.msra.mxu0 0
    %2279 = vmatprep.subr.bf16.mxu0 0
    %2280 = vmatpush1.bf16.msra.mxu0 0
    %2281 = vmatprep.subr.bf16.mxu0 0
    %2282 = vmatpush1.bf16.msra.mxu0 0
    %2283 = vmatprep.subr.bf16.mxu0 0
    %2284 = vmatpush1.bf16.msra.mxu0 0
    %2285 = vmatprep.subr.bf16.mxu0 0
    %2286 = vmatpush1.bf16.msra.mxu0 0
    %2287 = vmatprep.subr.bf16.mxu0 0
    %2288 = vmatpush1.bf16.msra.mxu0 0
    %2289 = vmatprep.subr.bf16.mxu0 0
    %2290 = vmatpush1.bf16.msra.mxu0 0
    %2291 = vmatprep.subr.bf16.mxu0 0
    %2292 = vmatpush1.bf16.msra.mxu0 0
    %2293 = vmatprep.subr.bf16.mxu0 0
    %2294 = vmatpush1.bf16.msra.mxu0 0
    %2295 = vmatprep.subr.bf16.mxu0 0
    %2296 = vmatpush1.bf16.msra.mxu0 0
    %2297 = vmatprep.subr.bf16.mxu0 0
    %2298 = vmatpush1.bf16.msra.mxu0 0
    %2299 = vmatprep.subr.bf16.mxu0 0
    %2300 = vmatpush1.bf16.msra.mxu0 0
    %2301 = vmatprep.subr.bf16.mxu0 0
    %2302 = vmatpush1.bf16.msra.mxu0 0
    %2303 = vmatprep.subr.bf16.mxu0 0
    %2304 = vmatpush1.bf16.msra.mxu0 0
    %2305 = vmatprep.mubr.bf16.mxu0 0
    %2306 = vmatmul.mubr.bf16.gmra.mrb[0].mxu0 %v2268
    %v2307 = vpop.f32.mrb[0].mxu0
    %v2308 = vadd.f32 0.0, %v2307
    %v2309 = vpop.f32.mrb[0].mxu0
    %v2310 = vpop.f32.mrb[0].mxu0
    %v2311 = vpop.f32.mrb[0].mxu0
    %2312 = vdwg.mxu0
    %2313 = vrot.lane.b32.xlu0 %v1647, 104
    %v2314 = vpop.permute.xlu0 %2313
    %2315 = vrot.lane.b32.xlu0 %v1647, 72
    %v2316 = vpop.permute.xlu0 %2315
    %v2318 = vsel %vm209, %v2314, 0
    %v2321 = vsel %vm209, %v2316, 0
    %2323 = vmatprep.subr.bf16.mxu0 0
    %2324 = vmatpush1.bf16.xpose.msra.mxu0 %v2321
    %2325 = vmatprep.subr.bf16.mxu0 0
    %2326 = vmatpush1.bf16.xpose.msra.mxu0 0
    %2327 = vmatprep.subr.bf16.mxu0 0
    %2328 = vmatpush1.bf16.xpose.msra.mxu0 0
    %2329 = vmatprep.subr.bf16.mxu0 0
    %2330 = vmatpush1.bf16.xpose.msra.mxu0 0
    %2331 = vmatprep.subr.bf16.mxu0 0
    %2332 = vmatpush1.bf16.xpose.msra.mxu0 0
    %2333 = vmatprep.subr.bf16.mxu0 0
    %2334 = vmatpush1.bf16.xpose.msra.mxu0 0
    %2335 = vmatprep.subr.bf16.mxu0 0
    %2336 = vmatpush1.bf16.xpose.msra.mxu0 0
    %2337 = vmatprep.subr.bf16.mxu0 0
    %2338 = vmatpush1.bf16.xpose.msra.mxu0 0
    %2339 = vmatprep.subr.bf16.mxu0 0
    %2340 = vmatpush1.bf16.xpose.msra.mxu0 0
    %2341 = vmatprep.subr.bf16.mxu0 0
    %2342 = vmatpush1.bf16.xpose.msra.mxu0 0
    %2343 = vmatprep.subr.bf16.mxu0 0
    %2344 = vmatpush1.bf16.xpose.msra.mxu0 0
    %2345 = vmatprep.subr.bf16.mxu0 0
    %2346 = vmatpush1.bf16.xpose.msra.mxu0 0
    %2347 = vmatprep.subr.bf16.mxu0 0
    %2348 = vmatpush1.bf16.xpose.msra.mxu0 0
    %2349 = vmatprep.subr.bf16.mxu0 0
    %2350 = vmatpush1.bf16.xpose.msra.mxu0 0
    %2351 = vmatprep.subr.bf16.mxu0 0
    %2352 = vmatpush1.bf16.xpose.msra.mxu0 0
    %2353 = vmatprep.subr.bf16.mxu0 0
    %2354 = vmatpush1.bf16.xpose.msra.mxu0 0
    %2355 = vmatprep.mubr.bf16.mxu0 0
    %2356 = vmatmul.mubr.bf16.gmra.mrb[0].mxu0 %v2318
    %v2357 = vpop.f32.mrb[0].mxu0
    %v2358 = vadd.f32 0.0, %v2357
    %v2359 = vpop.f32.mrb[0].mxu0
    %v2360 = vpop.f32.mrb[0].mxu0
    %v2361 = vpop.f32.mrb[0].mxu0
    %2362 = vdwg.mxu0
    %2363 = vrot.lane.b32.xlu0 %v1648, 104
    %v2364 = vpop.permute.xlu0 %2363
    %2365 = vrot.lane.b32.xlu0 %v1648, 72
    %v2366 = vpop.permute.xlu0 %2365
    %v2368 = vsel %vm209, %v2364, 0
    %v2371 = vsel %vm209, %v2366, 0
    %2373 = vmatprep.subr.bf16.mxu0 0
    %2374 = vmatpush1.bf16.xpose.msra.mxu0 %v2371
    %2375 = vmatprep.subr.bf16.mxu0 0
    %2376 = vmatpush1.bf16.xpose.msra.mxu0 0
    %2377 = vmatprep.subr.bf16.mxu0 0
    %2378 = vmatpush1.bf16.xpose.msra.mxu0 0
    %2379 = vmatprep.subr.bf16.mxu0 0
    %2380 = vmatpush1.bf16.xpose.msra.mxu0 0
    %2381 = vmatprep.subr.bf16.mxu0 0
    %2382 = vmatpush1.bf16.xpose.msra.mxu0 0
    %2383 = vmatprep.subr.bf16.mxu0 0
    %2384 = vmatpush1.bf16.xpose.msra.mxu0 0
    %2385 = vmatprep.subr.bf16.mxu0 0
    %2386 = vmatpush1.bf16.xpose.msra.mxu0 0
    %2387 = vmatprep.subr.bf16.mxu0 0
    %2388 = vmatpush1.bf16.xpose.msra.mxu0 0
    %2389 = vmatprep.subr.bf16.mxu0 0
    %2390 = vmatpush1.bf16.xpose.msra.mxu0 0
    %2391 = vmatprep.subr.bf16.mxu0 0
    %2392 = vmatpush1.bf16.xpose.msra.mxu0 0
    %2393 = vmatprep.subr.bf16.mxu0 0
    %2394 = vmatpush1.bf16.xpose.msra.mxu0 0
    %2395 = vmatprep.subr.bf16.mxu0 0
    %2396 = vmatpush1.bf16.xpose.msra.mxu0 0
    %2397 = vmatprep.subr.bf16.mxu0 0
    %2398 = vmatpush1.bf16.xpose.msra.mxu0 0
    %2399 = vmatprep.subr.bf16.mxu0 0
    %2400 = vmatpush1.bf16.xpose.msra.mxu0 0
    %2401 = vmatprep.subr.bf16.mxu0 0
    %2402 = vmatpush1.bf16.xpose.msra.mxu0 0
    %2403 = vmatprep.subr.bf16.mxu0 0
    %2404 = vmatpush1.bf16.xpose.msra.mxu0 0
    %2405 = vmatprep.mubr.bf16.mxu0 0
    %2406 = vmatmul.mubr.bf16.gmra.mrb[0].mxu0 %v2368
    %v2407 = vpop.f32.mrb[0].mxu0
    %v2408 = vadd.f32 0.0, %v2407
    %v2409 = vpop.f32.mrb[0].mxu0
    %v2410 = vpop.f32.mrb[0].mxu0
    %v2411 = vpop.f32.mrb[0].mxu0
    %2412 = vdwg.mxu0
    %v2413 = vmul.f32 %v2358, 0.35355338
    %v2414 = vmul.f32 %v2408, 0.35355338
    %v2415 = vsel %vm209, %v2413, -inf
    %2416 = vmax.xlane.f32.xlu0 %v2415
    %v2417 = vpop.xlane.xlu0 %2416
    %v2418 = vsel %vm209, %v2414, -inf
    %2419 = vmax.xlane.f32.xlu0 %v2418
    %v2420 = vpop.xlane.xlu0 %2419
    %v2421 = vsub.f32 %v2413, %v2417
    %v2422 = vsub.f32 %v2414, %v2420
    %v2423 = vmul.f32 %v2421, 1.442695
    %v2424 = vpow.pop %v2423
    %v2425 = vmul.f32 %v2422, 1.442695
    %v2426 = vpow.pop %v2425
    %v2427 = vsel %vm209, %v2424, 0.0
    %2428 = vadd.xlane.f32.xlu0 %v2427
    %v2429 = vpop.xlane.xlu0 %2428
    %v2430 = vsel %vm209, %v2426, 0.0
    %2431 = vadd.xlane.f32.xlu0 %v2430
    %v2432 = vpop.xlane.xlu0 %2431
    %v2433 = vrcp.pop %v2429
    %v2434 = vmul.f32 %v2424, %v2433
    %v2435 = vrcp.pop %v2432
    %v2436 = vmul.f32 %v2426, %v2435
    %v2437 = vpack.c.bf16 %v2434, %v2434
    %v2438 = vpack.c.bf16 %v2436, %v2436
    %2439 = vrot.lane.b32.xlu0 %v1647, 40
    %v2440 = vpop.permute.xlu0 %2439
    %v2442 = vsel %vm209, %v2437, 0
    %v2445 = vsel %vm336, %v2440, 0
    %2447 = vmatprep.subr.bf16.mxu0 0
    %2448 = vmatpush1.bf16.msra.mxu0 %v2445
    %2449 = vmatprep.subr.bf16.mxu0 0
    %2450 = vmatpush1.bf16.msra.mxu0 0
    %2451 = vmatprep.subr.bf16.mxu0 0
    %2452 = vmatpush1.bf16.msra.mxu0 0
    %2453 = vmatprep.subr.bf16.mxu0 0
    %2454 = vmatpush1.bf16.msra.mxu0 0
    %2455 = vmatprep.subr.bf16.mxu0 0
    %2456 = vmatpush1.bf16.msra.mxu0 0
    %2457 = vmatprep.subr.bf16.mxu0 0
    %2458 = vmatpush1.bf16.msra.mxu0 0
    %2459 = vmatprep.subr.bf16.mxu0 0
    %2460 = vmatpush1.bf16.msra.mxu0 0
    %2461 = vmatprep.subr.bf16.mxu0 0
    %2462 = vmatpush1.bf16.msra.mxu0 0
    %2463 = vmatprep.subr.bf16.mxu0 0
    %2464 = vmatpush1.bf16.msra.mxu0 0
    %2465 = vmatprep.subr.bf16.mxu0 0
    %2466 = vmatpush1.bf16.msra.mxu0 0
    %2467 = vmatprep.subr.bf16.mxu0 0
    %2468 = vmatpush1.bf16.msra.mxu0 0
    %2469 = vmatprep.subr.bf16.mxu0 0
    %2470 = vmatpush1.bf16.msra.mxu0 0
    %2471 = vmatprep.subr.bf16.mxu0 0
    %2472 = vmatpush1.bf16.msra.mxu0 0
    %2473 = vmatprep.subr.bf16.mxu0 0
    %2474 = vmatpush1.bf16.msra.mxu0 0
    %2475 = vmatprep.subr.bf16.mxu0 0
    %2476 = vmatpush1.bf16.msra.mxu0 0
    %2477 = vmatprep.subr.bf16.mxu0 0
    %2478 = vmatpush1.bf16.msra.mxu0 0
    %2479 = vmatprep.mubr.bf16.mxu0 0
    %2480 = vmatmul.mubr.bf16.gmra.mrb[0].mxu0 %v2442
    %v2481 = vpop.f32.mrb[0].mxu0
    %v2482 = vadd.f32 0.0, %v2481
    %v2483 = vpop.f32.mrb[0].mxu0
    %v2484 = vpop.f32.mrb[0].mxu0
    %v2485 = vpop.f32.mrb[0].mxu0
    %2486 = vdwg.mxu0
    %2487 = vrot.lane.b32.xlu0 %v1648, 40
    %v2488 = vpop.permute.xlu0 %2487
    %v2490 = vsel %vm209, %v2438, 0
    %v2493 = vsel %vm336, %v2488, 0
    %2495 = vmatprep.subr.bf16.mxu0 0
    %2496 = vmatpush1.bf16.msra.mxu0 %v2493
    %2497 = vmatprep.subr.bf16.mxu0 0
    %2498 = vmatpush1.bf16.msra.mxu0 0
    %2499 = vmatprep.subr.bf16.mxu0 0
    %2500 = vmatpush1.bf16.msra.mxu0 0
    %2501 = vmatprep.subr.bf16.mxu0 0
    %2502 = vmatpush1.bf16.msra.mxu0 0
    %2503 = vmatprep.subr.bf16.mxu0 0
    %2504 = vmatpush1.bf16.msra.mxu0 0
    %2505 = vmatprep.subr.bf16.mxu0 0
    %2506 = vmatpush1.bf16.msra.mxu0 0
    %2507 = vmatprep.subr.bf16.mxu0 0
    %2508 = vmatpush1.bf16.msra.mxu0 0
    %2509 = vmatprep.subr.bf16.mxu0 0
    %2510 = vmatpush1.bf16.msra.mxu0 0
    %2511 = vmatprep.subr.bf16.mxu0 0
    %2512 = vmatpush1.bf16.msra.mxu0 0
    %2513 = vmatprep.subr.bf16.mxu0 0
    %2514 = vmatpush1.bf16.msra.mxu0 0
    %2515 = vmatprep.subr.bf16.mxu0 0
    %2516 = vmatpush1.bf16.msra.mxu0 0
    %2517 = vmatprep.subr.bf16.mxu0 0
    %2518 = vmatpush1.bf16.msra.mxu0 0
    %2519 = vmatprep.subr.bf16.mxu0 0
    %2520 = vmatpush1.bf16.msra.mxu0 0
    %2521 = vmatprep.subr.bf16.mxu0 0
    %2522 = vmatpush1.bf16.msra.mxu0 0
    %2523 = vmatprep.subr.bf16.mxu0 0
    %2524 = vmatpush1.bf16.msra.mxu0 0
    %2525 = vmatprep.subr.bf16.mxu0 0
    %2526 = vmatpush1.bf16.msra.mxu0 0
    %2527 = vmatprep.mubr.bf16.mxu0 0
    %2528 = vmatmul.mubr.bf16.gmra.mrb[0].mxu0 %v2490
    %v2529 = vpop.f32.mrb[0].mxu0
    %v2530 = vadd.f32 0.0, %v2529
    %v2531 = vpop.f32.mrb[0].mxu0
    %v2532 = vpop.f32.mrb[0].mxu0
    %v2533 = vpop.f32.mrb[0].mxu0
    %2534 = vdwg.mxu0
    %2537 = vrot.lane.b32.xlu0 %v2038, 8
    %v2538 = vpop.permute.xlu0 %2537
    %2539 = vrot.lane.b32.xlu0 %v2086, 8
    %v2540 = vpop.permute.xlu0 %2539
    %2545 = vrot.lane.b32.xlu0 %v2260, 16
    %v2546 = vpop.permute.xlu0 %2545
    %2547 = vrot.lane.b32.xlu0 %v2308, 16
    %v2548 = vpop.permute.xlu0 %2547
    %2553 = vrot.lane.b32.xlu0 %v2482, 24
    %v2554 = vpop.permute.xlu0 %2553
    %2555 = vrot.lane.b32.xlu0 %v2530, 24
    %v2556 = vpop.permute.xlu0 %2555
    %v2559 = vsel %vm209, %v1816, %v2538
    %v2560 = vsel %vm209, %v1864, %v2540
    %v2561 = vsel %vm1120, %v2559, %v2546
    %v2562 = vsel %vm1120, %v2560, %v2548
    %v2563 = vsel %vm1123, %v2561, %v2554
    %v2564 = vsel %vm1123, %v2562, %v2556
    %v2565 = vpack.c.bf16 %v2564, %v2563
    %s2566 = scalar_lea.vmem %s5, 16
    %v2567 = vld [vmem:[%s2566] sm:$0xf]
    %v2568 = vld [vmem:[%s2566 + $0x4] sm:$0xf]
    %v2569 = vld [vmem:[%s2566 + $0x8] sm:$0xf]
    %v2570 = vld [vmem:[%s2566 + $0xc] sm:$0xf]
    %v2575 = vunpack.c.l.b16 %v2567
    %v2576 = vunpack.c.l.b16 %v2568
    %v2577 = vunpack.c.l.b16 %v2569
    %v2578 = vunpack.c.l.b16 %v2570
    %v2579 = vpack.c.b16 %v2576, %v2575
    %v2580 = vpack.c.b16 %v2578, %v2577
    %v2584 = vsel %vm71, %v2565, 0
    %2586 = vmatprep.subr.bf16.mxu0 0
    %2587 = vmatpush1.bf16.msra.mxu0 %v2579
    %2588 = vmatprep.subr.bf16.mxu0 0
    %2589 = vmatpush1.bf16.msra.mxu0 %v2580
    %2590 = vmatprep.subr.bf16.mxu0 0
    %2591 = vmatpush1.bf16.msra.mxu0 0
    %2592 = vmatprep.subr.bf16.mxu0 0
    %2593 = vmatpush1.bf16.msra.mxu0 0
    %2594 = vmatprep.subr.bf16.mxu0 0
    %2595 = vmatpush1.bf16.msra.mxu0 0
    %2596 = vmatprep.subr.bf16.mxu0 0
    %2597 = vmatpush1.bf16.msra.mxu0 0
    %2598 = vmatprep.subr.bf16.mxu0 0
    %2599 = vmatpush1.bf16.msra.mxu0 0
    %2600 = vmatprep.subr.bf16.mxu0 0
    %2601 = vmatpush1.bf16.msra.mxu0 0
    %2602 = vmatprep.subr.bf16.mxu0 0
    %2603 = vmatpush1.bf16.msra.mxu0 0
    %2604 = vmatprep.subr.bf16.mxu0 0
    %2605 = vmatpush1.bf16.msra.mxu0 0
    %2606 = vmatprep.subr.bf16.mxu0 0
    %2607 = vmatpush1.bf16.msra.mxu0 0
    %2608 = vmatprep.subr.bf16.mxu0 0
    %2609 = vmatpush1.bf16.msra.mxu0 0
    %2610 = vmatprep.subr.bf16.mxu0 0
    %2611 = vmatpush1.bf16.msra.mxu0 0
    %2612 = vmatprep.subr.bf16.mxu0 0
    %2613 = vmatpush1.bf16.msra.mxu0 0
    %2614 = vmatprep.subr.bf16.mxu0 0
    %2615 = vmatpush1.bf16.msra.mxu0 0
    %2616 = vmatprep.subr.bf16.mxu0 0
    %2617 = vmatpush1.bf16.msra.mxu0 0
    %2618 = vmatprep.mubr.bf16.mxu0 0
    %2619 = vmatmul.mubr.bf16.gmra.mrb[0].mxu0 %v2584
    %v2620 = vpop.f32.mrb[0].mxu0
    %v2621 = vadd.f32 0.0, %v2620
    %v2622 = vpop.f32.mrb[0].mxu0
    %v2623 = vpop.f32.mrb[0].mxu0
    %v2624 = vadd.f32 0.0, %v2623
    %v2625 = vpop.f32.mrb[0].mxu0
    %2626 = vdwg.mxu0
    %v2627 = vadd.f32 %v1560, %v2621
    %v2628 = vadd.f32 %v1561, %v2624
    %v2629 = vld [vmem:[%s3 + $0x3] sm:$0x1]
    %v2630 = vmul.f32 %v2627, %v2627
    %v2631 = vmul.f32 %v2628, %v2628
    %v2632 = vsel %vm71, %v2630, 0.0
    %2633 = vadd.xlane.f32.xlu0 %v2632
    %v2634 = vpop.xlane.xlu0 %2633
    %v2635 = vsel %vm71, %v2631, 0.0
    %2636 = vadd.xlane.f32.xlu0 %v2635
    %v2637 = vpop.xlane.xlu0 %2636
    %v2638 = vmul.f32 %v2634, %v128
    %v2639 = vmul.f32 %v2637, %v128
    %v2640 = vadd.f32 %v2638, 1e-06
    %v2641 = vadd.f32 %v2639, 1e-06
    %v2642 = vrsqrt.pop %v2640
    %v2643 = vrsqrt.pop %v2641
    %v2644 = vmul.f32 %v2627, %v2642
    %v2645 = vmul.f32 %v2628, %v2643
    %v2646 = vlaneseq
    %v2647 = vshrl.u32 %v2646, 7
    %v2648 = vsub.s32 0, %v2647
    %v2649 = vrot.slane %v2629, %v2648
    %v2650 = vmul.f32 %v2644, %v2649
    %v2651 = vmul.f32 %v2645, %v2649
    %v2652 = vpack.c.bf16 %v2651, %v2650
    %s2653 = scalar_lea.vmem %s6, 16
    %v2654 = vld [vmem:[%s2653] sm:$0xf]
    %v2655 = vld [vmem:[%s2653 + $0x4] sm:$0xf]
    %v2656 = vld [vmem:[%s2653 + $0x8] sm:$0xf]
    %v2657 = vld [vmem:[%s2653 + $0xc] sm:$0xf]
    %v2662 = vunpack.c.l.b16 %v2654
    %v2663 = vunpack.c.l.b16 %v2655
    %v2664 = vunpack.c.l.b16 %v2656
    %v2665 = vunpack.c.l.b16 %v2657
    %v2666 = vpack.c.b16 %v2663, %v2662
    %v2667 = vpack.c.b16 %v2665, %v2664
    %v2671 = vsel %vm71, %v2652, 0
    %2673 = vmatprep.subr.bf16.mxu0 0
    %2674 = vmatpush1.bf16.msra.mxu0 %v2666
    %2675 = vmatprep.subr.bf16.mxu0 0
    %2676 = vmatpush1.bf16.msra.mxu0 %v2667
    %2677 = vmatprep.subr.bf16.mxu0 0
    %2678 = vmatpush1.bf16.msra.mxu0 0
    %2679 = vmatprep.subr.bf16.mxu0 0
    %2680 = vmatpush1.bf16.msra.mxu0 0
    %2681 = vmatprep.subr.bf16.mxu0 0
    %2682 = vmatpush1.bf16.msra.mxu0 0
    %2683 = vmatprep.subr.bf16.mxu0 0
    %2684 = vmatpush1.bf16.msra.mxu0 0
    %2685 = vmatprep.subr.bf16.mxu0 0
    %2686 = vmatpush1.bf16.msra.mxu0 0
    %2687 = vmatprep.subr.bf16.mxu0 0
    %2688 = vmatpush1.bf16.msra.mxu0 0
    %2689 = vmatprep.subr.bf16.mxu0 0
    %2690 = vmatpush1.bf16.msra.mxu0 0
    %2691 = vmatprep.subr.bf16.mxu0 0
    %2692 = vmatpush1.bf16.msra.mxu0 0
    %2693 = vmatprep.subr.bf16.mxu0 0
    %2694 = vmatpush1.bf16.msra.mxu0 0
    %2695 = vmatprep.subr.bf16.mxu0 0
    %2696 = vmatpush1.bf16.msra.mxu0 0
    %2697 = vmatprep.subr.bf16.mxu0 0
    %2698 = vmatpush1.bf16.msra.mxu0 0
    %2699 = vmatprep.subr.bf16.mxu0 0
    %2700 = vmatpush1.bf16.msra.mxu0 0
    %2701 = vmatprep.subr.bf16.mxu0 0
    %2702 = vmatpush1.bf16.msra.mxu0 0
    %2703 = vmatprep.subr.bf16.mxu0 0
    %2704 = vmatpush1.bf16.msra.mxu0 0
    %2705 = vmatprep.mubr.bf16.mxu0 0
    %2706 = vmatmul.mubr.bf16.gmra.mrb[0].mxu0 %v2671
    %v2707 = vpop.f32.mrb[0].mxu0
    %v2708 = vadd.f32 0.0, %v2707
    %v2709 = vpop.f32.mrb[0].mxu0
    %v2710 = vpop.f32.mrb[0].mxu0
    %v2711 = vadd.f32 0.0, %v2710
    %v2712 = vpop.f32.mrb[0].mxu0
    %2713 = vdwg.mxu0
    %v2714 = vsel %vm1273, %v2708, -inf
    %2715 = vmax.xlane.f32.xlu0 %v2714
    %v2716 = vpop.xlane.xlu0 %2715
    %v2717 = vsel %vm1273, %v2711, -inf
    %2718 = vmax.xlane.f32.xlu0 %v2717
    %v2719 = vpop.xlane.xlu0 %2718
    %v2720 = vsub.f32 %v2708, %v2716
    %v2721 = vsub.f32 %v2711, %v2719
    %v2722 = vmul.f32 %v2720, 1.442695
    %v2723 = vpow.pop %v2722
    %v2724 = vmul.f32 %v2721, 1.442695
    %v2725 = vpow.pop %v2724
    %v2726 = vsel %vm1273, %v2723, 0.0
    %2727 = vadd.xlane.f32.xlu0 %v2726
    %v2728 = vpop.xlane.xlu0 %2727
    %v2729 = vsel %vm1273, %v2725, 0.0
    %2730 = vadd.xlane.f32.xlu0 %v2729
    %v2731 = vpop.xlane.xlu0 %2730
    %v2732 = vrcp.pop %v2728
    %v2733 = vmul.f32 %v2723, %v2732
    %v2734 = vrcp.pop %v2731
    %v2735 = vmul.f32 %v2725, %v2734
    %s2736 = scalar_lea.vmem %s7, 32
    %v2737 = vld [vmem:[%s2736] sm:$0xff]
    %v2738 = vld [vmem:[%s2736 + $0x8] sm:$0xff]
    %v2739 = vld [vmem:[%s2736 + $0x10] sm:$0xff]
    %v2740 = vld [vmem:[%s2736 + $0x18] sm:$0xff]
    %v2745 = vunpack.c.l.b16 %v2737
    %v2746 = vunpack.c.h.b16 %v2737
    %v2747 = vunpack.c.l.b16 %v2738
    %v2748 = vunpack.c.h.b16 %v2738
    %v2749 = vunpack.c.l.b16 %v2739
    %v2750 = vunpack.c.h.b16 %v2739
    %v2751 = vunpack.c.l.b16 %v2740
    %v2752 = vunpack.c.h.b16 %v2740
    %v2753 = vpack.c.b16 %v2747, %v2745
    %v2754 = vpack.c.b16 %v2748, %v2746
    %v2755 = vpack.c.b16 %v2751, %v2749
    %v2756 = vpack.c.b16 %v2752, %v2750
    %2761 = vmatprep.subr.bf16.mxu0 %v2754
    %2762 = vmatpush1.bf16.msra.mxu0 %v2753
    %2763 = vmatprep.subr.bf16.mxu0 %v2756
    %2764 = vmatpush1.bf16.msra.mxu0 %v2755
    %2765 = vmatprep.subr.bf16.mxu0 0
    %2766 = vmatpush1.bf16.msra.mxu0 0
    %2767 = vmatprep.subr.bf16.mxu0 0
    %2768 = vmatpush1.bf16.msra.mxu0 0
    %2769 = vmatprep.subr.bf16.mxu0 0
    %2770 = vmatpush1.bf16.msra.mxu0 0
    %2771 = vmatprep.subr.bf16.mxu0 0
    %2772 = vmatpush1.bf16.msra.mxu0 0
    %2773 = vmatprep.subr.bf16.mxu0 0
    %2774 = vmatpush1.bf16.msra.mxu0 0
    %2775 = vmatprep.subr.bf16.mxu0 0
    %2776 = vmatpush1.bf16.msra.mxu0 0
    %2777 = vmatprep.subr.bf16.mxu0 0
    %2778 = vmatpush1.bf16.msra.mxu0 0
    %2779 = vmatprep.subr.bf16.mxu0 0
    %2780 = vmatpush1.bf16.msra.mxu0 0
    %2781 = vmatprep.subr.bf16.mxu0 0
    %2782 = vmatpush1.bf16.msra.mxu0 0
    %2783 = vmatprep.subr.bf16.mxu0 0
    %2784 = vmatpush1.bf16.msra.mxu0 0
    %2785 = vmatprep.subr.bf16.mxu0 0
    %2786 = vmatpush1.bf16.msra.mxu0 0
    %2787 = vmatprep.subr.bf16.mxu0 0
    %2788 = vmatpush1.bf16.msra.mxu0 0
    %2789 = vmatprep.subr.bf16.mxu0 0
    %2790 = vmatpush1.bf16.msra.mxu0 0
    %2791 = vmatprep.subr.bf16.mxu0 0
    %2792 = vmatpush1.bf16.msra.mxu0 0
    %2793 = vmatprep.mubr.bf16.mxu0 0
    %2794 = vmatmul.mubr.bf16.gmra.mrb[0].mxu0 %v2671
    %v2795 = vpop.f32.mrb[0].mxu0
    %v2796 = vadd.f32 0.0, %v2795
    %v2797 = vpop.f32.mrb[0].mxu0
    %v2798 = vadd.f32 0.0, %v2797
    %v2799 = vpop.f32.mrb[0].mxu0
    %v2800 = vadd.f32 0.0, %v2799
    %v2801 = vpop.f32.mrb[0].mxu0
    %v2802 = vadd.f32 0.0, %v2801
    %2803 = vdwg.mxu0
    %v2804 = vmax.f32 %v2796, 0.0
    %v2805 = vmax.f32 %v2798, 0.0
    %v2806 = vmax.f32 %v2800, 0.0
    %v2807 = vmax.f32 %v2802, 0.0
    %2809 = vset.pattern.permute.xlu0 0
    %2810 = vperm.xlu0 %2809, %v2733
    %v2811 = vpop.permute.xlu0 %2810
    %2814 = vset.pattern.permute.xlu0 0
    %2815 = vperm.xlu0 %2814, %v2735
    %v2816 = vpop.permute.xlu0 %2815
    %2818 = vset.pattern.permute.xlu0 1
    %2819 = vperm.xlu0 %2818, %v2733
    %v2820 = vpop.permute.xlu0 %2819
    %2822 = vset.pattern.permute.xlu0 1
    %2823 = vperm.xlu0 %2822, %v2735
    %v2824 = vpop.permute.xlu0 %2823
    %v2826 = vmul.f32 %v2804, %v2811
    %v2827 = vmul.f32 %v2805, %v2820
    %v2828 = vmul.f32 %v2806, %v2816
    %v2829 = vmul.f32 %v2807, %v2824
    %v2830 = vpack.c.bf16 %v2828, %v2826
    %v2831 = vpack.c.bf16 %v2829, %v2827
    %s2832 = scalar_lea.vmem %s8, 128
    %v2833 = vld [vmem:[%s2832] sm:$0xf]
    %v2834 = vld [vmem:[%s2832 + $0x4] sm:$0xf]
    %v2835 = vld [vmem:[%s2832 + $0x8] sm:$0xf]
    %v2836 = vld [vmem:[%s2832 + $0xc] sm:$0xf]
    %v2837 = vld [vmem:[%s2832 + $0x10] sm:$0xf]
    %v2838 = vld [vmem:[%s2832 + $0x14] sm:$0xf]
    %v2839 = vld [vmem:[%s2832 + $0x18] sm:$0xf]
    %v2840 = vld [vmem:[%s2832 + $0x1c] sm:$0xf]
    %v2841 = vld [vmem:[%s2832 + $0x20] sm:$0xf]
    %v2842 = vld [vmem:[%s2832 + $0x24] sm:$0xf]
    %v2843 = vld [vmem:[%s2832 + $0x28] sm:$0xf]
    %v2844 = vld [vmem:[%s2832 + $0x2c] sm:$0xf]
    %v2845 = vld [vmem:[%s2832 + $0x30] sm:$0xf]
    %v2846 = vld [vmem:[%s2832 + $0x34] sm:$0xf]
    %v2847 = vld [vmem:[%s2832 + $0x38] sm:$0xf]
    %v2848 = vld [vmem:[%s2832 + $0x3c] sm:$0xf]
    %v2849 = vld [vmem:[%s2832 + $0x40] sm:$0xf]
    %v2850 = vld [vmem:[%s2832 + $0x44] sm:$0xf]
    %v2851 = vld [vmem:[%s2832 + $0x48] sm:$0xf]
    %v2852 = vld [vmem:[%s2832 + $0x4c] sm:$0xf]
    %v2853 = vld [vmem:[%s2832 + $0x50] sm:$0xf]
    %v2854 = vld [vmem:[%s2832 + $0x54] sm:$0xf]
    %v2855 = vld [vmem:[%s2832 + $0x58] sm:$0xf]
    %v2856 = vld [vmem:[%s2832 + $0x5c] sm:$0xf]
    %v2857 = vld [vmem:[%s2832 + $0x60] sm:$0xf]
    %v2858 = vld [vmem:[%s2832 + $0x64] sm:$0xf]
    %v2859 = vld [vmem:[%s2832 + $0x68] sm:$0xf]
    %v2860 = vld [vmem:[%s2832 + $0x6c] sm:$0xf]
    %v2861 = vld [vmem:[%s2832 + $0x70] sm:$0xf]
    %v2862 = vld [vmem:[%s2832 + $0x74] sm:$0xf]
    %v2863 = vld [vmem:[%s2832 + $0x78] sm:$0xf]
    %v2864 = vld [vmem:[%s2832 + $0x7c] sm:$0xf]
    %v2897 = vunpack.c.l.b16 %v2833
    %v2898 = vunpack.c.l.b16 %v2834
    %v2899 = vunpack.c.l.b16 %v2835
    %v2900 = vunpack.c.l.b16 %v2836
    %v2901 = vunpack.c.l.b16 %v2837
    %v2902 = vunpack.c.l.b16 %v2838
    %v2903 = vunpack.c.l.b16 %v2839
    %v2904 = vunpack.c.l.b16 %v2840
    %v2905 = vunpack.c.l.b16 %v2841
    %v2906 = vunpack.c.l.b16 %v2842
    %v2907 = vunpack.c.l.b16 %v2843
    %v2908 = vunpack.c.l.b16 %v2844
    %v2909 = vunpack.c.l.b16 %v2845
    %v2910 = vunpack.c.l.b16 %v2846
    %v2911 = vunpack.c.l.b16 %v2847
    %v2912 = vunpack.c.l.b16 %v2848
    %v2913 = vunpack.c.l.b16 %v2849
    %v2914 = vunpack.c.l.b16 %v2850
    %v2915 = vunpack.c.l.b16 %v2851
    %v2916 = vunpack.c.l.b16 %v2852
    %v2917 = vunpack.c.l.b16 %v2853
    %v2918 = vunpack.c.l.b16 %v2854
    %v2919 = vunpack.c.l.b16 %v2855
    %v2920 = vunpack.c.l.b16 %v2856
    %v2921 = vunpack.c.l.b16 %v2857
    %v2922 = vunpack.c.l.b16 %v2858
    %v2923 = vunpack.c.l.b16 %v2859
    %v2924 = vunpack.c.l.b16 %v2860
    %v2925 = vunpack.c.l.b16 %v2861
    %v2926 = vunpack.c.l.b16 %v2862
    %v2927 = vunpack.c.l.b16 %v2863
    %v2928 = vunpack.c.l.b16 %v2864
    %v2929 = vpack.c.b16 %v2898, %v2897
    %v2930 = vpack.c.b16 %v2900, %v2899
    %v2931 = vpack.c.b16 %v2902, %v2901
    %v2932 = vpack.c.b16 %v2904, %v2903
    %v2933 = vpack.c.b16 %v2906, %v2905
    %v2934 = vpack.c.b16 %v2908, %v2907
    %v2935 = vpack.c.b16 %v2910, %v2909
    %v2936 = vpack.c.b16 %v2912, %v2911
    %v2937 = vpack.c.b16 %v2914, %v2913
    %v2938 = vpack.c.b16 %v2916, %v2915
    %v2939 = vpack.c.b16 %v2918, %v2917
    %v2940 = vpack.c.b16 %v2920, %v2919
    %v2941 = vpack.c.b16 %v2922, %v2921
    %v2942 = vpack.c.b16 %v2924, %v2923
    %v2943 = vpack.c.b16 %v2926, %v2925
    %v2944 = vpack.c.b16 %v2928, %v2927
    %2961 = vmatprep.subr.bf16.mxu0 0
    %2962 = vmatpush1.bf16.msra.mxu0 %v2929
    %2963 = vmatprep.subr.bf16.mxu0 0
    %2964 = vmatpush1.bf16.msra.mxu0 %v2930
    %2965 = vmatprep.subr.bf16.mxu0 0
    %2966 = vmatpush1.bf16.msra.mxu0 %v2931
    %2967 = vmatprep.subr.bf16.mxu0 0
    %2968 = vmatpush1.bf16.msra.mxu0 %v2932
    %2969 = vmatprep.subr.bf16.mxu0 0
    %2970 = vmatpush1.bf16.msra.mxu0 %v2933
    %2971 = vmatprep.subr.bf16.mxu0 0
    %2972 = vmatpush1.bf16.msra.mxu0 %v2934
    %2973 = vmatprep.subr.bf16.mxu0 0
    %2974 = vmatpush1.bf16.msra.mxu0 %v2935
    %2975 = vmatprep.subr.bf16.mxu0 0
    %2976 = vmatpush1.bf16.msra.mxu0 %v2936
    %2977 = vmatprep.subr.bf16.mxu0 0
    %2978 = vmatpush1.bf16.msra.mxu0 %v2937
    %2979 = vmatprep.subr.bf16.mxu0 0
    %2980 = vmatpush1.bf16.msra.mxu0 %v2938
    %2981 = vmatprep.subr.bf16.mxu0 0
    %2982 = vmatpush1.bf16.msra.mxu0 %v2939
    %2983 = vmatprep.subr.bf16.mxu0 0
    %2984 = vmatpush1.bf16.msra.mxu0 %v2940
    %2985 = vmatprep.subr.bf16.mxu0 0
    %2986 = vmatpush1.bf16.msra.mxu0 %v2941
    %2987 = vmatprep.subr.bf16.mxu0 0
    %2988 = vmatpush1.bf16.msra.mxu0 %v2942
    %2989 = vmatprep.subr.bf16.mxu0 0
    %2990 = vmatpush1.bf16.msra.mxu0 %v2943
    %2991 = vmatprep.subr.bf16.mxu0 0
    %2992 = vmatpush1.bf16.msra.mxu0 %v2944
    %2993 = vmatprep.mubr.bf16.mxu0 %v2831
    %2994 = vmatmul.mubr.bf16.gmra.mrb[0].mxu0 %v2830
    %v2995 = vpop.f32.mrb[0].mxu0
    %v2996 = vadd.f32 0.0, %v2995
    %v2997 = vpop.f32.mrb[0].mxu0
    %v2998 = vpop.f32.mrb[0].mxu0
    %v2999 = vadd.f32 0.0, %v2998
    %v3000 = vpop.f32.mrb[0].mxu0
    %3001 = vdwg.mxu0
    %v3002 = vadd.f32 %v2627, %v2996
    %v3003 = vadd.f32 %v2628, %v2999
    %v3006 = vrot.slane %v3003, 7
    %vm3007 = vcmask 1041409
    %v3008 = vsel %vm3007, %v3006, %v3002
    %v3010 = vrot.slane %v3002, 1
    %v3011 = vsel %vm3007, %v3003, %v3010
    %3012 = vrot.lane.b32.xlu0 %v3011, 32
    %v3013 = vpop.permute.xlu0 %3012
    %v3015 = vrot.slane %v3002, 2
    %v3016 = vrot.slane %v3003, 1
    %v3017 = vsel %vm3007, %v3016, %v3015
    %3018 = vrot.lane.b32.xlu0 %v3017, 64
    %v3019 = vpop.permute.xlu0 %3018
    %v3021 = vrot.slane %v3002, 3
    %v3022 = vrot.slane %v3003, 2
    %v3023 = vsel %vm3007, %v3022, %v3021
    %3024 = vrot.lane.b32.xlu0 %v3023, 96
    %v3025 = vpop.permute.xlu0 %3024
    %v3027 = vrot.slane %v3002, 4
    %v3028 = vrot.slane %v3003, 3
    %v3029 = vsel %vm3007, %v3028, %v3027
    %v3031 = vrot.slane %v3002, 5
    %v3032 = vrot.slane %v3003, 4
    %v3033 = vsel %vm3007, %v3032, %v3031
    %3034 = vrot.lane.b32.xlu0 %v3033, 32
    %v3035 = vpop.permute.xlu0 %3034
    %v3037 = vrot.slane %v3002, 6
    %v3038 = vrot.slane %v3003, 5
    %v3039 = vsel %vm3007, %v3038, %v3037
    %3040 = vrot.lane.b32.xlu0 %v3039, 64
    %v3041 = vpop.permute.xlu0 %3040
    %v3043 = vrot.slane %v3002, 7
    %v3044 = vrot.slane %v3003, 6
    %v3045 = vsel %vm3007, %v3044, %v3043
    %3046 = vrot.lane.b32.xlu0 %v3045, 96
    %v3047 = vpop.permute.xlu0 %3046
    %v3049 = vsel %vm71, %v3008, %v3013
    %vm3050 = vcmask 523264
    %v3051 = vsel %vm3050, %v3049, %v3019
    %vm3052 = vcmask 785408
    %v3053 = vsel %vm3052, %v3051, %v3025
    %v3054 = vsel %vm71, %v3029, %v3035
    %v3055 = vsel %vm3050, %v3054, %v3041
    %v3056 = vsel %vm3052, %v3055, %v3047
    %v3057 = vpack.c.bf16 %v3053, %v3053
    %v3058 = vpack.c.bf16 %v3056, %v3056
    %v3059 = vld [vmem:[%s9] sm:$0xf]
    %v3060 = vld [vmem:[%s9 + $0x4] sm:$0xf]
    %v3061 = vld [vmem:[%s9 + $0x8] sm:$0xf]
    %v3062 = vld [vmem:[%s9 + $0xc] sm:$0xf]
    %v3063 = vld [vmem:[%s9 + $0x10] sm:$0xf]
    %v3064 = vld [vmem:[%s9 + $0x14] sm:$0xf]
    %v3065 = vld [vmem:[%s9 + $0x18] sm:$0xf]
    %v3066 = vld [vmem:[%s9 + $0x1c] sm:$0xf]
    %v3067 = vld [vmem:[%s9 + $0x20] sm:$0xf]
    %v3068 = vld [vmem:[%s9 + $0x24] sm:$0xf]
    %v3069 = vld [vmem:[%s9 + $0x28] sm:$0xf]
    %v3070 = vld [vmem:[%s9 + $0x2c] sm:$0xf]
    %v3071 = vld [vmem:[%s9 + $0x30] sm:$0xf]
    %v3072 = vld [vmem:[%s9 + $0x34] sm:$0xf]
    %v3073 = vld [vmem:[%s9 + $0x38] sm:$0xf]
    %v3074 = vld [vmem:[%s9 + $0x3c] sm:$0xf]
    %v3075 = vld [vmem:[%s9 + $0x40] sm:$0xf]
    %v3076 = vld [vmem:[%s9 + $0x44] sm:$0xf]
    %v3077 = vld [vmem:[%s9 + $0x48] sm:$0xf]
    %v3078 = vld [vmem:[%s9 + $0x4c] sm:$0xf]
    %v3079 = vld [vmem:[%s9 + $0x50] sm:$0xf]
    %v3080 = vld [vmem:[%s9 + $0x54] sm:$0xf]
    %v3081 = vld [vmem:[%s9 + $0x58] sm:$0xf]
    %v3082 = vld [vmem:[%s9 + $0x5c] sm:$0xf]
    %v3083 = vld [vmem:[%s9 + $0x60] sm:$0xf]
    %v3084 = vld [vmem:[%s9 + $0x64] sm:$0xf]
    %v3085 = vld [vmem:[%s9 + $0x68] sm:$0xf]
    %v3086 = vld [vmem:[%s9 + $0x6c] sm:$0xf]
    %v3087 = vld [vmem:[%s9 + $0x70] sm:$0xf]
    %v3088 = vld [vmem:[%s9 + $0x74] sm:$0xf]
    %v3089 = vld [vmem:[%s9 + $0x78] sm:$0xf]
    %v3090 = vld [vmem:[%s9 + $0x7c] sm:$0xf]
    %v3091 = vld [vmem:[%s10] sm:$0x1]
    %v3093 = vlaneseq
    %v3094 = vshrl.u32 %v3093, 7
    %v3095 = vsub.s32 0, %v3094
    %v3096 = vrot.slane %v3091, %v3095
    %v3130 = vunpack.c.l.b16 %v3059
    %v3131 = vunpack.c.l.b16 %v3060
    %v3132 = vunpack.c.l.b16 %v3061
    %v3133 = vunpack.c.l.b16 %v3062
    %v3134 = vunpack.c.l.b16 %v3063
    %v3135 = vunpack.c.l.b16 %v3064
    %v3136 = vunpack.c.l.b16 %v3065
    %v3137 = vunpack.c.l.b16 %v3066
    %v3138 = vunpack.c.l.b16 %v3067
    %v3139 = vunpack.c.l.b16 %v3068
    %v3140 = vunpack.c.l.b16 %v3069
    %v3141 = vunpack.c.l.b16 %v3070
    %v3142 = vunpack.c.l.b16 %v3071
    %v3143 = vunpack.c.l.b16 %v3072
    %v3144 = vunpack.c.l.b16 %v3073
    %v3145 = vunpack.c.l.b16 %v3074
    %v3146 = vunpack.c.l.b16 %v3075
    %v3147 = vunpack.c.l.b16 %v3076
    %v3148 = vunpack.c.l.b16 %v3077
    %v3149 = vunpack.c.l.b16 %v3078
    %v3150 = vunpack.c.l.b16 %v3079
    %v3151 = vunpack.c.l.b16 %v3080
    %v3152 = vunpack.c.l.b16 %v3081
    %v3153 = vunpack.c.l.b16 %v3082
    %v3154 = vunpack.c.l.b16 %v3083
    %v3155 = vunpack.c.l.b16 %v3084
    %v3156 = vunpack.c.l.b16 %v3085
    %v3157 = vunpack.c.l.b16 %v3086
    %v3158 = vunpack.c.l.b16 %v3087
    %v3159 = vunpack.c.l.b16 %v3088
    %v3160 = vunpack.c.l.b16 %v3089
    %v3161 = vunpack.c.l.b16 %v3090
    %v3162 = vpack.c.b16 %v3131, %v3130
    %v3163 = vpack.c.b16 %v3133, %v3132
    %v3164 = vpack.c.b16 %v3135, %v3134
    %v3165 = vpack.c.b16 %v3137, %v3136
    %v3166 = vpack.c.b16 %v3139, %v3138
    %v3167 = vpack.c.b16 %v3141, %v3140
    %v3168 = vpack.c.b16 %v3143, %v3142
    %v3169 = vpack.c.b16 %v3145, %v3144
    %v3170 = vpack.c.b16 %v3147, %v3146
    %v3171 = vpack.c.b16 %v3149, %v3148
    %v3172 = vpack.c.b16 %v3151, %v3150
    %v3173 = vpack.c.b16 %v3153, %v3152
    %v3174 = vpack.c.b16 %v3155, %v3154
    %v3175 = vpack.c.b16 %v3157, %v3156
    %v3176 = vpack.c.b16 %v3159, %v3158
    %v3177 = vpack.c.b16 %v3161, %v3160
    %3194 = vmatprep.subr.bf16.mxu0 0
    %3195 = vmatpush1.bf16.msra.mxu0 %v3162
    %3196 = vmatprep.subr.bf16.mxu0 0
    %3197 = vmatpush1.bf16.msra.mxu0 %v3163
    %3198 = vmatprep.subr.bf16.mxu0 0
    %3199 = vmatpush1.bf16.msra.mxu0 %v3164
    %3200 = vmatprep.subr.bf16.mxu0 0
    %3201 = vmatpush1.bf16.msra.mxu0 %v3165
    %3202 = vmatprep.subr.bf16.mxu0 0
    %3203 = vmatpush1.bf16.msra.mxu0 %v3166
    %3204 = vmatprep.subr.bf16.mxu0 0
    %3205 = vmatpush1.bf16.msra.mxu0 %v3167
    %3206 = vmatprep.subr.bf16.mxu0 0
    %3207 = vmatpush1.bf16.msra.mxu0 %v3168
    %3208 = vmatprep.subr.bf16.mxu0 0
    %3209 = vmatpush1.bf16.msra.mxu0 %v3169
    %3210 = vmatprep.subr.bf16.mxu0 0
    %3211 = vmatpush1.bf16.msra.mxu0 %v3170
    %3212 = vmatprep.subr.bf16.mxu0 0
    %3213 = vmatpush1.bf16.msra.mxu0 %v3171
    %3214 = vmatprep.subr.bf16.mxu0 0
    %3215 = vmatpush1.bf16.msra.mxu0 %v3172
    %3216 = vmatprep.subr.bf16.mxu0 0
    %3217 = vmatpush1.bf16.msra.mxu0 %v3173
    %3218 = vmatprep.subr.bf16.mxu0 0
    %3219 = vmatpush1.bf16.msra.mxu0 %v3174
    %3220 = vmatprep.subr.bf16.mxu0 0
    %3221 = vmatpush1.bf16.msra.mxu0 %v3175
    %3222 = vmatprep.subr.bf16.mxu0 0
    %3223 = vmatpush1.bf16.msra.mxu0 %v3176
    %3224 = vmatprep.subr.bf16.mxu0 0
    %3225 = vmatpush1.bf16.msra.mxu0 %v3177
    %3226 = vmatprep.mubr.bf16.mxu0 %v3058
    %3227 = vmatmul.mubr.bf16.gmra.mrb[0].mxu0 %v3057
    %v3228 = vpop.f32.mrb[0].mxu0
    %v3229 = vadd.f32 %v3096, %v3228
    %v3230 = vpop.f32.mrb[0].mxu0
    %v3231 = vpop.f32.mrb[0].mxu0
    %v3232 = vpop.f32.mrb[0].mxu0
    %3233 = vdwg.mxu0
    %3234 = vst [vmem:[#allocation2] sm:$0x3] %v3229
    // Predicated region
    $region46: #{moe_encoder_transformer.1} parent=1 // pred_check
      _
    $region47: #{moe_encoder_transformer.1} parent=1 // pred_check_branch
      %3236 = sbr.rel (0) target = $region49
    $region48: #{moe_encoder_transformer.1} parent=1 // pred_region
      %s3238 = ssub.s32 32, 32
      %3239 = vsyncadd [#allocation3], %s3238
      %s3241 = sshll.u32 [#allocation2], 4
      %s3242 = int_to_ptr.vmem [resolvable:$true] %s3241
      %3244 = dma.vmem_to_hbm [thread:$0]  %s3242, 32, %s11, [#allocation3]
    $region49: #{moe_encoder_transformer.1} parent=1 // pred_fallthru
      _
    // Predicated region
    $region50: #{moe_encoder_transformer.1} parent=1 // pred_check
      _
    $region51: #{moe_encoder_transformer.1} parent=1 // pred_check_branch
      %3246 = sbr.rel (0) target = $region53
    $region52: #{moe_encoder_transformer.1} parent=1 // pred_region
      %3247 = dma.done [#allocation3], 32
    $region53: #{moe_encoder_transformer.1} parent=1 // pred_fallthru
      _
    %3248 = vsyncpa [#allocation3], 1

</llo_original>
